<compile_context>
chip_gen: v6e
topology: v6e:2x2x1
jax: 0.10.0
libtpu: 0.0.40
codegen_flags: <defaults>
</compile_context>

<pallas_src>
import jax
import jax.numpy as jnp
from jax.experimental import pallas as pl
from jax.experimental.pallas import tpu as pltpu


def _encoder_kernel(x_ref, w_ih_ref, w_hh_ref, bias_ref, out_ref):
    """Fused multi-layer LSTM encoder, single gridless invocation.

    x_ref    : (T*B, K) bf16     time-major input, feature dim zero-padded to K=H
    w_ih_ref : (L, K, 4H) bf16   W_ih^T per layer (layer 0 rows zero-padded),
                                 g-gate columns pre-scaled by 2
    w_hh_ref : (L, H, 4H) bf16   W_hh^T per layer, g-gate columns pre-scaled by 2
    bias_ref : (L, 4H) f32       b_ih + b_hh per layer, g-gate columns pre-scaled by 2
    out_ref  : (B, H) f32        final hidden state of the last layer
    """
    B, H = out_ref.shape
    L = w_hh_ref.shape[0]
    T = x_ref.shape[0] // B
    bf16 = jnp.bfloat16

    bias_all = bias_ref[...]                                   # (L, 4H) f32

    # Layer-0 input projection hoisted over the whole sequence: one MXU pass.
    # Never serializes the wavefront (layer-0 inputs are all known up front).
    xp0 = jnp.dot(x_ref[...], w_ih_ref[0],
                  preferred_element_type=jnp.float32) + bias_all[0:1, :]

    h32 = [jnp.zeros((B, H), jnp.float32) for _ in range(L)]   # f32 carries
    hb = [jnp.zeros((B, H), bf16) for _ in range(L)]           # bf16 matmul copies
    c = [jnp.zeros((B, H), jnp.float32) for _ in range(L)]

    # Wavefront over s = l + t: critical path L + T - 1 steps instead of L*T.
    for s in range(L + T - 1):
        prev_hb = list(hb)              # snapshot: all reads are step s-1 values
        lo = max(0, s - (T - 1))
        hi = min(L - 1, s)
        for l in range(lo, hi + 1):     # cells in this step are independent
            t = s - l
            if l == 0:
                gates = xp0[t * B:(t + 1) * B, :] + jnp.dot(
                    prev_hb[0], w_hh_ref[0],
                    preferred_element_type=jnp.float32)
            else:
                # Input-from-below and recurrent projections: two independent
                # MXU pushes (both operands produced at wavefront step s-1).
                gates = (jnp.dot(prev_hb[l - 1], w_ih_ref[l],
                                 preferred_element_type=jnp.float32)
                         + jnp.dot(prev_hb[l], w_hh_ref[l],
                                   preferred_element_type=jnp.float32)
                         + bias_all[l:l + 1, :])
            # Single EUP pass on the full (B, 4H) gate block; g gate recovered
            # from the pre-scaled columns via tanh(z) = 2*sigmoid(2z) - 1.
            sg = jax.nn.sigmoid(gates)
            i_g = sg[:, 0 * H:1 * H]
            f_g = sg[:, 1 * H:2 * H]
            g_g = sg[:, 2 * H:3 * H] * 2.0 - 1.0
            o_g = sg[:, 3 * H:4 * H]
            c_new = f_g * c[l] + i_g * g_g
            h_new = o_g * jnp.tanh(c_new)
            c[l] = c_new
            h32[l] = h_new
            hb[l] = h_new.astype(bf16)

    out_ref[...] = h32[L - 1]                                  # only HBM writeback


def pack_encoder_params(params, input_size, hidden_size):
    """Pack PyTorch-layout LSTM params into 3 stacked kernel arrays.

    params: list per layer of (w_ih (4H, Din), w_hh (4H, H), b_ih (4H,), b_hh (4H,)).
    Returns (w_ih_all (L,H,4H) bf16, w_hh_all (L,H,4H) bf16, bias_all (L,4H) f32),
    with the g-gate columns pre-scaled by 2 (kernel recovers tanh via sigmoid).
    """
    H = hidden_size
    # TODO(synk): input_size > hidden_size would need a separate layer-0 weight.
    assert input_size <= hidden_size

    def scale_g_cols(w_t):  # (K, 4H): scale the g-gate column block by 2
        return jnp.concatenate(
            [w_t[:, :2 * H], 2.0 * w_t[:, 2 * H:3 * H], w_t[:, 3 * H:]], axis=1)

    w_ih_list, w_hh_list, b_list = [], [], []
    for layer, (w_ih, w_hh, b_ih, b_hh) in enumerate(params):
        w_ih_t = w_ih.T                                        # (Din, 4H)
        if layer == 0 and input_size < H:
            w_ih_t = jnp.pad(w_ih_t, ((0, H - input_size), (0, 0)))
        w_ih_list.append(scale_g_cols(w_ih_t))
        w_hh_list.append(scale_g_cols(w_hh.T))
        b_list.append(scale_g_cols((b_ih + b_hh)[None, :])[0])
    w_ih_all = jnp.stack(w_ih_list).astype(jnp.bfloat16)       # (L, H, 4H)
    w_hh_all = jnp.stack(w_hh_list).astype(jnp.bfloat16)       # (L, H, 4H)
    bias_all = jnp.stack(b_list).astype(jnp.float32)           # (L, 4H)
    return w_ih_all, w_hh_all, bias_all


def encoder_pallas(x_btd, w_ih_all, w_hh_all, bias_all):
    """Equivalent of Encoder.forward: returns hidden[-1] of shape (B, H)."""
    B, T, din0 = x_btd.shape
    L, H, _ = w_hh_all.shape

    # Time-major, rows = (t, b) flattened; pad feature dim to H; bf16 operands.
    x_rows = jnp.transpose(x_btd, (1, 0, 2)).reshape(T * B, din0)
    if din0 < H:
        x_rows = jnp.pad(x_rows, ((0, 0), (0, H - din0)))
    x_rows = x_rows.astype(jnp.bfloat16)

    vmem = pl.BlockSpec(memory_space=pltpu.MemorySpace.VMEM)
    return pl.pallas_call(
        _encoder_kernel,
        out_shape=jax.ShapeDtypeStruct((B, H), jnp.float32),
        in_specs=[vmem, vmem, vmem, vmem],
        out_specs=vmem,
    )(x_rows, w_ih_all, w_hh_all, bias_all)


encoder_forward = jax.jit(encoder_pallas)


def init_encoder_params(key, input_size, hidden_size, num_layers):
    """PyTorch nn.LSTM-layout params: (w_ih (4H,Din), w_hh (4H,H), b_ih, b_hh)
    per layer, uniform(-1/sqrt(H), 1/sqrt(H))."""
    params = []
    bound = 1.0 / (hidden_size ** 0.5)
    for layer in range(num_layers):
        din = input_size if layer == 0 else hidden_size
        key, k1, k2, k3, k4 = jax.random.split(key, 5)
        w_ih = jax.random.uniform(k1, (4 * hidden_size, din),
                                  minval=-bound, maxval=bound, dtype=jnp.float32)
        w_hh = jax.random.uniform(k2, (4 * hidden_size, hidden_size),
                                  minval=-bound, maxval=bound, dtype=jnp.float32)
        b_ih = jax.random.uniform(k3, (4 * hidden_size,),
                                  minval=-bound, maxval=bound, dtype=jnp.float32)
        b_hh = jax.random.uniform(k4, (4 * hidden_size,),
                                  minval=-bound, maxval=bound, dtype=jnp.float32)
        params.append((w_ih, w_hh, b_ih, b_hh))
    return params


def encoder_forward_ref(x_btd, params, matmul_dtype=jnp.float32):
    """Pure-JAX reference with PyTorch LSTM semantics (gate order i,f,g,o,
    zero initial state).  matmul_dtype=bfloat16 mirrors the kernel's MXU casts;
    float32 gives the true-precision baseline."""
    B = x_btd.shape[0]
    x = jnp.transpose(x_btd, (1, 0, 2))                        # (T, B, Din)
    h_last = None
    for (w_ih, w_hh, b_ih, b_hh) in params:
        H = w_hh.shape[1]
        w_ih_t = w_ih.T.astype(matmul_dtype)
        w_hh_t = w_hh.T.astype(matmul_dtype)
        bias = (b_ih + b_hh)[None, :]

        def step(carry, x_t, w_ih_t=w_ih_t, w_hh_t=w_hh_t, bias=bias, H=H):
            h, c = carry
            gates = (jnp.dot(x_t.astype(matmul_dtype), w_ih_t,
                             preferred_element_type=jnp.float32)
                     + jnp.dot(h.astype(matmul_dtype), w_hh_t,
                               preferred_element_type=jnp.float32)
                     + bias)
            i = jax.nn.sigmoid(gates[:, 0 * H:1 * H])
            f = jax.nn.sigmoid(gates[:, 1 * H:2 * H])
            g = jnp.tanh(gates[:, 2 * H:3 * H])
            o = jax.nn.sigmoid(gates[:, 3 * H:4 * H])
            c = f * c + i * g
            h = o * jnp.tanh(c)
            return (h, c), h

        init = (jnp.zeros((B, H), jnp.float32), jnp.zeros((B, H), jnp.float32))
        (h_last, _), hs = jax.lax.scan(step, init, x)
        x = hs
    return h_last


if __name__ == "__main__":
    # Small shapes consistent with the module: batch=2, seq=8, input=16,
    # hidden=32, num_layers=4.
    B, T, INPUT_SIZE, HIDDEN_SIZE, NUM_LAYERS = 2, 8, 16, 32, 4

    key = jax.random.PRNGKey(0)
    key, kx = jax.random.split(key)
    x = jax.random.normal(kx, (B, T, INPUT_SIZE), dtype=jnp.float32)

    params = init_encoder_params(key, INPUT_SIZE, HIDDEN_SIZE, NUM_LAYERS)
    w_ih_all, w_hh_all, bias_all = pack_encoder_params(params, INPUT_SIZE, HIDDEN_SIZE)

    hidden = encoder_forward(x, w_ih_all, w_hh_all, bias_all)
    hidden = jax.block_until_ready(hidden)
    assert hidden.shape == (B, HIDDEN_SIZE), hidden.shape

    # Tight check vs a reference that mirrors the kernel's bf16 matmul operands,
    # plus a looser check vs the full-f32 PyTorch-semantics baseline.
    ref_bf16 = encoder_forward_ref(x, params, matmul_dtype=jnp.bfloat16)
    ref_f32 = encoder_forward_ref(x, params, matmul_dtype=jnp.float32)
    err_bf16 = float(jnp.max(jnp.abs(hidden - ref_bf16)))
    err_f32 = float(jnp.max(jnp.abs(hidden - ref_f32)))
    assert err_bf16 < 5e-3, err_bf16
    assert err_f32 < 2.5e-2, err_f32

    print("KERNEL_OK")
</pallas_src>

<mosaic_0001>
module attributes {stable_mosaic.version = 11 : i64} {
  func.func @_encoder_kernel(%arg0: memref<16x32xbf16, #tpu.memory_space<vmem>>, %arg1: memref<4x32x128xbf16, #tpu.memory_space<vmem>>, %arg2: memref<4x32x128xbf16, #tpu.memory_space<vmem>>, %arg3: memref<4x128xf32, #tpu.memory_space<vmem>>, %arg4: memref<2x32xf32, #tpu.memory_space<vmem>>) attributes {dimension_semantics = [], scalar_prefetch = 0 : i64, scratch_operands = 0 : i64, tpu.core_type = #tpu.core_type<tc>} {
    %c0 = arith.constant 0 : index
    %c0_0 = arith.constant 0 : index
    %0 = vector.load %arg3[%c0, %c0_0] : memref<4x128xf32, #tpu.memory_space<vmem>>, vector<4x128xf32>
    %c0_1 = arith.constant 0 : index
    %c0_2 = arith.constant 0 : index
    %1 = vector.load %arg0[%c0_1, %c0_2] : memref<16x32xbf16, #tpu.memory_space<vmem>>, vector<16x32xbf16>
    %c0_3 = arith.constant 0 : index
    %c0_4 = arith.constant 0 : index
    %c0_5 = arith.constant 0 : index
    %2 = vector.load %arg1[%c0_3, %c0_4, %c0_5] : memref<4x32x128xbf16, #tpu.memory_space<vmem>>, vector<1x32x128xbf16>
    %3 = vector.shape_cast %2 : vector<1x32x128xbf16> to vector<32x128xbf16>
    %cst = arith.constant dense<0.000000e+00> : vector<16x128xf32>
    %4 = tpu.matmul %1, %3, %cst {dimension_numbers = #tpu.dot_dimension_numbers<[1], [0], [0], [1], [0, 0, 1, 1], [], []>} : vector<16x32xbf16>, vector<32x128xbf16>, vector<16x128xf32> -> vector<16x128xf32>
    %5 = vector.extract_strided_slice %0 {offsets = [0, 0], sizes = [1, 128], strides = [1, 1]} : vector<4x128xf32> to vector<1x128xf32>
    %6 = vector.broadcast %5 : vector<1x128xf32> to vector<16x128xf32>
    %7 = arith.addf %4, %6 : vector<16x128xf32>
    %cst_6 = arith.constant 0.000000e+00 : bf16
    %8 = vector.broadcast %cst_6 : bf16 to vector<2x32xbf16>
    %cst_7 = arith.constant 0.000000e+00 : bf16
    %9 = vector.broadcast %cst_7 : bf16 to vector<2x32xbf16>
    %cst_8 = arith.constant 0.000000e+00 : bf16
    %10 = vector.broadcast %cst_8 : bf16 to vector<2x32xbf16>
    %cst_9 = arith.constant 0.000000e+00 : bf16
    %11 = vector.broadcast %cst_9 : bf16 to vector<2x32xbf16>
    %cst_10 = arith.constant 0.000000e+00 : f32
    %12 = vector.broadcast %cst_10 : f32 to vector<2x32xf32>
    %cst_11 = arith.constant 0.000000e+00 : f32
    %13 = vector.broadcast %cst_11 : f32 to vector<2x32xf32>
    %cst_12 = arith.constant 0.000000e+00 : f32
    %14 = vector.broadcast %cst_12 : f32 to vector<2x32xf32>
    %cst_13 = arith.constant 0.000000e+00 : f32
    %15 = vector.broadcast %cst_13 : f32 to vector<2x32xf32>
    %16 = vector.extract_strided_slice %7 {offsets = [0, 0], sizes = [2, 128], strides = [1, 1]} : vector<16x128xf32> to vector<2x128xf32>
    %c0_14 = arith.constant 0 : index
    %c0_15 = arith.constant 0 : index
    %c0_16 = arith.constant 0 : index
    %17 = vector.load %arg2[%c0_14, %c0_15, %c0_16] : memref<4x32x128xbf16, #tpu.memory_space<vmem>>, vector<1x32x128xbf16>
    %18 = vector.shape_cast %17 : vector<1x32x128xbf16> to vector<32x128xbf16>
    %cst_17 = arith.constant dense<0.000000e+00> : vector<2x128xf32>
    %19 = tpu.matmul %8, %18, %cst_17 {dimension_numbers = #tpu.dot_dimension_numbers<[1], [0], [0], [1], [0, 0, 1, 1], [], []>} : vector<2x32xbf16>, vector<32x128xbf16>, vector<2x128xf32> -> vector<2x128xf32>
    %20 = arith.addf %16, %19 : vector<2x128xf32>
    %21 = arith.negf %20 : vector<2x128xf32>
    %22 = math.exp %21 : vector<2x128xf32>
    %cst_18 = arith.constant 1.000000e+00 : f32
    %23 = vector.broadcast %cst_18 : f32 to vector<2x128xf32>
    %24 = arith.addf %23, %22 : vector<2x128xf32>
    %25 = arith.divf %23, %24 : vector<2x128xf32>
    %26 = vector.extract_strided_slice %25 {offsets = [0, 0], sizes = [2, 32], strides = [1, 1]} : vector<2x128xf32> to vector<2x32xf32>
    %27 = vector.extract_strided_slice %25 {offsets = [0, 32], sizes = [2, 32], strides = [1, 1]} : vector<2x128xf32> to vector<2x32xf32>
    %28 = vector.extract_strided_slice %25 {offsets = [0, 64], sizes = [2, 32], strides = [1, 1]} : vector<2x128xf32> to vector<2x32xf32>
    %cst_19 = arith.constant 2.000000e+00 : f32
    %29 = vector.broadcast %cst_19 : f32 to vector<2x32xf32>
    %30 = arith.mulf %28, %29 : vector<2x32xf32>
    %cst_20 = arith.constant 1.000000e+00 : f32
    %31 = vector.broadcast %cst_20 : f32 to vector<2x32xf32>
    %32 = arith.subf %30, %31 : vector<2x32xf32>
    %33 = vector.extract_strided_slice %25 {offsets = [0, 96], sizes = [2, 32], strides = [1, 1]} : vector<2x128xf32> to vector<2x32xf32>
    %34 = arith.mulf %27, %12 : vector<2x32xf32>
    %35 = arith.mulf %26, %32 : vector<2x32xf32>
    %36 = arith.addf %34, %35 : vector<2x32xf32>
    %37 = math.tanh %36 : vector<2x32xf32>
    %38 = arith.mulf %33, %37 : vector<2x32xf32>
    %39 = arith.truncf %38 : vector<2x32xf32> to vector<2x32xbf16>
    %40 = vector.extract_strided_slice %7 {offsets = [2, 0], sizes = [2, 128], strides = [1, 1]} : vector<16x128xf32> to vector<2x128xf32>
    %c0_21 = arith.constant 0 : index
    %c0_22 = arith.constant 0 : index
    %c0_23 = arith.constant 0 : index
    %41 = vector.load %arg2[%c0_21, %c0_22, %c0_23] : memref<4x32x128xbf16, #tpu.memory_space<vmem>>, vector<1x32x128xbf16>
    %42 = vector.shape_cast %41 : vector<1x32x128xbf16> to vector<32x128xbf16>
    %cst_24 = arith.constant dense<0.000000e+00> : vector<2x128xf32>
    %43 = tpu.matmul %39, %42, %cst_24 {dimension_numbers = #tpu.dot_dimension_numbers<[1], [0], [0], [1], [0, 0, 1, 1], [], []>} : vector<2x32xbf16>, vector<32x128xbf16>, vector<2x128xf32> -> vector<2x128xf32>
    %44 = arith.addf %40, %43 : vector<2x128xf32>
    %45 = arith.negf %44 : vector<2x128xf32>
    %46 = math.exp %45 : vector<2x128xf32>
    %cst_25 = arith.constant 1.000000e+00 : f32
    %47 = vector.broadcast %cst_25 : f32 to vector<2x128xf32>
    %48 = arith.addf %47, %46 : vector<2x128xf32>
    %49 = arith.divf %47, %48 : vector<2x128xf32>
    %50 = vector.extract_strided_slice %49 {offsets = [0, 0], sizes = [2, 32], strides = [1, 1]} : vector<2x128xf32> to vector<2x32xf32>
    %51 = vector.extract_strided_slice %49 {offsets = [0, 32], sizes = [2, 32], strides = [1, 1]} : vector<2x128xf32> to vector<2x32xf32>
    %52 = vector.extract_strided_slice %49 {offsets = [0, 64], sizes = [2, 32], strides = [1, 1]} : vector<2x128xf32> to vector<2x32xf32>
    %cst_26 = arith.constant 2.000000e+00 : f32
    %53 = vector.broadcast %cst_26 : f32 to vector<2x32xf32>
    %54 = arith.mulf %52, %53 : vector<2x32xf32>
    %cst_27 = arith.constant 1.000000e+00 : f32
    %55 = vector.broadcast %cst_27 : f32 to vector<2x32xf32>
    %56 = arith.subf %54, %55 : vector<2x32xf32>
    %57 = vector.extract_strided_slice %49 {offsets = [0, 96], sizes = [2, 32], strides = [1, 1]} : vector<2x128xf32> to vector<2x32xf32>
    %58 = arith.mulf %51, %36 : vector<2x32xf32>
    %59 = arith.mulf %50, %56 : vector<2x32xf32>
    %60 = arith.addf %58, %59 : vector<2x32xf32>
    %61 = math.tanh %60 : vector<2x32xf32>
    %62 = arith.mulf %57, %61 : vector<2x32xf32>
    %63 = arith.truncf %62 : vector<2x32xf32> to vector<2x32xbf16>
    %c1 = arith.constant 1 : index
    %c0_28 = arith.constant 0 : index
    %c0_29 = arith.constant 0 : index
    %64 = vector.load %arg1[%c1, %c0_28, %c0_29] : memref<4x32x128xbf16, #tpu.memory_space<vmem>>, vector<1x32x128xbf16>
    %65 = vector.shape_cast %64 : vector<1x32x128xbf16> to vector<32x128xbf16>
    %cst_30 = arith.constant dense<0.000000e+00> : vector<2x128xf32>
    %66 = tpu.matmul %39, %65, %cst_30 {dimension_numbers = #tpu.dot_dimension_numbers<[1], [0], [0], [1], [0, 0, 1, 1], [], []>} : vector<2x32xbf16>, vector<32x128xbf16>, vector<2x128xf32> -> vector<2x128xf32>
    %c1_31 = arith.constant 1 : index
    %c0_32 = arith.constant 0 : index
    %c0_33 = arith.constant 0 : index
    %67 = vector.load %arg2[%c1_31, %c0_32, %c0_33] : memref<4x32x128xbf16, #tpu.memory_space<vmem>>, vector<1x32x128xbf16>
    %68 = vector.shape_cast %67 : vector<1x32x128xbf16> to vector<32x128xbf16>
    %cst_34 = arith.constant dense<0.000000e+00> : vector<2x128xf32>
    %69 = tpu.matmul %9, %68, %cst_34 {dimension_numbers = #tpu.dot_dimension_numbers<[1], [0], [0], [1], [0, 0, 1, 1], [], []>} : vector<2x32xbf16>, vector<32x128xbf16>, vector<2x128xf32> -> vector<2x128xf32>
    %70 = arith.addf %66, %69 : vector<2x128xf32>
    %71 = vector.extract_strided_slice %0 {offsets = [1, 0], sizes = [1, 128], strides = [1, 1]} : vector<4x128xf32> to vector<1x128xf32>
    %72 = vector.broadcast %71 : vector<1x128xf32> to vector<2x128xf32>
    %73 = arith.addf %70, %72 : vector<2x128xf32>
    %74 = arith.negf %73 : vector<2x128xf32>
    %75 = math.exp %74 : vector<2x128xf32>
    %cst_35 = arith.constant 1.000000e+00 : f32
    %76 = vector.broadcast %cst_35 : f32 to vector<2x128xf32>
    %77 = arith.addf %76, %75 : vector<2x128xf32>
    %78 = arith.divf %76, %77 : vector<2x128xf32>
    %79 = vector.extract_strided_slice %78 {offsets = [0, 0], sizes = [2, 32], strides = [1, 1]} : vector<2x128xf32> to vector<2x32xf32>
    %80 = vector.extract_strided_slice %78 {offsets = [0, 32], sizes = [2, 32], strides = [1, 1]} : vector<2x128xf32> to vector<2x32xf32>
    %81 = vector.extract_strided_slice %78 {offsets = [0, 64], sizes = [2, 32], strides = [1, 1]} : vector<2x128xf32> to vector<2x32xf32>
    %cst_36 = arith.constant 2.000000e+00 : f32
    %82 = vector.broadcast %cst_36 : f32 to vector<2x32xf32>
    %83 = arith.mulf %81, %82 : vector<2x32xf32>
    %cst_37 = arith.constant 1.000000e+00 : f32
    %84 = vector.broadcast %cst_37 : f32 to vector<2x32xf32>
    %85 = arith.subf %83, %84 : vector<2x32xf32>
    %86 = vector.extract_strided_slice %78 {offsets = [0, 96], sizes = [2, 32], strides = [1, 1]} : vector<2x128xf32> to vector<2x32xf32>
    %87 = arith.mulf %80, %13 : vector<2x32xf32>
    %88 = arith.mulf %79, %85 : vector<2x32xf32>
    %89 = arith.addf %87, %88 : vector<2x32xf32>
    %90 = math.tanh %89 : vector<2x32xf32>
    %91 = arith.mulf %86, %90 : vector<2x32xf32>
    %92 = arith.truncf %91 : vector<2x32xf32> to vector<2x32xbf16>
    %93 = vector.extract_strided_slice %7 {offsets = [4, 0], sizes = [2, 128], strides = [1, 1]} : vector<16x128xf32> to vector<2x128xf32>
    %c0_38 = arith.constant 0 : index
    %c0_39 = arith.constant 0 : index
    %c0_40 = arith.constant 0 : index
    %94 = vector.load %arg2[%c0_38, %c0_39, %c0_40] : memref<4x32x128xbf16, #tpu.memory_space<vmem>>, vector<1x32x128xbf16>
    %95 = vector.shape_cast %94 : vector<1x32x128xbf16> to vector<32x128xbf16>
    %cst_41 = arith.constant dense<0.000000e+00> : vector<2x128xf32>
    %96 = tpu.matmul %63, %95, %cst_41 {dimension_numbers = #tpu.dot_dimension_numbers<[1], [0], [0], [1], [0, 0, 1, 1], [], []>} : vector<2x32xbf16>, vector<32x128xbf16>, vector<2x128xf32> -> vector<2x128xf32>
    %97 = arith.addf %93, %96 : vector<2x128xf32>
    %98 = arith.negf %97 : vector<2x128xf32>
    %99 = math.exp %98 : vector<2x128xf32>
    %cst_42 = arith.constant 1.000000e+00 : f32
    %100 = vector.broadcast %cst_42 : f32 to vector<2x128xf32>
    %101 = arith.addf %100, %99 : vector<2x128xf32>
    %102 = arith.divf %100, %101 : vector<2x128xf32>
    %103 = vector.extract_strided_slice %102 {offsets = [0, 0], sizes = [2, 32], strides = [1, 1]} : vector<2x128xf32> to vector<2x32xf32>
    %104 = vector.extract_strided_slice %102 {offsets = [0, 32], sizes = [2, 32], strides = [1, 1]} : vector<2x128xf32> to vector<2x32xf32>
    %105 = vector.extract_strided_slice %102 {offsets = [0, 64], sizes = [2, 32], strides = [1, 1]} : vector<2x128xf32> to vector<2x32xf32>
    %cst_43 = arith.constant 2.000000e+00 : f32
    %106 = vector.broadcast %cst_43 : f32 to vector<2x32xf32>
    %107 = arith.mulf %105, %106 : vector<2x32xf32>
    %cst_44 = arith.constant 1.000000e+00 : f32
    %108 = vector.broadcast %cst_44 : f32 to vector<2x32xf32>
    %109 = arith.subf %107, %108 : vector<2x32xf32>
    %110 = vector.extract_strided_slice %102 {offsets = [0, 96], sizes = [2, 32], strides = [1, 1]} : vector<2x128xf32> to vector<2x32xf32>
    %111 = arith.mulf %104, %60 : vector<2x32xf32>
    %112 = arith.mulf %103, %109 : vector<2x32xf32>
    %113 = arith.addf %111, %112 : vector<2x32xf32>
    %114 = math.tanh %113 : vector<2x32xf32>
    %115 = arith.mulf %110, %114 : vector<2x32xf32>
    %116 = arith.truncf %115 : vector<2x32xf32> to vector<2x32xbf16>
    %c1_45 = arith.constant 1 : index
    %c0_46 = arith.constant 0 : index
    %c0_47 = arith.constant 0 : index
    %117 = vector.load %arg1[%c1_45, %c0_46, %c0_47] : memref<4x32x128xbf16, #tpu.memory_space<vmem>>, vector<1x32x128xbf16>
    %118 = vector.shape_cast %117 : vector<1x32x128xbf16> to vector<32x128xbf16>
    %cst_48 = arith.constant dense<0.000000e+00> : vector<2x128xf32>
    %119 = tpu.matmul %63, %118, %cst_48 {dimension_numbers = #tpu.dot_dimension_numbers<[1], [0], [0], [1], [0, 0, 1, 1], [], []>} : vector<2x32xbf16>, vector<32x128xbf16>, vector<2x128xf32> -> vector<2x128xf32>
    %c1_49 = arith.constant 1 : index
    %c0_50 = arith.constant 0 : index
    %c0_51 = arith.constant 0 : index
    %120 = vector.load %arg2[%c1_49, %c0_50, %c0_51] : memref<4x32x128xbf16, #tpu.memory_space<vmem>>, vector<1x32x128xbf16>
    %121 = vector.shape_cast %120 : vector<1x32x128xbf16> to vector<32x128xbf16>
    %cst_52 = arith.constant dense<0.000000e+00> : vector<2x128xf32>
    %122 = tpu.matmul %92, %121, %cst_52 {dimension_numbers = #tpu.dot_dimension_numbers<[1], [0], [0], [1], [0, 0, 1, 1], [], []>} : vector<2x32xbf16>, vector<32x128xbf16>, vector<2x128xf32> -> vector<2x128xf32>
    %123 = arith.addf %119, %122 : vector<2x128xf32>
    %124 = vector.extract_strided_slice %0 {offsets = [1, 0], sizes = [1, 128], strides = [1, 1]} : vector<4x128xf32> to vector<1x128xf32>
    %125 = vector.broadcast %124 : vector<1x128xf32> to vector<2x128xf32>
    %126 = arith.addf %123, %125 : vector<2x128xf32>
    %127 = arith.negf %126 : vector<2x128xf32>
    %128 = math.exp %127 : vector<2x128xf32>
    %cst_53 = arith.constant 1.000000e+00 : f32
    %129 = vector.broadcast %cst_53 : f32 to vector<2x128xf32>
    %130 = arith.addf %129, %128 : vector<2x128xf32>
    %131 = arith.divf %129, %130 : vector<2x128xf32>
    %132 = vector.extract_strided_slice %131 {offsets = [0, 0], sizes = [2, 32], strides = [1, 1]} : vector<2x128xf32> to vector<2x32xf32>
    %133 = vector.extract_strided_slice %131 {offsets = [0, 32], sizes = [2, 32], strides = [1, 1]} : vector<2x128xf32> to vector<2x32xf32>
    %134 = vector.extract_strided_slice %131 {offsets = [0, 64], sizes = [2, 32], strides = [1, 1]} : vector<2x128xf32> to vector<2x32xf32>
    %cst_54 = arith.constant 2.000000e+00 : f32
    %135 = vector.broadcast %cst_54 : f32 to vector<2x32xf32>
    %136 = arith.mulf %134, %135 : vector<2x32xf32>
    %cst_55 = arith.constant 1.000000e+00 : f32
    %137 = vector.broadcast %cst_55 : f32 to vector<2x32xf32>
    %138 = arith.subf %136, %137 : vector<2x32xf32>
    %139 = vector.extract_strided_slice %131 {offsets = [0, 96], sizes = [2, 32], strides = [1, 1]} : vector<2x128xf32> to vector<2x32xf32>
    %140 = arith.mulf %133, %89 : vector<2x32xf32>
    %141 = arith.mulf %132, %138 : vector<2x32xf32>
    %142 = arith.addf %140, %141 : vector<2x32xf32>
    %143 = math.tanh %142 : vector<2x32xf32>
    %144 = arith.mulf %139, %143 : vector<2x32xf32>
    %145 = arith.truncf %144 : vector<2x32xf32> to vector<2x32xbf16>
    %c2 = arith.constant 2 : index
    %c0_56 = arith.constant 0 : index
    %c0_57 = arith.constant 0 : index
    %146 = vector.load %arg1[%c2, %c0_56, %c0_57] : memref<4x32x128xbf16, #tpu.memory_space<vmem>>, vector<1x32x128xbf16>
    %147 = vector.shape_cast %146 : vector<1x32x128xbf16> to vector<32x128xbf16>
    %cst_58 = arith.constant dense<0.000000e+00> : vector<2x128xf32>
    %148 = tpu.matmul %92, %147, %cst_58 {dimension_numbers = #tpu.dot_dimension_numbers<[1], [0], [0], [1], [0, 0, 1, 1], [], []>} : vector<2x32xbf16>, vector<32x128xbf16>, vector<2x128xf32> -> vector<2x128xf32>
    %c2_59 = arith.constant 2 : index
    %c0_60 = arith.constant 0 : index
    %c0_61 = arith.constant 0 : index
    %149 = vector.load %arg2[%c2_59, %c0_60, %c0_61] : memref<4x32x128xbf16, #tpu.memory_space<vmem>>, vector<1x32x128xbf16>
    %150 = vector.shape_cast %149 : vector<1x32x128xbf16> to vector<32x128xbf16>
    %cst_62 = arith.constant dense<0.000000e+00> : vector<2x128xf32>
    %151 = tpu.matmul %10, %150, %cst_62 {dimension_numbers = #tpu.dot_dimension_numbers<[1], [0], [0], [1], [0, 0, 1, 1], [], []>} : vector<2x32xbf16>, vector<32x128xbf16>, vector<2x128xf32> -> vector<2x128xf32>
    %152 = arith.addf %148, %151 : vector<2x128xf32>
    %153 = vector.extract_strided_slice %0 {offsets = [2, 0], sizes = [1, 128], strides = [1, 1]} : vector<4x128xf32> to vector<1x128xf32>
    %154 = vector.broadcast %153 : vector<1x128xf32> to vector<2x128xf32>
    %155 = arith.addf %152, %154 : vector<2x128xf32>
    %156 = arith.negf %155 : vector<2x128xf32>
    %157 = math.exp %156 : vector<2x128xf32>
    %cst_63 = arith.constant 1.000000e+00 : f32
    %158 = vector.broadcast %cst_63 : f32 to vector<2x128xf32>
    %159 = arith.addf %158, %157 : vector<2x128xf32>
    %160 = arith.divf %158, %159 : vector<2x128xf32>
    %161 = vector.extract_strided_slice %160 {offsets = [0, 0], sizes = [2, 32], strides = [1, 1]} : vector<2x128xf32> to vector<2x32xf32>
    %162 = vector.extract_strided_slice %160 {offsets = [0, 32], sizes = [2, 32], strides = [1, 1]} : vector<2x128xf32> to vector<2x32xf32>
    %163 = vector.extract_strided_slice %160 {offsets = [0, 64], sizes = [2, 32], strides = [1, 1]} : vector<2x128xf32> to vector<2x32xf32>
    %cst_64 = arith.constant 2.000000e+00 : f32
    %164 = vector.broadcast %cst_64 : f32 to vector<2x32xf32>
    %165 = arith.mulf %163, %164 : vector<2x32xf32>
    %cst_65 = arith.constant 1.000000e+00 : f32
    %166 = vector.broadcast %cst_65 : f32 to vector<2x32xf32>
    %167 = arith.subf %165, %166 : vector<2x32xf32>
    %168 = vector.extract_strided_slice %160 {offsets = [0, 96], sizes = [2, 32], strides = [1, 1]} : vector<2x128xf32> to vector<2x32xf32>
    %169 = arith.mulf %162, %14 : vector<2x32xf32>
    %170 = arith.mulf %161, %167 : vector<2x32xf32>
    %171 = arith.addf %169, %170 : vector<2x32xf32>
    %172 = math.tanh %171 : vector<2x32xf32>
    %173 = arith.mulf %168, %172 : vector<2x32xf32>
    %174 = arith.truncf %173 : vector<2x32xf32> to vector<2x32xbf16>
    %175 = vector.extract_strided_slice %7 {offsets = [6, 0], sizes = [2, 128], strides = [1, 1]} : vector<16x128xf32> to vector<2x128xf32>
    %c0_66 = arith.constant 0 : index
    %c0_67 = arith.constant 0 : index
    %c0_68 = arith.constant 0 : index
    %176 = vector.load %arg2[%c0_66, %c0_67, %c0_68] : memref<4x32x128xbf16, #tpu.memory_space<vmem>>, vector<1x32x128xbf16>
    %177 = vector.shape_cast %176 : vector<1x32x128xbf16> to vector<32x128xbf16>
    %cst_69 = arith.constant dense<0.000000e+00> : vector<2x128xf32>
    %178 = tpu.matmul %116, %177, %cst_69 {dimension_numbers = #tpu.dot_dimension_numbers<[1], [0], [0], [1], [0, 0, 1, 1], [], []>} : vector<2x32xbf16>, vector<32x128xbf16>, vector<2x128xf32> -> vector<2x128xf32>
    %179 = arith.addf %175, %178 : vector<2x128xf32>
    %180 = arith.negf %179 : vector<2x128xf32>
    %181 = math.exp %180 : vector<2x128xf32>
    %cst_70 = arith.constant 1.000000e+00 : f32
    %182 = vector.broadcast %cst_70 : f32 to vector<2x128xf32>
    %183 = arith.addf %182, %181 : vector<2x128xf32>
    %184 = arith.divf %182, %183 : vector<2x128xf32>
    %185 = vector.extract_strided_slice %184 {offsets = [0, 0], sizes = [2, 32], strides = [1, 1]} : vector<2x128xf32> to vector<2x32xf32>
    %186 = vector.extract_strided_slice %184 {offsets = [0, 32], sizes = [2, 32], strides = [1, 1]} : vector<2x128xf32> to vector<2x32xf32>
    %187 = vector.extract_strided_slice %184 {offsets = [0, 64], sizes = [2, 32], strides = [1, 1]} : vector<2x128xf32> to vector<2x32xf32>
    %cst_71 = arith.constant 2.000000e+00 : f32
    %188 = vector.broadcast %cst_71 : f32 to vector<2x32xf32>
    %189 = arith.mulf %187, %188 : vector<2x32xf32>
    %cst_72 = arith.constant 1.000000e+00 : f32
    %190 = vector.broadcast %cst_72 : f32 to vector<2x32xf32>
    %191 = arith.subf %189, %190 : vector<2x32xf32>
    %192 = vector.extract_strided_slice %184 {offsets = [0, 96], sizes = [2, 32], strides = [1, 1]} : vector<2x128xf32> to vector<2x32xf32>
    %193 = arith.mulf %186, %113 : vector<2x32xf32>
    %194 = arith.mulf %185, %191 : vector<2x32xf32>
    %195 = arith.addf %193, %194 : vector<2x32xf32>
    %196 = math.tanh %195 : vector<2x32xf32>
    %197 = arith.mulf %192, %196 : vector<2x32xf32>
    %198 = arith.truncf %197 : vector<2x32xf32> to vector<2x32xbf16>
    %c1_73 = arith.constant 1 : index
    %c0_74 = arith.constant 0 : index
    %c0_75 = arith.constant 0 : index
    %199 = vector.load %arg1[%c1_73, %c0_74, %c0_75] : memref<4x32x128xbf16, #tpu.memory_space<vmem>>, vector<1x32x128xbf16>
    %200 = vector.shape_cast %199 : vector<1x32x128xbf16> to vector<32x128xbf16>
    %cst_76 = arith.constant dense<0.000000e+00> : vector<2x128xf32>
    %201 = tpu.matmul %116, %200, %cst_76 {dimension_numbers = #tpu.dot_dimension_numbers<[1], [0], [0], [1], [0, 0, 1, 1], [], []>} : vector<2x32xbf16>, vector<32x128xbf16>, vector<2x128xf32> -> vector<2x128xf32>
    %c1_77 = arith.constant 1 : index
    %c0_78 = arith.constant 0 : index
    %c0_79 = arith.constant 0 : index
    %202 = vector.load %arg2[%c1_77, %c0_78, %c0_79] : memref<4x32x128xbf16, #tpu.memory_space<vmem>>, vector<1x32x128xbf16>
    %203 = vector.shape_cast %202 : vector<1x32x128xbf16> to vector<32x128xbf16>
    %cst_80 = arith.constant dense<0.000000e+00> : vector<2x128xf32>
    %204 = tpu.matmul %145, %203, %cst_80 {dimension_numbers = #tpu.dot_dimension_numbers<[1], [0], [0], [1], [0, 0, 1, 1], [], []>} : vector<2x32xbf16>, vector<32x128xbf16>, vector<2x128xf32> -> vector<2x128xf32>
    %205 = arith.addf %201, %204 : vector<2x128xf32>
    %206 = vector.extract_strided_slice %0 {offsets = [1, 0], sizes = [1, 128], strides = [1, 1]} : vector<4x128xf32> to vector<1x128xf32>
    %207 = vector.broadcast %206 : vector<1x128xf32> to vector<2x128xf32>
    %208 = arith.addf %205, %207 : vector<2x128xf32>
    %209 = arith.negf %208 : vector<2x128xf32>
    %210 = math.exp %209 : vector<2x128xf32>
    %cst_81 = arith.constant 1.000000e+00 : f32
    %211 = vector.broadcast %cst_81 : f32 to vector<2x128xf32>
    %212 = arith.addf %211, %210 : vector<2x128xf32>
    %213 = arith.divf %211, %212 : vector<2x128xf32>
    %214 = vector.extract_strided_slice %213 {offsets = [0, 0], sizes = [2, 32], strides = [1, 1]} : vector<2x128xf32> to vector<2x32xf32>
    %215 = vector.extract_strided_slice %213 {offsets = [0, 32], sizes = [2, 32], strides = [1, 1]} : vector<2x128xf32> to vector<2x32xf32>
    %216 = vector.extract_strided_slice %213 {offsets = [0, 64], sizes = [2, 32], strides = [1, 1]} : vector<2x128xf32> to vector<2x32xf32>
    %cst_82 = arith.constant 2.000000e+00 : f32
    %217 = vector.broadcast %cst_82 : f32 to vector<2x32xf32>
    %218 = arith.mulf %216, %217 : vector<2x32xf32>
    %cst_83 = arith.constant 1.000000e+00 : f32
    %219 = vector.broadcast %cst_83 : f32 to vector<2x32xf32>
    %220 = arith.subf %218, %219 : vector<2x32xf32>
    %221 = vector.extract_strided_slice %213 {offsets = [0, 96], sizes = [2, 32], strides = [1, 1]} : vector<2x128xf32> to vector<2x32xf32>
    %222 = arith.mulf %215, %142 : vector<2x32xf32>
    %223 = arith.mulf %214, %220 : vector<2x32xf32>
    %224 = arith.addf %222, %223 : vector<2x32xf32>
    %225 = math.tanh %224 : vector<2x32xf32>
    %226 = arith.mulf %221, %225 : vector<2x32xf32>
    %227 = arith.truncf %226 : vector<2x32xf32> to vector<2x32xbf16>
    %c2_84 = arith.constant 2 : index
    %c0_85 = arith.constant 0 : index
    %c0_86 = arith.constant 0 : index
    %228 = vector.load %arg1[%c2_84, %c0_85, %c0_86] : memref<4x32x128xbf16, #tpu.memory_space<vmem>>, vector<1x32x128xbf16>
    %229 = vector.shape_cast %228 : vector<1x32x128xbf16> to vector<32x128xbf16>
    %cst_87 = arith.constant dense<0.000000e+00> : vector<2x128xf32>
    %230 = tpu.matmul %145, %229, %cst_87 {dimension_numbers = #tpu.dot_dimension_numbers<[1], [0], [0], [1], [0, 0, 1, 1], [], []>} : vector<2x32xbf16>, vector<32x128xbf16>, vector<2x128xf32> -> vector<2x128xf32>
    %c2_88 = arith.constant 2 : index
    %c0_89 = arith.constant 0 : index
    %c0_90 = arith.constant 0 : index
    %231 = vector.load %arg2[%c2_88, %c0_89, %c0_90] : memref<4x32x128xbf16, #tpu.memory_space<vmem>>, vector<1x32x128xbf16>
    %232 = vector.shape_cast %231 : vector<1x32x128xbf16> to vector<32x128xbf16>
    %cst_91 = arith.constant dense<0.000000e+00> : vector<2x128xf32>
    %233 = tpu.matmul %174, %232, %cst_91 {dimension_numbers = #tpu.dot_dimension_numbers<[1], [0], [0], [1], [0, 0, 1, 1], [], []>} : vector<2x32xbf16>, vector<32x128xbf16>, vector<2x128xf32> -> vector<2x128xf32>
    %234 = arith.addf %230, %233 : vector<2x128xf32>
    %235 = vector.extract_strided_slice %0 {offsets = [2, 0], sizes = [1, 128], strides = [1, 1]} : vector<4x128xf32> to vector<1x128xf32>
    %236 = vector.broadcast %235 : vector<1x128xf32> to vector<2x128xf32>
    %237 = arith.addf %234, %236 : vector<2x128xf32>
    %238 = arith.negf %237 : vector<2x128xf32>
    %239 = math.exp %238 : vector<2x128xf32>
    %cst_92 = arith.constant 1.000000e+00 : f32
    %240 = vector.broadcast %cst_92 : f32 to vector<2x128xf32>
    %241 = arith.addf %240, %239 : vector<2x128xf32>
    %242 = arith.divf %240, %241 : vector<2x128xf32>
    %243 = vector.extract_strided_slice %242 {offsets = [0, 0], sizes = [2, 32], strides = [1, 1]} : vector<2x128xf32> to vector<2x32xf32>
    %244 = vector.extract_strided_slice %242 {offsets = [0, 32], sizes = [2, 32], strides = [1, 1]} : vector<2x128xf32> to vector<2x32xf32>
    %245 = vector.extract_strided_slice %242 {offsets = [0, 64], sizes = [2, 32], strides = [1, 1]} : vector<2x128xf32> to vector<2x32xf32>
    %cst_93 = arith.constant 2.000000e+00 : f32
    %246 = vector.broadcast %cst_93 : f32 to vector<2x32xf32>
    %247 = arith.mulf %245, %246 : vector<2x32xf32>
    %cst_94 = arith.constant 1.000000e+00 : f32
    %248 = vector.broadcast %cst_94 : f32 to vector<2x32xf32>
    %249 = arith.subf %247, %248 : vector<2x32xf32>
    %250 = vector.extract_strided_slice %242 {offsets = [0, 96], sizes = [2, 32], strides = [1, 1]} : vector<2x128xf32> to vector<2x32xf32>
    %251 = arith.mulf %244, %171 : vector<2x32xf32>
    %252 = arith.mulf %243, %249 : vector<2x32xf32>
    %253 = arith.addf %251, %252 : vector<2x32xf32>
    %254 = math.tanh %253 : vector<2x32xf32>
    %255 = arith.mulf %250, %254 : vector<2x32xf32>
    %256 = arith.truncf %255 : vector<2x32xf32> to vector<2x32xbf16>
    %c3 = arith.constant 3 : index
    %c0_95 = arith.constant 0 : index
    %c0_96 = arith.constant 0 : index
    %257 = vector.load %arg1[%c3, %c0_95, %c0_96] : memref<4x32x128xbf16, #tpu.memory_space<vmem>>, vector<1x32x128xbf16>
    %258 = vector.shape_cast %257 : vector<1x32x128xbf16> to vector<32x128xbf16>
    %cst_97 = arith.constant dense<0.000000e+00> : vector<2x128xf32>
    %259 = tpu.matmul %174, %258, %cst_97 {dimension_numbers = #tpu.dot_dimension_numbers<[1], [0], [0], [1], [0, 0, 1, 1], [], []>} : vector<2x32xbf16>, vector<32x128xbf16>, vector<2x128xf32> -> vector<2x128xf32>
    %c3_98 = arith.constant 3 : index
    %c0_99 = arith.constant 0 : index
    %c0_100 = arith.constant 0 : index
    %260 = vector.load %arg2[%c3_98, %c0_99, %c0_100] : memref<4x32x128xbf16, #tpu.memory_space<vmem>>, vector<1x32x128xbf16>
    %261 = vector.shape_cast %260 : vector<1x32x128xbf16> to vector<32x128xbf16>
    %cst_101 = arith.constant dense<0.000000e+00> : vector<2x128xf32>
    %262 = tpu.matmul %11, %261, %cst_101 {dimension_numbers = #tpu.dot_dimension_numbers<[1], [0], [0], [1], [0, 0, 1, 1], [], []>} : vector<2x32xbf16>, vector<32x128xbf16>, vector<2x128xf32> -> vector<2x128xf32>
    %263 = arith.addf %259, %262 : vector<2x128xf32>
    %264 = vector.extract_strided_slice %0 {offsets = [3, 0], sizes = [1, 128], strides = [1, 1]} : vector<4x128xf32> to vector<1x128xf32>
    %265 = vector.broadcast %264 : vector<1x128xf32> to vector<2x128xf32>
    %266 = arith.addf %263, %265 : vector<2x128xf32>
    %267 = arith.negf %266 : vector<2x128xf32>
    %268 = math.exp %267 : vector<2x128xf32>
    %cst_102 = arith.constant 1.000000e+00 : f32
    %269 = vector.broadcast %cst_102 : f32 to vector<2x128xf32>
    %270 = arith.addf %269, %268 : vector<2x128xf32>
    %271 = arith.divf %269, %270 : vector<2x128xf32>
    %272 = vector.extract_strided_slice %271 {offsets = [0, 0], sizes = [2, 32], strides = [1, 1]} : vector<2x128xf32> to vector<2x32xf32>
    %273 = vector.extract_strided_slice %271 {offsets = [0, 32], sizes = [2, 32], strides = [1, 1]} : vector<2x128xf32> to vector<2x32xf32>
    %274 = vector.extract_strided_slice %271 {offsets = [0, 64], sizes = [2, 32], strides = [1, 1]} : vector<2x128xf32> to vector<2x32xf32>
    %cst_103 = arith.constant 2.000000e+00 : f32
    %275 = vector.broadcast %cst_103 : f32 to vector<2x32xf32>
    %276 = arith.mulf %274, %275 : vector<2x32xf32>
    %cst_104 = arith.constant 1.000000e+00 : f32
    %277 = vector.broadcast %cst_104 : f32 to vector<2x32xf32>
    %278 = arith.subf %276, %277 : vector<2x32xf32>
    %279 = vector.extract_strided_slice %271 {offsets = [0, 96], sizes = [2, 32], strides = [1, 1]} : vector<2x128xf32> to vector<2x32xf32>
    %280 = arith.mulf %273, %15 : vector<2x32xf32>
    %281 = arith.mulf %272, %278 : vector<2x32xf32>
    %282 = arith.addf %280, %281 : vector<2x32xf32>
    %283 = math.tanh %282 : vector<2x32xf32>
    %284 = arith.mulf %279, %283 : vector<2x32xf32>
    %285 = arith.truncf %284 : vector<2x32xf32> to vector<2x32xbf16>
    %286 = vector.extract_strided_slice %7 {offsets = [8, 0], sizes = [2, 128], strides = [1, 1]} : vector<16x128xf32> to vector<2x128xf32>
    %c0_105 = arith.constant 0 : index
    %c0_106 = arith.constant 0 : index
    %c0_107 = arith.constant 0 : index
    %287 = vector.load %arg2[%c0_105, %c0_106, %c0_107] : memref<4x32x128xbf16, #tpu.memory_space<vmem>>, vector<1x32x128xbf16>
    %288 = vector.shape_cast %287 : vector<1x32x128xbf16> to vector<32x128xbf16>
    %cst_108 = arith.constant dense<0.000000e+00> : vector<2x128xf32>
    %289 = tpu.matmul %198, %288, %cst_108 {dimension_numbers = #tpu.dot_dimension_numbers<[1], [0], [0], [1], [0, 0, 1, 1], [], []>} : vector<2x32xbf16>, vector<32x128xbf16>, vector<2x128xf32> -> vector<2x128xf32>
    %290 = arith.addf %286, %289 : vector<2x128xf32>
    %291 = arith.negf %290 : vector<2x128xf32>
    %292 = math.exp %291 : vector<2x128xf32>
    %cst_109 = arith.constant 1.000000e+00 : f32
    %293 = vector.broadcast %cst_109 : f32 to vector<2x128xf32>
    %294 = arith.addf %293, %292 : vector<2x128xf32>
    %295 = arith.divf %293, %294 : vector<2x128xf32>
    %296 = vector.extract_strided_slice %295 {offsets = [0, 0], sizes = [2, 32], strides = [1, 1]} : vector<2x128xf32> to vector<2x32xf32>
    %297 = vector.extract_strided_slice %295 {offsets = [0, 32], sizes = [2, 32], strides = [1, 1]} : vector<2x128xf32> to vector<2x32xf32>
    %298 = vector.extract_strided_slice %295 {offsets = [0, 64], sizes = [2, 32], strides = [1, 1]} : vector<2x128xf32> to vector<2x32xf32>
    %cst_110 = arith.constant 2.000000e+00 : f32
    %299 = vector.broadcast %cst_110 : f32 to vector<2x32xf32>
    %300 = arith.mulf %298, %299 : vector<2x32xf32>
    %cst_111 = arith.constant 1.000000e+00 : f32
    %301 = vector.broadcast %cst_111 : f32 to vector<2x32xf32>
    %302 = arith.subf %300, %301 : vector<2x32xf32>
    %303 = vector.extract_strided_slice %295 {offsets = [0, 96], sizes = [2, 32], strides = [1, 1]} : vector<2x128xf32> to vector<2x32xf32>
    %304 = arith.mulf %297, %195 : vector<2x32xf32>
    %305 = arith.mulf %296, %302 : vector<2x32xf32>
    %306 = arith.addf %304, %305 : vector<2x32xf32>
    %307 = math.tanh %306 : vector<2x32xf32>
    %308 = arith.mulf %303, %307 : vector<2x32xf32>
    %309 = arith.truncf %308 : vector<2x32xf32> to vector<2x32xbf16>
    %c1_112 = arith.constant 1 : index
    %c0_113 = arith.constant 0 : index
    %c0_114 = arith.constant 0 : index
    %310 = vector.load %arg1[%c1_112, %c0_113, %c0_114] : memref<4x32x128xbf16, #tpu.memory_space<vmem>>, vector<1x32x128xbf16>
    %311 = vector.shape_cast %310 : vector<1x32x128xbf16> to vector<32x128xbf16>
    %cst_115 = arith.constant dense<0.000000e+00> : vector<2x128xf32>
    %312 = tpu.matmul %198, %311, %cst_115 {dimension_numbers = #tpu.dot_dimension_numbers<[1], [0], [0], [1], [0, 0, 1, 1], [], []>} : vector<2x32xbf16>, vector<32x128xbf16>, vector<2x128xf32> -> vector<2x128xf32>
    %c1_116 = arith.constant 1 : index
    %c0_117 = arith.constant 0 : index
    %c0_118 = arith.constant 0 : index
    %313 = vector.load %arg2[%c1_116, %c0_117, %c0_118] : memref<4x32x128xbf16, #tpu.memory_space<vmem>>, vector<1x32x128xbf16>
    %314 = vector.shape_cast %313 : vector<1x32x128xbf16> to vector<32x128xbf16>
    %cst_119 = arith.constant dense<0.000000e+00> : vector<2x128xf32>
    %315 = tpu.matmul %227, %314, %cst_119 {dimension_numbers = #tpu.dot_dimension_numbers<[1], [0], [0], [1], [0, 0, 1, 1], [], []>} : vector<2x32xbf16>, vector<32x128xbf16>, vector<2x128xf32> -> vector<2x128xf32>
    %316 = arith.addf %312, %315 : vector<2x128xf32>
    %317 = vector.extract_strided_slice %0 {offsets = [1, 0], sizes = [1, 128], strides = [1, 1]} : vector<4x128xf32> to vector<1x128xf32>
    %318 = vector.broadcast %317 : vector<1x128xf32> to vector<2x128xf32>
    %319 = arith.addf %316, %318 : vector<2x128xf32>
    %320 = arith.negf %319 : vector<2x128xf32>
    %321 = math.exp %320 : vector<2x128xf32>
    %cst_120 = arith.constant 1.000000e+00 : f32
    %322 = vector.broadcast %cst_120 : f32 to vector<2x128xf32>
    %323 = arith.addf %322, %321 : vector<2x128xf32>
    %324 = arith.divf %322, %323 : vector<2x128xf32>
    %325 = vector.extract_strided_slice %324 {offsets = [0, 0], sizes = [2, 32], strides = [1, 1]} : vector<2x128xf32> to vector<2x32xf32>
    %326 = vector.extract_strided_slice %324 {offsets = [0, 32], sizes = [2, 32], strides = [1, 1]} : vector<2x128xf32> to vector<2x32xf32>
    %327 = vector.extract_strided_slice %324 {offsets = [0, 64], sizes = [2, 32], strides = [1, 1]} : vector<2x128xf32> to vector<2x32xf32>
    %cst_121 = arith.constant 2.000000e+00 : f32
    %328 = vector.broadcast %cst_121 : f32 to vector<2x32xf32>
    %329 = arith.mulf %327, %328 : vector<2x32xf32>
    %cst_122 = arith.constant 1.000000e+00 : f32
    %330 = vector.broadcast %cst_122 : f32 to vector<2x32xf32>
    %331 = arith.subf %329, %330 : vector<2x32xf32>
    %332 = vector.extract_strided_slice %324 {offsets = [0, 96], sizes = [2, 32], strides = [1, 1]} : vector<2x128xf32> to vector<2x32xf32>
    %333 = arith.mulf %326, %224 : vector<2x32xf32>
    %334 = arith.mulf %325, %331 : vector<2x32xf32>
    %335 = arith.addf %333, %334 : vector<2x32xf32>
    %336 = math.tanh %335 : vector<2x32xf32>
    %337 = arith.mulf %332, %336 : vector<2x32xf32>
    %338 = arith.truncf %337 : vector<2x32xf32> to vector<2x32xbf16>
    %c2_123 = arith.constant 2 : index
    %c0_124 = arith.constant 0 : index
    %c0_125 = arith.constant 0 : index
    %339 = vector.load %arg1[%c2_123, %c0_124, %c0_125] : memref<4x32x128xbf16, #tpu.memory_space<vmem>>, vector<1x32x128xbf16>
    %340 = vector.shape_cast %339 : vector<1x32x128xbf16> to vector<32x128xbf16>
    %cst_126 = arith.constant dense<0.000000e+00> : vector<2x128xf32>
    %341 = tpu.matmul %227, %340, %cst_126 {dimension_numbers = #tpu.dot_dimension_numbers<[1], [0], [0], [1], [0, 0, 1, 1], [], []>} : vector<2x32xbf16>, vector<32x128xbf16>, vector<2x128xf32> -> vector<2x128xf32>
    %c2_127 = arith.constant 2 : index
    %c0_128 = arith.constant 0 : index
    %c0_129 = arith.constant 0 : index
    %342 = vector.load %arg2[%c2_127, %c0_128, %c0_129] : memref<4x32x128xbf16, #tpu.memory_space<vmem>>, vector<1x32x128xbf16>
    %343 = vector.shape_cast %342 : vector<1x32x128xbf16> to vector<32x128xbf16>
    %cst_130 = arith.constant dense<0.000000e+00> : vector<2x128xf32>
    %344 = tpu.matmul %256, %343, %cst_130 {dimension_numbers = #tpu.dot_dimension_numbers<[1], [0], [0], [1], [0, 0, 1, 1], [], []>} : vector<2x32xbf16>, vector<32x128xbf16>, vector<2x128xf32> -> vector<2x128xf32>
    %345 = arith.addf %341, %344 : vector<2x128xf32>
    %346 = vector.extract_strided_slice %0 {offsets = [2, 0], sizes = [1, 128], strides = [1, 1]} : vector<4x128xf32> to vector<1x128xf32>
    %347 = vector.broadcast %346 : vector<1x128xf32> to vector<2x128xf32>
    %348 = arith.addf %345, %347 : vector<2x128xf32>
    %349 = arith.negf %348 : vector<2x128xf32>
    %350 = math.exp %349 : vector<2x128xf32>
    %cst_131 = arith.constant 1.000000e+00 : f32
    %351 = vector.broadcast %cst_131 : f32 to vector<2x128xf32>
    %352 = arith.addf %351, %350 : vector<2x128xf32>
    %353 = arith.divf %351, %352 : vector<2x128xf32>
    %354 = vector.extract_strided_slice %353 {offsets = [0, 0], sizes = [2, 32], strides = [1, 1]} : vector<2x128xf32> to vector<2x32xf32>
    %355 = vector.extract_strided_slice %353 {offsets = [0, 32], sizes = [2, 32], strides = [1, 1]} : vector<2x128xf32> to vector<2x32xf32>
    %356 = vector.extract_strided_slice %353 {offsets = [0, 64], sizes = [2, 32], strides = [1, 1]} : vector<2x128xf32> to vector<2x32xf32>
    %cst_132 = arith.constant 2.000000e+00 : f32
    %357 = vector.broadcast %cst_132 : f32 to vector<2x32xf32>
    %358 = arith.mulf %356, %357 : vector<2x32xf32>
    %cst_133 = arith.constant 1.000000e+00 : f32
    %359 = vector.broadcast %cst_133 : f32 to vector<2x32xf32>
    %360 = arith.subf %358, %359 : vector<2x32xf32>
    %361 = vector.extract_strided_slice %353 {offsets = [0, 96], sizes = [2, 32], strides = [1, 1]} : vector<2x128xf32> to vector<2x32xf32>
    %362 = arith.mulf %355, %253 : vector<2x32xf32>
    %363 = arith.mulf %354, %360 : vector<2x32xf32>
    %364 = arith.addf %362, %363 : vector<2x32xf32>
    %365 = math.tanh %364 : vector<2x32xf32>
    %366 = arith.mulf %361, %365 : vector<2x32xf32>
    %367 = arith.truncf %366 : vector<2x32xf32> to vector<2x32xbf16>
    %c3_134 = arith.constant 3 : index
    %c0_135 = arith.constant 0 : index
    %c0_136 = arith.constant 0 : index
    %368 = vector.load %arg1[%c3_134, %c0_135, %c0_136] : memref<4x32x128xbf16, #tpu.memory_space<vmem>>, vector<1x32x128xbf16>
    %369 = vector.shape_cast %368 : vector<1x32x128xbf16> to vector<32x128xbf16>
    %cst_137 = arith.constant dense<0.000000e+00> : vector<2x128xf32>
    %370 = tpu.matmul %256, %369, %cst_137 {dimension_numbers = #tpu.dot_dimension_numbers<[1], [0], [0], [1], [0, 0, 1, 1], [], []>} : vector<2x32xbf16>, vector<32x128xbf16>, vector<2x128xf32> -> vector<2x128xf32>
    %c3_138 = arith.constant 3 : index
    %c0_139 = arith.constant 0 : index
    %c0_140 = arith.constant 0 : index
    %371 = vector.load %arg2[%c3_138, %c0_139, %c0_140] : memref<4x32x128xbf16, #tpu.memory_space<vmem>>, vector<1x32x128xbf16>
    %372 = vector.shape_cast %371 : vector<1x32x128xbf16> to vector<32x128xbf16>
    %cst_141 = arith.constant dense<0.000000e+00> : vector<2x128xf32>
    %373 = tpu.matmul %285, %372, %cst_141 {dimension_numbers = #tpu.dot_dimension_numbers<[1], [0], [0], [1], [0, 0, 1, 1], [], []>} : vector<2x32xbf16>, vector<32x128xbf16>, vector<2x128xf32> -> vector<2x128xf32>
    %374 = arith.addf %370, %373 : vector<2x128xf32>
    %375 = vector.extract_strided_slice %0 {offsets = [3, 0], sizes = [1, 128], strides = [1, 1]} : vector<4x128xf32> to vector<1x128xf32>
    %376 = vector.broadcast %375 : vector<1x128xf32> to vector<2x128xf32>
    %377 = arith.addf %374, %376 : vector<2x128xf32>
    %378 = arith.negf %377 : vector<2x128xf32>
    %379 = math.exp %378 : vector<2x128xf32>
    %cst_142 = arith.constant 1.000000e+00 : f32
    %380 = vector.broadcast %cst_142 : f32 to vector<2x128xf32>
    %381 = arith.addf %380, %379 : vector<2x128xf32>
    %382 = arith.divf %380, %381 : vector<2x128xf32>
    %383 = vector.extract_strided_slice %382 {offsets = [0, 0], sizes = [2, 32], strides = [1, 1]} : vector<2x128xf32> to vector<2x32xf32>
    %384 = vector.extract_strided_slice %382 {offsets = [0, 32], sizes = [2, 32], strides = [1, 1]} : vector<2x128xf32> to vector<2x32xf32>
    %385 = vector.extract_strided_slice %382 {offsets = [0, 64], sizes = [2, 32], strides = [1, 1]} : vector<2x128xf32> to vector<2x32xf32>
    %cst_143 = arith.constant 2.000000e+00 : f32
    %386 = vector.broadcast %cst_143 : f32 to vector<2x32xf32>
    %387 = arith.mulf %385, %386 : vector<2x32xf32>
    %cst_144 = arith.constant 1.000000e+00 : f32
    %388 = vector.broadcast %cst_144 : f32 to vector<2x32xf32>
    %389 = arith.subf %387, %388 : vector<2x32xf32>
    %390 = vector.extract_strided_slice %382 {offsets = [0, 96], sizes = [2, 32], strides = [1, 1]} : vector<2x128xf32> to vector<2x32xf32>
    %391 = arith.mulf %384, %282 : vector<2x32xf32>
    %392 = arith.mulf %383, %389 : vector<2x32xf32>
    %393 = arith.addf %391, %392 : vector<2x32xf32>
    %394 = math.tanh %393 : vector<2x32xf32>
    %395 = arith.mulf %390, %394 : vector<2x32xf32>
    %396 = arith.truncf %395 : vector<2x32xf32> to vector<2x32xbf16>
    %397 = vector.extract_strided_slice %7 {offsets = [10, 0], sizes = [2, 128], strides = [1, 1]} : vector<16x128xf32> to vector<2x128xf32>
    %c0_145 = arith.constant 0 : index
    %c0_146 = arith.constant 0 : index
    %c0_147 = arith.constant 0 : index
    %398 = vector.load %arg2[%c0_145, %c0_146, %c0_147] : memref<4x32x128xbf16, #tpu.memory_space<vmem>>, vector<1x32x128xbf16>
    %399 = vector.shape_cast %398 : vector<1x32x128xbf16> to vector<32x128xbf16>
    %cst_148 = arith.constant dense<0.000000e+00> : vector<2x128xf32>
    %400 = tpu.matmul %309, %399, %cst_148 {dimension_numbers = #tpu.dot_dimension_numbers<[1], [0], [0], [1], [0, 0, 1, 1], [], []>} : vector<2x32xbf16>, vector<32x128xbf16>, vector<2x128xf32> -> vector<2x128xf32>
    %401 = arith.addf %397, %400 : vector<2x128xf32>
    %402 = arith.negf %401 : vector<2x128xf32>
    %403 = math.exp %402 : vector<2x128xf32>
    %cst_149 = arith.constant 1.000000e+00 : f32
    %404 = vector.broadcast %cst_149 : f32 to vector<2x128xf32>
    %405 = arith.addf %404, %403 : vector<2x128xf32>
    %406 = arith.divf %404, %405 : vector<2x128xf32>
    %407 = vector.extract_strided_slice %406 {offsets = [0, 0], sizes = [2, 32], strides = [1, 1]} : vector<2x128xf32> to vector<2x32xf32>
    %408 = vector.extract_strided_slice %406 {offsets = [0, 32], sizes = [2, 32], strides = [1, 1]} : vector<2x128xf32> to vector<2x32xf32>
    %409 = vector.extract_strided_slice %406 {offsets = [0, 64], sizes = [2, 32], strides = [1, 1]} : vector<2x128xf32> to vector<2x32xf32>
    %cst_150 = arith.constant 2.000000e+00 : f32
    %410 = vector.broadcast %cst_150 : f32 to vector<2x32xf32>
    %411 = arith.mulf %409, %410 : vector<2x32xf32>
    %cst_151 = arith.constant 1.000000e+00 : f32
    %412 = vector.broadcast %cst_151 : f32 to vector<2x32xf32>
    %413 = arith.subf %411, %412 : vector<2x32xf32>
    %414 = vector.extract_strided_slice %406 {offsets = [0, 96], sizes = [2, 32], strides = [1, 1]} : vector<2x128xf32> to vector<2x32xf32>
    %415 = arith.mulf %408, %306 : vector<2x32xf32>
    %416 = arith.mulf %407, %413 : vector<2x32xf32>
    %417 = arith.addf %415, %416 : vector<2x32xf32>
    %418 = math.tanh %417 : vector<2x32xf32>
    %419 = arith.mulf %414, %418 : vector<2x32xf32>
    %420 = arith.truncf %419 : vector<2x32xf32> to vector<2x32xbf16>
    %c1_152 = arith.constant 1 : index
    %c0_153 = arith.constant 0 : index
    %c0_154 = arith.constant 0 : index
    %421 = vector.load %arg1[%c1_152, %c0_153, %c0_154] : memref<4x32x128xbf16, #tpu.memory_space<vmem>>, vector<1x32x128xbf16>
    %422 = vector.shape_cast %421 : vector<1x32x128xbf16> to vector<32x128xbf16>
    %cst_155 = arith.constant dense<0.000000e+00> : vector<2x128xf32>
    %423 = tpu.matmul %309, %422, %cst_155 {dimension_numbers = #tpu.dot_dimension_numbers<[1], [0], [0], [1], [0, 0, 1, 1], [], []>} : vector<2x32xbf16>, vector<32x128xbf16>, vector<2x128xf32> -> vector<2x128xf32>
    %c1_156 = arith.constant 1 : index
    %c0_157 = arith.constant 0 : index
    %c0_158 = arith.constant 0 : index
    %424 = vector.load %arg2[%c1_156, %c0_157, %c0_158] : memref<4x32x128xbf16, #tpu.memory_space<vmem>>, vector<1x32x128xbf16>
    %425 = vector.shape_cast %424 : vector<1x32x128xbf16> to vector<32x128xbf16>
    %cst_159 = arith.constant dense<0.000000e+00> : vector<2x128xf32>
    %426 = tpu.matmul %338, %425, %cst_159 {dimension_numbers = #tpu.dot_dimension_numbers<[1], [0], [0], [1], [0, 0, 1, 1], [], []>} : vector<2x32xbf16>, vector<32x128xbf16>, vector<2x128xf32> -> vector<2x128xf32>
    %427 = arith.addf %423, %426 : vector<2x128xf32>
    %428 = vector.extract_strided_slice %0 {offsets = [1, 0], sizes = [1, 128], strides = [1, 1]} : vector<4x128xf32> to vector<1x128xf32>
    %429 = vector.broadcast %428 : vector<1x128xf32> to vector<2x128xf32>
    %430 = arith.addf %427, %429 : vector<2x128xf32>
    %431 = arith.negf %430 : vector<2x128xf32>
    %432 = math.exp %431 : vector<2x128xf32>
    %cst_160 = arith.constant 1.000000e+00 : f32
    %433 = vector.broadcast %cst_160 : f32 to vector<2x128xf32>
    %434 = arith.addf %433, %432 : vector<2x128xf32>
    %435 = arith.divf %433, %434 : vector<2x128xf32>
    %436 = vector.extract_strided_slice %435 {offsets = [0, 0], sizes = [2, 32], strides = [1, 1]} : vector<2x128xf32> to vector<2x32xf32>
    %437 = vector.extract_strided_slice %435 {offsets = [0, 32], sizes = [2, 32], strides = [1, 1]} : vector<2x128xf32> to vector<2x32xf32>
    %438 = vector.extract_strided_slice %435 {offsets = [0, 64], sizes = [2, 32], strides = [1, 1]} : vector<2x128xf32> to vector<2x32xf32>
    %cst_161 = arith.constant 2.000000e+00 : f32
    %439 = vector.broadcast %cst_161 : f32 to vector<2x32xf32>
    %440 = arith.mulf %438, %439 : vector<2x32xf32>
    %cst_162 = arith.constant 1.000000e+00 : f32
    %441 = vector.broadcast %cst_162 : f32 to vector<2x32xf32>
    %442 = arith.subf %440, %441 : vector<2x32xf32>
    %443 = vector.extract_strided_slice %435 {offsets = [0, 96], sizes = [2, 32], strides = [1, 1]} : vector<2x128xf32> to vector<2x32xf32>
    %444 = arith.mulf %437, %335 : vector<2x32xf32>
    %445 = arith.mulf %436, %442 : vector<2x32xf32>
    %446 = arith.addf %444, %445 : vector<2x32xf32>
    %447 = math.tanh %446 : vector<2x32xf32>
    %448 = arith.mulf %443, %447 : vector<2x32xf32>
    %449 = arith.truncf %448 : vector<2x32xf32> to vector<2x32xbf16>
    %c2_163 = arith.constant 2 : index
    %c0_164 = arith.constant 0 : index
    %c0_165 = arith.constant 0 : index
    %450 = vector.load %arg1[%c2_163, %c0_164, %c0_165] : memref<4x32x128xbf16, #tpu.memory_space<vmem>>, vector<1x32x128xbf16>
    %451 = vector.shape_cast %450 : vector<1x32x128xbf16> to vector<32x128xbf16>
    %cst_166 = arith.constant dense<0.000000e+00> : vector<2x128xf32>
    %452 = tpu.matmul %338, %451, %cst_166 {dimension_numbers = #tpu.dot_dimension_numbers<[1], [0], [0], [1], [0, 0, 1, 1], [], []>} : vector<2x32xbf16>, vector<32x128xbf16>, vector<2x128xf32> -> vector<2x128xf32>
    %c2_167 = arith.constant 2 : index
    %c0_168 = arith.constant 0 : index
    %c0_169 = arith.constant 0 : index
    %453 = vector.load %arg2[%c2_167, %c0_168, %c0_169] : memref<4x32x128xbf16, #tpu.memory_space<vmem>>, vector<1x32x128xbf16>
    %454 = vector.shape_cast %453 : vector<1x32x128xbf16> to vector<32x128xbf16>
    %cst_170 = arith.constant dense<0.000000e+00> : vector<2x128xf32>
    %455 = tpu.matmul %367, %454, %cst_170 {dimension_numbers = #tpu.dot_dimension_numbers<[1], [0], [0], [1], [0, 0, 1, 1], [], []>} : vector<2x32xbf16>, vector<32x128xbf16>, vector<2x128xf32> -> vector<2x128xf32>
    %456 = arith.addf %452, %455 : vector<2x128xf32>
    %457 = vector.extract_strided_slice %0 {offsets = [2, 0], sizes = [1, 128], strides = [1, 1]} : vector<4x128xf32> to vector<1x128xf32>
    %458 = vector.broadcast %457 : vector<1x128xf32> to vector<2x128xf32>
    %459 = arith.addf %456, %458 : vector<2x128xf32>
    %460 = arith.negf %459 : vector<2x128xf32>
    %461 = math.exp %460 : vector<2x128xf32>
    %cst_171 = arith.constant 1.000000e+00 : f32
    %462 = vector.broadcast %cst_171 : f32 to vector<2x128xf32>
    %463 = arith.addf %462, %461 : vector<2x128xf32>
    %464 = arith.divf %462, %463 : vector<2x128xf32>
    %465 = vector.extract_strided_slice %464 {offsets = [0, 0], sizes = [2, 32], strides = [1, 1]} : vector<2x128xf32> to vector<2x32xf32>
    %466 = vector.extract_strided_slice %464 {offsets = [0, 32], sizes = [2, 32], strides = [1, 1]} : vector<2x128xf32> to vector<2x32xf32>
    %467 = vector.extract_strided_slice %464 {offsets = [0, 64], sizes = [2, 32], strides = [1, 1]} : vector<2x128xf32> to vector<2x32xf32>
    %cst_172 = arith.constant 2.000000e+00 : f32
    %468 = vector.broadcast %cst_172 : f32 to vector<2x32xf32>
    %469 = arith.mulf %467, %468 : vector<2x32xf32>
    %cst_173 = arith.constant 1.000000e+00 : f32
    %470 = vector.broadcast %cst_173 : f32 to vector<2x32xf32>
    %471 = arith.subf %469, %470 : vector<2x32xf32>
    %472 = vector.extract_strided_slice %464 {offsets = [0, 96], sizes = [2, 32], strides = [1, 1]} : vector<2x128xf32> to vector<2x32xf32>
    %473 = arith.mulf %466, %364 : vector<2x32xf32>
    %474 = arith.mulf %465, %471 : vector<2x32xf32>
    %475 = arith.addf %473, %474 : vector<2x32xf32>
    %476 = math.tanh %475 : vector<2x32xf32>
    %477 = arith.mulf %472, %476 : vector<2x32xf32>
    %478 = arith.truncf %477 : vector<2x32xf32> to vector<2x32xbf16>
    %c3_174 = arith.constant 3 : index
    %c0_175 = arith.constant 0 : index
    %c0_176 = arith.constant 0 : index
    %479 = vector.load %arg1[%c3_174, %c0_175, %c0_176] : memref<4x32x128xbf16, #tpu.memory_space<vmem>>, vector<1x32x128xbf16>
    %480 = vector.shape_cast %479 : vector<1x32x128xbf16> to vector<32x128xbf16>
    %cst_177 = arith.constant dense<0.000000e+00> : vector<2x128xf32>
    %481 = tpu.matmul %367, %480, %cst_177 {dimension_numbers = #tpu.dot_dimension_numbers<[1], [0], [0], [1], [0, 0, 1, 1], [], []>} : vector<2x32xbf16>, vector<32x128xbf16>, vector<2x128xf32> -> vector<2x128xf32>
    %c3_178 = arith.constant 3 : index
    %c0_179 = arith.constant 0 : index
    %c0_180 = arith.constant 0 : index
    %482 = vector.load %arg2[%c3_178, %c0_179, %c0_180] : memref<4x32x128xbf16, #tpu.memory_space<vmem>>, vector<1x32x128xbf16>
    %483 = vector.shape_cast %482 : vector<1x32x128xbf16> to vector<32x128xbf16>
    %cst_181 = arith.constant dense<0.000000e+00> : vector<2x128xf32>
    %484 = tpu.matmul %396, %483, %cst_181 {dimension_numbers = #tpu.dot_dimension_numbers<[1], [0], [0], [1], [0, 0, 1, 1], [], []>} : vector<2x32xbf16>, vector<32x128xbf16>, vector<2x128xf32> -> vector<2x128xf32>
    %485 = arith.addf %481, %484 : vector<2x128xf32>
    %486 = vector.extract_strided_slice %0 {offsets = [3, 0], sizes = [1, 128], strides = [1, 1]} : vector<4x128xf32> to vector<1x128xf32>
    %487 = vector.broadcast %486 : vector<1x128xf32> to vector<2x128xf32>
    %488 = arith.addf %485, %487 : vector<2x128xf32>
    %489 = arith.negf %488 : vector<2x128xf32>
    %490 = math.exp %489 : vector<2x128xf32>
    %cst_182 = arith.constant 1.000000e+00 : f32
    %491 = vector.broadcast %cst_182 : f32 to vector<2x128xf32>
    %492 = arith.addf %491, %490 : vector<2x128xf32>
    %493 = arith.divf %491, %492 : vector<2x128xf32>
    %494 = vector.extract_strided_slice %493 {offsets = [0, 0], sizes = [2, 32], strides = [1, 1]} : vector<2x128xf32> to vector<2x32xf32>
    %495 = vector.extract_strided_slice %493 {offsets = [0, 32], sizes = [2, 32], strides = [1, 1]} : vector<2x128xf32> to vector<2x32xf32>
    %496 = vector.extract_strided_slice %493 {offsets = [0, 64], sizes = [2, 32], strides = [1, 1]} : vector<2x128xf32> to vector<2x32xf32>
    %cst_183 = arith.constant 2.000000e+00 : f32
    %497 = vector.broadcast %cst_183 : f32 to vector<2x32xf32>
    %498 = arith.mulf %496, %497 : vector<2x32xf32>
    %cst_184 = arith.constant 1.000000e+00 : f32
    %499 = vector.broadcast %cst_184 : f32 to vector<2x32xf32>
    %500 = arith.subf %498, %499 : vector<2x32xf32>
    %501 = vector.extract_strided_slice %493 {offsets = [0, 96], sizes = [2, 32], strides = [1, 1]} : vector<2x128xf32> to vector<2x32xf32>
    %502 = arith.mulf %495, %393 : vector<2x32xf32>
    %503 = arith.mulf %494, %500 : vector<2x32xf32>
    %504 = arith.addf %502, %503 : vector<2x32xf32>
    %505 = math.tanh %504 : vector<2x32xf32>
    %506 = arith.mulf %501, %505 : vector<2x32xf32>
    %507 = arith.truncf %506 : vector<2x32xf32> to vector<2x32xbf16>
    %508 = vector.extract_strided_slice %7 {offsets = [12, 0], sizes = [2, 128], strides = [1, 1]} : vector<16x128xf32> to vector<2x128xf32>
    %c0_185 = arith.constant 0 : index
    %c0_186 = arith.constant 0 : index
    %c0_187 = arith.constant 0 : index
    %509 = vector.load %arg2[%c0_185, %c0_186, %c0_187] : memref<4x32x128xbf16, #tpu.memory_space<vmem>>, vector<1x32x128xbf16>
    %510 = vector.shape_cast %509 : vector<1x32x128xbf16> to vector<32x128xbf16>
    %cst_188 = arith.constant dense<0.000000e+00> : vector<2x128xf32>
    %511 = tpu.matmul %420, %510, %cst_188 {dimension_numbers = #tpu.dot_dimension_numbers<[1], [0], [0], [1], [0, 0, 1, 1], [], []>} : vector<2x32xbf16>, vector<32x128xbf16>, vector<2x128xf32> -> vector<2x128xf32>
    %512 = arith.addf %508, %511 : vector<2x128xf32>
    %513 = arith.negf %512 : vector<2x128xf32>
    %514 = math.exp %513 : vector<2x128xf32>
    %cst_189 = arith.constant 1.000000e+00 : f32
    %515 = vector.broadcast %cst_189 : f32 to vector<2x128xf32>
    %516 = arith.addf %515, %514 : vector<2x128xf32>
    %517 = arith.divf %515, %516 : vector<2x128xf32>
    %518 = vector.extract_strided_slice %517 {offsets = [0, 0], sizes = [2, 32], strides = [1, 1]} : vector<2x128xf32> to vector<2x32xf32>
    %519 = vector.extract_strided_slice %517 {offsets = [0, 32], sizes = [2, 32], strides = [1, 1]} : vector<2x128xf32> to vector<2x32xf32>
    %520 = vector.extract_strided_slice %517 {offsets = [0, 64], sizes = [2, 32], strides = [1, 1]} : vector<2x128xf32> to vector<2x32xf32>
    %cst_190 = arith.constant 2.000000e+00 : f32
    %521 = vector.broadcast %cst_190 : f32 to vector<2x32xf32>
    %522 = arith.mulf %520, %521 : vector<2x32xf32>
    %cst_191 = arith.constant 1.000000e+00 : f32
    %523 = vector.broadcast %cst_191 : f32 to vector<2x32xf32>
    %524 = arith.subf %522, %523 : vector<2x32xf32>
    %525 = vector.extract_strided_slice %517 {offsets = [0, 96], sizes = [2, 32], strides = [1, 1]} : vector<2x128xf32> to vector<2x32xf32>
    %526 = arith.mulf %519, %417 : vector<2x32xf32>
    %527 = arith.mulf %518, %524 : vector<2x32xf32>
    %528 = arith.addf %526, %527 : vector<2x32xf32>
    %529 = math.tanh %528 : vector<2x32xf32>
    %530 = arith.mulf %525, %529 : vector<2x32xf32>
    %531 = arith.truncf %530 : vector<2x32xf32> to vector<2x32xbf16>
    %c1_192 = arith.constant 1 : index
    %c0_193 = arith.constant 0 : index
    %c0_194 = arith.constant 0 : index
    %532 = vector.load %arg1[%c1_192, %c0_193, %c0_194] : memref<4x32x128xbf16, #tpu.memory_space<vmem>>, vector<1x32x128xbf16>
    %533 = vector.shape_cast %532 : vector<1x32x128xbf16> to vector<32x128xbf16>
    %cst_195 = arith.constant dense<0.000000e+00> : vector<2x128xf32>
    %534 = tpu.matmul %420, %533, %cst_195 {dimension_numbers = #tpu.dot_dimension_numbers<[1], [0], [0], [1], [0, 0, 1, 1], [], []>} : vector<2x32xbf16>, vector<32x128xbf16>, vector<2x128xf32> -> vector<2x128xf32>
    %c1_196 = arith.constant 1 : index
    %c0_197 = arith.constant 0 : index
    %c0_198 = arith.constant 0 : index
    %535 = vector.load %arg2[%c1_196, %c0_197, %c0_198] : memref<4x32x128xbf16, #tpu.memory_space<vmem>>, vector<1x32x128xbf16>
    %536 = vector.shape_cast %535 : vector<1x32x128xbf16> to vector<32x128xbf16>
    %cst_199 = arith.constant dense<0.000000e+00> : vector<2x128xf32>
    %537 = tpu.matmul %449, %536, %cst_199 {dimension_numbers = #tpu.dot_dimension_numbers<[1], [0], [0], [1], [0, 0, 1, 1], [], []>} : vector<2x32xbf16>, vector<32x128xbf16>, vector<2x128xf32> -> vector<2x128xf32>
    %538 = arith.addf %534, %537 : vector<2x128xf32>
    %539 = vector.extract_strided_slice %0 {offsets = [1, 0], sizes = [1, 128], strides = [1, 1]} : vector<4x128xf32> to vector<1x128xf32>
    %540 = vector.broadcast %539 : vector<1x128xf32> to vector<2x128xf32>
    %541 = arith.addf %538, %540 : vector<2x128xf32>
    %542 = arith.negf %541 : vector<2x128xf32>
    %543 = math.exp %542 : vector<2x128xf32>
    %cst_200 = arith.constant 1.000000e+00 : f32
    %544 = vector.broadcast %cst_200 : f32 to vector<2x128xf32>
    %545 = arith.addf %544, %543 : vector<2x128xf32>
    %546 = arith.divf %544, %545 : vector<2x128xf32>
    %547 = vector.extract_strided_slice %546 {offsets = [0, 0], sizes = [2, 32], strides = [1, 1]} : vector<2x128xf32> to vector<2x32xf32>
    %548 = vector.extract_strided_slice %546 {offsets = [0, 32], sizes = [2, 32], strides = [1, 1]} : vector<2x128xf32> to vector<2x32xf32>
    %549 = vector.extract_strided_slice %546 {offsets = [0, 64], sizes = [2, 32], strides = [1, 1]} : vector<2x128xf32> to vector<2x32xf32>
    %cst_201 = arith.constant 2.000000e+00 : f32
    %550 = vector.broadcast %cst_201 : f32 to vector<2x32xf32>
    %551 = arith.mulf %549, %550 : vector<2x32xf32>
    %cst_202 = arith.constant 1.000000e+00 : f32
    %552 = vector.broadcast %cst_202 : f32 to vector<2x32xf32>
    %553 = arith.subf %551, %552 : vector<2x32xf32>
    %554 = vector.extract_strided_slice %546 {offsets = [0, 96], sizes = [2, 32], strides = [1, 1]} : vector<2x128xf32> to vector<2x32xf32>
    %555 = arith.mulf %548, %446 : vector<2x32xf32>
    %556 = arith.mulf %547, %553 : vector<2x32xf32>
    %557 = arith.addf %555, %556 : vector<2x32xf32>
    %558 = math.tanh %557 : vector<2x32xf32>
    %559 = arith.mulf %554, %558 : vector<2x32xf32>
    %560 = arith.truncf %559 : vector<2x32xf32> to vector<2x32xbf16>
    %c2_203 = arith.constant 2 : index
    %c0_204 = arith.constant 0 : index
    %c0_205 = arith.constant 0 : index
    %561 = vector.load %arg1[%c2_203, %c0_204, %c0_205] : memref<4x32x128xbf16, #tpu.memory_space<vmem>>, vector<1x32x128xbf16>
    %562 = vector.shape_cast %561 : vector<1x32x128xbf16> to vector<32x128xbf16>
    %cst_206 = arith.constant dense<0.000000e+00> : vector<2x128xf32>
    %563 = tpu.matmul %449, %562, %cst_206 {dimension_numbers = #tpu.dot_dimension_numbers<[1], [0], [0], [1], [0, 0, 1, 1], [], []>} : vector<2x32xbf16>, vector<32x128xbf16>, vector<2x128xf32> -> vector<2x128xf32>
    %c2_207 = arith.constant 2 : index
    %c0_208 = arith.constant 0 : index
    %c0_209 = arith.constant 0 : index
    %564 = vector.load %arg2[%c2_207, %c0_208, %c0_209] : memref<4x32x128xbf16, #tpu.memory_space<vmem>>, vector<1x32x128xbf16>
    %565 = vector.shape_cast %564 : vector<1x32x128xbf16> to vector<32x128xbf16>
    %cst_210 = arith.constant dense<0.000000e+00> : vector<2x128xf32>
    %566 = tpu.matmul %478, %565, %cst_210 {dimension_numbers = #tpu.dot_dimension_numbers<[1], [0], [0], [1], [0, 0, 1, 1], [], []>} : vector<2x32xbf16>, vector<32x128xbf16>, vector<2x128xf32> -> vector<2x128xf32>
    %567 = arith.addf %563, %566 : vector<2x128xf32>
    %568 = vector.extract_strided_slice %0 {offsets = [2, 0], sizes = [1, 128], strides = [1, 1]} : vector<4x128xf32> to vector<1x128xf32>
    %569 = vector.broadcast %568 : vector<1x128xf32> to vector<2x128xf32>
    %570 = arith.addf %567, %569 : vector<2x128xf32>
    %571 = arith.negf %570 : vector<2x128xf32>
    %572 = math.exp %571 : vector<2x128xf32>
    %cst_211 = arith.constant 1.000000e+00 : f32
    %573 = vector.broadcast %cst_211 : f32 to vector<2x128xf32>
    %574 = arith.addf %573, %572 : vector<2x128xf32>
    %575 = arith.divf %573, %574 : vector<2x128xf32>
    %576 = vector.extract_strided_slice %575 {offsets = [0, 0], sizes = [2, 32], strides = [1, 1]} : vector<2x128xf32> to vector<2x32xf32>
    %577 = vector.extract_strided_slice %575 {offsets = [0, 32], sizes = [2, 32], strides = [1, 1]} : vector<2x128xf32> to vector<2x32xf32>
    %578 = vector.extract_strided_slice %575 {offsets = [0, 64], sizes = [2, 32], strides = [1, 1]} : vector<2x128xf32> to vector<2x32xf32>
    %cst_212 = arith.constant 2.000000e+00 : f32
    %579 = vector.broadcast %cst_212 : f32 to vector<2x32xf32>
    %580 = arith.mulf %578, %579 : vector<2x32xf32>
    %cst_213 = arith.constant 1.000000e+00 : f32
    %581 = vector.broadcast %cst_213 : f32 to vector<2x32xf32>
    %582 = arith.subf %580, %581 : vector<2x32xf32>
    %583 = vector.extract_strided_slice %575 {offsets = [0, 96], sizes = [2, 32], strides = [1, 1]} : vector<2x128xf32> to vector<2x32xf32>
    %584 = arith.mulf %577, %475 : vector<2x32xf32>
    %585 = arith.mulf %576, %582 : vector<2x32xf32>
    %586 = arith.addf %584, %585 : vector<2x32xf32>
    %587 = math.tanh %586 : vector<2x32xf32>
    %588 = arith.mulf %583, %587 : vector<2x32xf32>
    %589 = arith.truncf %588 : vector<2x32xf32> to vector<2x32xbf16>
    %c3_214 = arith.constant 3 : index
    %c0_215 = arith.constant 0 : index
    %c0_216 = arith.constant 0 : index
    %590 = vector.load %arg1[%c3_214, %c0_215, %c0_216] : memref<4x32x128xbf16, #tpu.memory_space<vmem>>, vector<1x32x128xbf16>
    %591 = vector.shape_cast %590 : vector<1x32x128xbf16> to vector<32x128xbf16>
    %cst_217 = arith.constant dense<0.000000e+00> : vector<2x128xf32>
    %592 = tpu.matmul %478, %591, %cst_217 {dimension_numbers = #tpu.dot_dimension_numbers<[1], [0], [0], [1], [0, 0, 1, 1], [], []>} : vector<2x32xbf16>, vector<32x128xbf16>, vector<2x128xf32> -> vector<2x128xf32>
    %c3_218 = arith.constant 3 : index
    %c0_219 = arith.constant 0 : index
    %c0_220 = arith.constant 0 : index
    %593 = vector.load %arg2[%c3_218, %c0_219, %c0_220] : memref<4x32x128xbf16, #tpu.memory_space<vmem>>, vector<1x32x128xbf16>
    %594 = vector.shape_cast %593 : vector<1x32x128xbf16> to vector<32x128xbf16>
    %cst_221 = arith.constant dense<0.000000e+00> : vector<2x128xf32>
    %595 = tpu.matmul %507, %594, %cst_221 {dimension_numbers = #tpu.dot_dimension_numbers<[1], [0], [0], [1], [0, 0, 1, 1], [], []>} : vector<2x32xbf16>, vector<32x128xbf16>, vector<2x128xf32> -> vector<2x128xf32>
    %596 = arith.addf %592, %595 : vector<2x128xf32>
    %597 = vector.extract_strided_slice %0 {offsets = [3, 0], sizes = [1, 128], strides = [1, 1]} : vector<4x128xf32> to vector<1x128xf32>
    %598 = vector.broadcast %597 : vector<1x128xf32> to vector<2x128xf32>
    %599 = arith.addf %596, %598 : vector<2x128xf32>
    %600 = arith.negf %599 : vector<2x128xf32>
    %601 = math.exp %600 : vector<2x128xf32>
    %cst_222 = arith.constant 1.000000e+00 : f32
    %602 = vector.broadcast %cst_222 : f32 to vector<2x128xf32>
    %603 = arith.addf %602, %601 : vector<2x128xf32>
    %604 = arith.divf %602, %603 : vector<2x128xf32>
    %605 = vector.extract_strided_slice %604 {offsets = [0, 0], sizes = [2, 32], strides = [1, 1]} : vector<2x128xf32> to vector<2x32xf32>
    %606 = vector.extract_strided_slice %604 {offsets = [0, 32], sizes = [2, 32], strides = [1, 1]} : vector<2x128xf32> to vector<2x32xf32>
    %607 = vector.extract_strided_slice %604 {offsets = [0, 64], sizes = [2, 32], strides = [1, 1]} : vector<2x128xf32> to vector<2x32xf32>
    %cst_223 = arith.constant 2.000000e+00 : f32
    %608 = vector.broadcast %cst_223 : f32 to vector<2x32xf32>
    %609 = arith.mulf %607, %608 : vector<2x32xf32>
    %cst_224 = arith.constant 1.000000e+00 : f32
    %610 = vector.broadcast %cst_224 : f32 to vector<2x32xf32>
    %611 = arith.subf %609, %610 : vector<2x32xf32>
    %612 = vector.extract_strided_slice %604 {offsets = [0, 96], sizes = [2, 32], strides = [1, 1]} : vector<2x128xf32> to vector<2x32xf32>
    %613 = arith.mulf %606, %504 : vector<2x32xf32>
    %614 = arith.mulf %605, %611 : vector<2x32xf32>
    %615 = arith.addf %613, %614 : vector<2x32xf32>
    %616 = math.tanh %615 : vector<2x32xf32>
    %617 = arith.mulf %612, %616 : vector<2x32xf32>
    %618 = arith.truncf %617 : vector<2x32xf32> to vector<2x32xbf16>
    %619 = vector.extract_strided_slice %7 {offsets = [14, 0], sizes = [2, 128], strides = [1, 1]} : vector<16x128xf32> to vector<2x128xf32>
    %c0_225 = arith.constant 0 : index
    %c0_226 = arith.constant 0 : index
    %c0_227 = arith.constant 0 : index
    %620 = vector.load %arg2[%c0_225, %c0_226, %c0_227] : memref<4x32x128xbf16, #tpu.memory_space<vmem>>, vector<1x32x128xbf16>
    %621 = vector.shape_cast %620 : vector<1x32x128xbf16> to vector<32x128xbf16>
    %cst_228 = arith.constant dense<0.000000e+00> : vector<2x128xf32>
    %622 = tpu.matmul %531, %621, %cst_228 {dimension_numbers = #tpu.dot_dimension_numbers<[1], [0], [0], [1], [0, 0, 1, 1], [], []>} : vector<2x32xbf16>, vector<32x128xbf16>, vector<2x128xf32> -> vector<2x128xf32>
    %623 = arith.addf %619, %622 : vector<2x128xf32>
    %624 = arith.negf %623 : vector<2x128xf32>
    %625 = math.exp %624 : vector<2x128xf32>
    %cst_229 = arith.constant 1.000000e+00 : f32
    %626 = vector.broadcast %cst_229 : f32 to vector<2x128xf32>
    %627 = arith.addf %626, %625 : vector<2x128xf32>
    %628 = arith.divf %626, %627 : vector<2x128xf32>
    %629 = vector.extract_strided_slice %628 {offsets = [0, 0], sizes = [2, 32], strides = [1, 1]} : vector<2x128xf32> to vector<2x32xf32>
    %630 = vector.extract_strided_slice %628 {offsets = [0, 32], sizes = [2, 32], strides = [1, 1]} : vector<2x128xf32> to vector<2x32xf32>
    %631 = vector.extract_strided_slice %628 {offsets = [0, 64], sizes = [2, 32], strides = [1, 1]} : vector<2x128xf32> to vector<2x32xf32>
    %cst_230 = arith.constant 2.000000e+00 : f32
    %632 = vector.broadcast %cst_230 : f32 to vector<2x32xf32>
    %633 = arith.mulf %631, %632 : vector<2x32xf32>
    %cst_231 = arith.constant 1.000000e+00 : f32
    %634 = vector.broadcast %cst_231 : f32 to vector<2x32xf32>
    %635 = arith.subf %633, %634 : vector<2x32xf32>
    %636 = vector.extract_strided_slice %628 {offsets = [0, 96], sizes = [2, 32], strides = [1, 1]} : vector<2x128xf32> to vector<2x32xf32>
    %637 = arith.mulf %630, %528 : vector<2x32xf32>
    %638 = arith.mulf %629, %635 : vector<2x32xf32>
    %639 = arith.addf %637, %638 : vector<2x32xf32>
    %640 = math.tanh %639 : vector<2x32xf32>
    %641 = arith.mulf %636, %640 : vector<2x32xf32>
    %642 = arith.truncf %641 : vector<2x32xf32> to vector<2x32xbf16>
    %c1_232 = arith.constant 1 : index
    %c0_233 = arith.constant 0 : index
    %c0_234 = arith.constant 0 : index
    %643 = vector.load %arg1[%c1_232, %c0_233, %c0_234] : memref<4x32x128xbf16, #tpu.memory_space<vmem>>, vector<1x32x128xbf16>
    %644 = vector.shape_cast %643 : vector<1x32x128xbf16> to vector<32x128xbf16>
    %cst_235 = arith.constant dense<0.000000e+00> : vector<2x128xf32>
    %645 = tpu.matmul %531, %644, %cst_235 {dimension_numbers = #tpu.dot_dimension_numbers<[1], [0], [0], [1], [0, 0, 1, 1], [], []>} : vector<2x32xbf16>, vector<32x128xbf16>, vector<2x128xf32> -> vector<2x128xf32>
    %c1_236 = arith.constant 1 : index
    %c0_237 = arith.constant 0 : index
    %c0_238 = arith.constant 0 : index
    %646 = vector.load %arg2[%c1_236, %c0_237, %c0_238] : memref<4x32x128xbf16, #tpu.memory_space<vmem>>, vector<1x32x128xbf16>
    %647 = vector.shape_cast %646 : vector<1x32x128xbf16> to vector<32x128xbf16>
    %cst_239 = arith.constant dense<0.000000e+00> : vector<2x128xf32>
    %648 = tpu.matmul %560, %647, %cst_239 {dimension_numbers = #tpu.dot_dimension_numbers<[1], [0], [0], [1], [0, 0, 1, 1], [], []>} : vector<2x32xbf16>, vector<32x128xbf16>, vector<2x128xf32> -> vector<2x128xf32>
    %649 = arith.addf %645, %648 : vector<2x128xf32>
    %650 = vector.extract_strided_slice %0 {offsets = [1, 0], sizes = [1, 128], strides = [1, 1]} : vector<4x128xf32> to vector<1x128xf32>
    %651 = vector.broadcast %650 : vector<1x128xf32> to vector<2x128xf32>
    %652 = arith.addf %649, %651 : vector<2x128xf32>
    %653 = arith.negf %652 : vector<2x128xf32>
    %654 = math.exp %653 : vector<2x128xf32>
    %cst_240 = arith.constant 1.000000e+00 : f32
    %655 = vector.broadcast %cst_240 : f32 to vector<2x128xf32>
    %656 = arith.addf %655, %654 : vector<2x128xf32>
    %657 = arith.divf %655, %656 : vector<2x128xf32>
    %658 = vector.extract_strided_slice %657 {offsets = [0, 0], sizes = [2, 32], strides = [1, 1]} : vector<2x128xf32> to vector<2x32xf32>
    %659 = vector.extract_strided_slice %657 {offsets = [0, 32], sizes = [2, 32], strides = [1, 1]} : vector<2x128xf32> to vector<2x32xf32>
    %660 = vector.extract_strided_slice %657 {offsets = [0, 64], sizes = [2, 32], strides = [1, 1]} : vector<2x128xf32> to vector<2x32xf32>
    %cst_241 = arith.constant 2.000000e+00 : f32
    %661 = vector.broadcast %cst_241 : f32 to vector<2x32xf32>
    %662 = arith.mulf %660, %661 : vector<2x32xf32>
    %cst_242 = arith.constant 1.000000e+00 : f32
    %663 = vector.broadcast %cst_242 : f32 to vector<2x32xf32>
    %664 = arith.subf %662, %663 : vector<2x32xf32>
    %665 = vector.extract_strided_slice %657 {offsets = [0, 96], sizes = [2, 32], strides = [1, 1]} : vector<2x128xf32> to vector<2x32xf32>
    %666 = arith.mulf %659, %557 : vector<2x32xf32>
    %667 = arith.mulf %658, %664 : vector<2x32xf32>
    %668 = arith.addf %666, %667 : vector<2x32xf32>
    %669 = math.tanh %668 : vector<2x32xf32>
    %670 = arith.mulf %665, %669 : vector<2x32xf32>
    %671 = arith.truncf %670 : vector<2x32xf32> to vector<2x32xbf16>
    %c2_243 = arith.constant 2 : index
    %c0_244 = arith.constant 0 : index
    %c0_245 = arith.constant 0 : index
    %672 = vector.load %arg1[%c2_243, %c0_244, %c0_245] : memref<4x32x128xbf16, #tpu.memory_space<vmem>>, vector<1x32x128xbf16>
    %673 = vector.shape_cast %672 : vector<1x32x128xbf16> to vector<32x128xbf16>
    %cst_246 = arith.constant dense<0.000000e+00> : vector<2x128xf32>
    %674 = tpu.matmul %560, %673, %cst_246 {dimension_numbers = #tpu.dot_dimension_numbers<[1], [0], [0], [1], [0, 0, 1, 1], [], []>} : vector<2x32xbf16>, vector<32x128xbf16>, vector<2x128xf32> -> vector<2x128xf32>
    %c2_247 = arith.constant 2 : index
    %c0_248 = arith.constant 0 : index
    %c0_249 = arith.constant 0 : index
    %675 = vector.load %arg2[%c2_247, %c0_248, %c0_249] : memref<4x32x128xbf16, #tpu.memory_space<vmem>>, vector<1x32x128xbf16>
    %676 = vector.shape_cast %675 : vector<1x32x128xbf16> to vector<32x128xbf16>
    %cst_250 = arith.constant dense<0.000000e+00> : vector<2x128xf32>
    %677 = tpu.matmul %589, %676, %cst_250 {dimension_numbers = #tpu.dot_dimension_numbers<[1], [0], [0], [1], [0, 0, 1, 1], [], []>} : vector<2x32xbf16>, vector<32x128xbf16>, vector<2x128xf32> -> vector<2x128xf32>
    %678 = arith.addf %674, %677 : vector<2x128xf32>
    %679 = vector.extract_strided_slice %0 {offsets = [2, 0], sizes = [1, 128], strides = [1, 1]} : vector<4x128xf32> to vector<1x128xf32>
    %680 = vector.broadcast %679 : vector<1x128xf32> to vector<2x128xf32>
    %681 = arith.addf %678, %680 : vector<2x128xf32>
    %682 = arith.negf %681 : vector<2x128xf32>
    %683 = math.exp %682 : vector<2x128xf32>
    %cst_251 = arith.constant 1.000000e+00 : f32
    %684 = vector.broadcast %cst_251 : f32 to vector<2x128xf32>
    %685 = arith.addf %684, %683 : vector<2x128xf32>
    %686 = arith.divf %684, %685 : vector<2x128xf32>
    %687 = vector.extract_strided_slice %686 {offsets = [0, 0], sizes = [2, 32], strides = [1, 1]} : vector<2x128xf32> to vector<2x32xf32>
    %688 = vector.extract_strided_slice %686 {offsets = [0, 32], sizes = [2, 32], strides = [1, 1]} : vector<2x128xf32> to vector<2x32xf32>
    %689 = vector.extract_strided_slice %686 {offsets = [0, 64], sizes = [2, 32], strides = [1, 1]} : vector<2x128xf32> to vector<2x32xf32>
    %cst_252 = arith.constant 2.000000e+00 : f32
    %690 = vector.broadcast %cst_252 : f32 to vector<2x32xf32>
    %691 = arith.mulf %689, %690 : vector<2x32xf32>
    %cst_253 = arith.constant 1.000000e+00 : f32
    %692 = vector.broadcast %cst_253 : f32 to vector<2x32xf32>
    %693 = arith.subf %691, %692 : vector<2x32xf32>
    %694 = vector.extract_strided_slice %686 {offsets = [0, 96], sizes = [2, 32], strides = [1, 1]} : vector<2x128xf32> to vector<2x32xf32>
    %695 = arith.mulf %688, %586 : vector<2x32xf32>
    %696 = arith.mulf %687, %693 : vector<2x32xf32>
    %697 = arith.addf %695, %696 : vector<2x32xf32>
    %698 = math.tanh %697 : vector<2x32xf32>
    %699 = arith.mulf %694, %698 : vector<2x32xf32>
    %700 = arith.truncf %699 : vector<2x32xf32> to vector<2x32xbf16>
    %c3_254 = arith.constant 3 : index
    %c0_255 = arith.constant 0 : index
    %c0_256 = arith.constant 0 : index
    %701 = vector.load %arg1[%c3_254, %c0_255, %c0_256] : memref<4x32x128xbf16, #tpu.memory_space<vmem>>, vector<1x32x128xbf16>
    %702 = vector.shape_cast %701 : vector<1x32x128xbf16> to vector<32x128xbf16>
    %cst_257 = arith.constant dense<0.000000e+00> : vector<2x128xf32>
    %703 = tpu.matmul %589, %702, %cst_257 {dimension_numbers = #tpu.dot_dimension_numbers<[1], [0], [0], [1], [0, 0, 1, 1], [], []>} : vector<2x32xbf16>, vector<32x128xbf16>, vector<2x128xf32> -> vector<2x128xf32>
    %c3_258 = arith.constant 3 : index
    %c0_259 = arith.constant 0 : index
    %c0_260 = arith.constant 0 : index
    %704 = vector.load %arg2[%c3_258, %c0_259, %c0_260] : memref<4x32x128xbf16, #tpu.memory_space<vmem>>, vector<1x32x128xbf16>
    %705 = vector.shape_cast %704 : vector<1x32x128xbf16> to vector<32x128xbf16>
    %cst_261 = arith.constant dense<0.000000e+00> : vector<2x128xf32>
    %706 = tpu.matmul %618, %705, %cst_261 {dimension_numbers = #tpu.dot_dimension_numbers<[1], [0], [0], [1], [0, 0, 1, 1], [], []>} : vector<2x32xbf16>, vector<32x128xbf16>, vector<2x128xf32> -> vector<2x128xf32>
    %707 = arith.addf %703, %706 : vector<2x128xf32>
    %708 = vector.extract_strided_slice %0 {offsets = [3, 0], sizes = [1, 128], strides = [1, 1]} : vector<4x128xf32> to vector<1x128xf32>
    %709 = vector.broadcast %708 : vector<1x128xf32> to vector<2x128xf32>
    %710 = arith.addf %707, %709 : vector<2x128xf32>
    %711 = arith.negf %710 : vector<2x128xf32>
    %712 = math.exp %711 : vector<2x128xf32>
    %cst_262 = arith.constant 1.000000e+00 : f32
    %713 = vector.broadcast %cst_262 : f32 to vector<2x128xf32>
    %714 = arith.addf %713, %712 : vector<2x128xf32>
    %715 = arith.divf %713, %714 : vector<2x128xf32>
    %716 = vector.extract_strided_slice %715 {offsets = [0, 0], sizes = [2, 32], strides = [1, 1]} : vector<2x128xf32> to vector<2x32xf32>
    %717 = vector.extract_strided_slice %715 {offsets = [0, 32], sizes = [2, 32], strides = [1, 1]} : vector<2x128xf32> to vector<2x32xf32>
    %718 = vector.extract_strided_slice %715 {offsets = [0, 64], sizes = [2, 32], strides = [1, 1]} : vector<2x128xf32> to vector<2x32xf32>
    %cst_263 = arith.constant 2.000000e+00 : f32
    %719 = vector.broadcast %cst_263 : f32 to vector<2x32xf32>
    %720 = arith.mulf %718, %719 : vector<2x32xf32>
    %cst_264 = arith.constant 1.000000e+00 : f32
    %721 = vector.broadcast %cst_264 : f32 to vector<2x32xf32>
    %722 = arith.subf %720, %721 : vector<2x32xf32>
    %723 = vector.extract_strided_slice %715 {offsets = [0, 96], sizes = [2, 32], strides = [1, 1]} : vector<2x128xf32> to vector<2x32xf32>
    %724 = arith.mulf %717, %615 : vector<2x32xf32>
    %725 = arith.mulf %716, %722 : vector<2x32xf32>
    %726 = arith.addf %724, %725 : vector<2x32xf32>
    %727 = math.tanh %726 : vector<2x32xf32>
    %728 = arith.mulf %723, %727 : vector<2x32xf32>
    %729 = arith.truncf %728 : vector<2x32xf32> to vector<2x32xbf16>
    %c1_265 = arith.constant 1 : index
    %c0_266 = arith.constant 0 : index
    %c0_267 = arith.constant 0 : index
    %730 = vector.load %arg1[%c1_265, %c0_266, %c0_267] : memref<4x32x128xbf16, #tpu.memory_space<vmem>>, vector<1x32x128xbf16>
    %731 = vector.shape_cast %730 : vector<1x32x128xbf16> to vector<32x128xbf16>
    %cst_268 = arith.constant dense<0.000000e+00> : vector<2x128xf32>
    %732 = tpu.matmul %642, %731, %cst_268 {dimension_numbers = #tpu.dot_dimension_numbers<[1], [0], [0], [1], [0, 0, 1, 1], [], []>} : vector<2x32xbf16>, vector<32x128xbf16>, vector<2x128xf32> -> vector<2x128xf32>
    %c1_269 = arith.constant 1 : index
    %c0_270 = arith.constant 0 : index
    %c0_271 = arith.constant 0 : index
    %733 = vector.load %arg2[%c1_269, %c0_270, %c0_271] : memref<4x32x128xbf16, #tpu.memory_space<vmem>>, vector<1x32x128xbf16>
    %734 = vector.shape_cast %733 : vector<1x32x128xbf16> to vector<32x128xbf16>
    %cst_272 = arith.constant dense<0.000000e+00> : vector<2x128xf32>
    %735 = tpu.matmul %671, %734, %cst_272 {dimension_numbers = #tpu.dot_dimension_numbers<[1], [0], [0], [1], [0, 0, 1, 1], [], []>} : vector<2x32xbf16>, vector<32x128xbf16>, vector<2x128xf32> -> vector<2x128xf32>
    %736 = arith.addf %732, %735 : vector<2x128xf32>
    %737 = vector.extract_strided_slice %0 {offsets = [1, 0], sizes = [1, 128], strides = [1, 1]} : vector<4x128xf32> to vector<1x128xf32>
    %738 = vector.broadcast %737 : vector<1x128xf32> to vector<2x128xf32>
    %739 = arith.addf %736, %738 : vector<2x128xf32>
    %740 = arith.negf %739 : vector<2x128xf32>
    %741 = math.exp %740 : vector<2x128xf32>
    %cst_273 = arith.constant 1.000000e+00 : f32
    %742 = vector.broadcast %cst_273 : f32 to vector<2x128xf32>
    %743 = arith.addf %742, %741 : vector<2x128xf32>
    %744 = arith.divf %742, %743 : vector<2x128xf32>
    %745 = vector.extract_strided_slice %744 {offsets = [0, 0], sizes = [2, 32], strides = [1, 1]} : vector<2x128xf32> to vector<2x32xf32>
    %746 = vector.extract_strided_slice %744 {offsets = [0, 32], sizes = [2, 32], strides = [1, 1]} : vector<2x128xf32> to vector<2x32xf32>
    %747 = vector.extract_strided_slice %744 {offsets = [0, 64], sizes = [2, 32], strides = [1, 1]} : vector<2x128xf32> to vector<2x32xf32>
    %cst_274 = arith.constant 2.000000e+00 : f32
    %748 = vector.broadcast %cst_274 : f32 to vector<2x32xf32>
    %749 = arith.mulf %747, %748 : vector<2x32xf32>
    %cst_275 = arith.constant 1.000000e+00 : f32
    %750 = vector.broadcast %cst_275 : f32 to vector<2x32xf32>
    %751 = arith.subf %749, %750 : vector<2x32xf32>
    %752 = vector.extract_strided_slice %744 {offsets = [0, 96], sizes = [2, 32], strides = [1, 1]} : vector<2x128xf32> to vector<2x32xf32>
    %753 = arith.mulf %746, %668 : vector<2x32xf32>
    %754 = arith.mulf %745, %751 : vector<2x32xf32>
    %755 = arith.addf %753, %754 : vector<2x32xf32>
    %756 = math.tanh %755 : vector<2x32xf32>
    %757 = arith.mulf %752, %756 : vector<2x32xf32>
    %758 = arith.truncf %757 : vector<2x32xf32> to vector<2x32xbf16>
    %c2_276 = arith.constant 2 : index
    %c0_277 = arith.constant 0 : index
    %c0_278 = arith.constant 0 : index
    %759 = vector.load %arg1[%c2_276, %c0_277, %c0_278] : memref<4x32x128xbf16, #tpu.memory_space<vmem>>, vector<1x32x128xbf16>
    %760 = vector.shape_cast %759 : vector<1x32x128xbf16> to vector<32x128xbf16>
    %cst_279 = arith.constant dense<0.000000e+00> : vector<2x128xf32>
    %761 = tpu.matmul %671, %760, %cst_279 {dimension_numbers = #tpu.dot_dimension_numbers<[1], [0], [0], [1], [0, 0, 1, 1], [], []>} : vector<2x32xbf16>, vector<32x128xbf16>, vector<2x128xf32> -> vector<2x128xf32>
    %c2_280 = arith.constant 2 : index
    %c0_281 = arith.constant 0 : index
    %c0_282 = arith.constant 0 : index
    %762 = vector.load %arg2[%c2_280, %c0_281, %c0_282] : memref<4x32x128xbf16, #tpu.memory_space<vmem>>, vector<1x32x128xbf16>
    %763 = vector.shape_cast %762 : vector<1x32x128xbf16> to vector<32x128xbf16>
    %cst_283 = arith.constant dense<0.000000e+00> : vector<2x128xf32>
    %764 = tpu.matmul %700, %763, %cst_283 {dimension_numbers = #tpu.dot_dimension_numbers<[1], [0], [0], [1], [0, 0, 1, 1], [], []>} : vector<2x32xbf16>, vector<32x128xbf16>, vector<2x128xf32> -> vector<2x128xf32>
    %765 = arith.addf %761, %764 : vector<2x128xf32>
    %766 = vector.extract_strided_slice %0 {offsets = [2, 0], sizes = [1, 128], strides = [1, 1]} : vector<4x128xf32> to vector<1x128xf32>
    %767 = vector.broadcast %766 : vector<1x128xf32> to vector<2x128xf32>
    %768 = arith.addf %765, %767 : vector<2x128xf32>
    %769 = arith.negf %768 : vector<2x128xf32>
    %770 = math.exp %769 : vector<2x128xf32>
    %cst_284 = arith.constant 1.000000e+00 : f32
    %771 = vector.broadcast %cst_284 : f32 to vector<2x128xf32>
    %772 = arith.addf %771, %770 : vector<2x128xf32>
    %773 = arith.divf %771, %772 : vector<2x128xf32>
    %774 = vector.extract_strided_slice %773 {offsets = [0, 0], sizes = [2, 32], strides = [1, 1]} : vector<2x128xf32> to vector<2x32xf32>
    %775 = vector.extract_strided_slice %773 {offsets = [0, 32], sizes = [2, 32], strides = [1, 1]} : vector<2x128xf32> to vector<2x32xf32>
    %776 = vector.extract_strided_slice %773 {offsets = [0, 64], sizes = [2, 32], strides = [1, 1]} : vector<2x128xf32> to vector<2x32xf32>
    %cst_285 = arith.constant 2.000000e+00 : f32
    %777 = vector.broadcast %cst_285 : f32 to vector<2x32xf32>
    %778 = arith.mulf %776, %777 : vector<2x32xf32>
    %cst_286 = arith.constant 1.000000e+00 : f32
    %779 = vector.broadcast %cst_286 : f32 to vector<2x32xf32>
    %780 = arith.subf %778, %779 : vector<2x32xf32>
    %781 = vector.extract_strided_slice %773 {offsets = [0, 96], sizes = [2, 32], strides = [1, 1]} : vector<2x128xf32> to vector<2x32xf32>
    %782 = arith.mulf %775, %697 : vector<2x32xf32>
    %783 = arith.mulf %774, %780 : vector<2x32xf32>
    %784 = arith.addf %782, %783 : vector<2x32xf32>
    %785 = math.tanh %784 : vector<2x32xf32>
    %786 = arith.mulf %781, %785 : vector<2x32xf32>
    %787 = arith.truncf %786 : vector<2x32xf32> to vector<2x32xbf16>
    %c3_287 = arith.constant 3 : index
    %c0_288 = arith.constant 0 : index
    %c0_289 = arith.constant 0 : index
    %788 = vector.load %arg1[%c3_287, %c0_288, %c0_289] : memref<4x32x128xbf16, #tpu.memory_space<vmem>>, vector<1x32x128xbf16>
    %789 = vector.shape_cast %788 : vector<1x32x128xbf16> to vector<32x128xbf16>
    %cst_290 = arith.constant dense<0.000000e+00> : vector<2x128xf32>
    %790 = tpu.matmul %700, %789, %cst_290 {dimension_numbers = #tpu.dot_dimension_numbers<[1], [0], [0], [1], [0, 0, 1, 1], [], []>} : vector<2x32xbf16>, vector<32x128xbf16>, vector<2x128xf32> -> vector<2x128xf32>
    %c3_291 = arith.constant 3 : index
    %c0_292 = arith.constant 0 : index
    %c0_293 = arith.constant 0 : index
    %791 = vector.load %arg2[%c3_291, %c0_292, %c0_293] : memref<4x32x128xbf16, #tpu.memory_space<vmem>>, vector<1x32x128xbf16>
    %792 = vector.shape_cast %791 : vector<1x32x128xbf16> to vector<32x128xbf16>
    %cst_294 = arith.constant dense<0.000000e+00> : vector<2x128xf32>
    %793 = tpu.matmul %729, %792, %cst_294 {dimension_numbers = #tpu.dot_dimension_numbers<[1], [0], [0], [1], [0, 0, 1, 1], [], []>} : vector<2x32xbf16>, vector<32x128xbf16>, vector<2x128xf32> -> vector<2x128xf32>
    %794 = arith.addf %790, %793 : vector<2x128xf32>
    %795 = vector.extract_strided_slice %0 {offsets = [3, 0], sizes = [1, 128], strides = [1, 1]} : vector<4x128xf32> to vector<1x128xf32>
    %796 = vector.broadcast %795 : vector<1x128xf32> to vector<2x128xf32>
    %797 = arith.addf %794, %796 : vector<2x128xf32>
    %798 = arith.negf %797 : vector<2x128xf32>
    %799 = math.exp %798 : vector<2x128xf32>
    %cst_295 = arith.constant 1.000000e+00 : f32
    %800 = vector.broadcast %cst_295 : f32 to vector<2x128xf32>
    %801 = arith.addf %800, %799 : vector<2x128xf32>
    %802 = arith.divf %800, %801 : vector<2x128xf32>
    %803 = vector.extract_strided_slice %802 {offsets = [0, 0], sizes = [2, 32], strides = [1, 1]} : vector<2x128xf32> to vector<2x32xf32>
    %804 = vector.extract_strided_slice %802 {offsets = [0, 32], sizes = [2, 32], strides = [1, 1]} : vector<2x128xf32> to vector<2x32xf32>
    %805 = vector.extract_strided_slice %802 {offsets = [0, 64], sizes = [2, 32], strides = [1, 1]} : vector<2x128xf32> to vector<2x32xf32>
    %cst_296 = arith.constant 2.000000e+00 : f32
    %806 = vector.broadcast %cst_296 : f32 to vector<2x32xf32>
    %807 = arith.mulf %805, %806 : vector<2x32xf32>
    %cst_297 = arith.constant 1.000000e+00 : f32
    %808 = vector.broadcast %cst_297 : f32 to vector<2x32xf32>
    %809 = arith.subf %807, %808 : vector<2x32xf32>
    %810 = vector.extract_strided_slice %802 {offsets = [0, 96], sizes = [2, 32], strides = [1, 1]} : vector<2x128xf32> to vector<2x32xf32>
    %811 = arith.mulf %804, %726 : vector<2x32xf32>
    %812 = arith.mulf %803, %809 : vector<2x32xf32>
    %813 = arith.addf %811, %812 : vector<2x32xf32>
    %814 = math.tanh %813 : vector<2x32xf32>
    %815 = arith.mulf %810, %814 : vector<2x32xf32>
    %816 = arith.truncf %815 : vector<2x32xf32> to vector<2x32xbf16>
    %c2_298 = arith.constant 2 : index
    %c0_299 = arith.constant 0 : index
    %c0_300 = arith.constant 0 : index
    %817 = vector.load %arg1[%c2_298, %c0_299, %c0_300] : memref<4x32x128xbf16, #tpu.memory_space<vmem>>, vector<1x32x128xbf16>
    %818 = vector.shape_cast %817 : vector<1x32x128xbf16> to vector<32x128xbf16>
    %cst_301 = arith.constant dense<0.000000e+00> : vector<2x128xf32>
    %819 = tpu.matmul %758, %818, %cst_301 {dimension_numbers = #tpu.dot_dimension_numbers<[1], [0], [0], [1], [0, 0, 1, 1], [], []>} : vector<2x32xbf16>, vector<32x128xbf16>, vector<2x128xf32> -> vector<2x128xf32>
    %c2_302 = arith.constant 2 : index
    %c0_303 = arith.constant 0 : index
    %c0_304 = arith.constant 0 : index
    %820 = vector.load %arg2[%c2_302, %c0_303, %c0_304] : memref<4x32x128xbf16, #tpu.memory_space<vmem>>, vector<1x32x128xbf16>
    %821 = vector.shape_cast %820 : vector<1x32x128xbf16> to vector<32x128xbf16>
    %cst_305 = arith.constant dense<0.000000e+00> : vector<2x128xf32>
    %822 = tpu.matmul %787, %821, %cst_305 {dimension_numbers = #tpu.dot_dimension_numbers<[1], [0], [0], [1], [0, 0, 1, 1], [], []>} : vector<2x32xbf16>, vector<32x128xbf16>, vector<2x128xf32> -> vector<2x128xf32>
    %823 = arith.addf %819, %822 : vector<2x128xf32>
    %824 = vector.extract_strided_slice %0 {offsets = [2, 0], sizes = [1, 128], strides = [1, 1]} : vector<4x128xf32> to vector<1x128xf32>
    %825 = vector.broadcast %824 : vector<1x128xf32> to vector<2x128xf32>
    %826 = arith.addf %823, %825 : vector<2x128xf32>
    %827 = arith.negf %826 : vector<2x128xf32>
    %828 = math.exp %827 : vector<2x128xf32>
    %cst_306 = arith.constant 1.000000e+00 : f32
    %829 = vector.broadcast %cst_306 : f32 to vector<2x128xf32>
    %830 = arith.addf %829, %828 : vector<2x128xf32>
    %831 = arith.divf %829, %830 : vector<2x128xf32>
    %832 = vector.extract_strided_slice %831 {offsets = [0, 0], sizes = [2, 32], strides = [1, 1]} : vector<2x128xf32> to vector<2x32xf32>
    %833 = vector.extract_strided_slice %831 {offsets = [0, 32], sizes = [2, 32], strides = [1, 1]} : vector<2x128xf32> to vector<2x32xf32>
    %834 = vector.extract_strided_slice %831 {offsets = [0, 64], sizes = [2, 32], strides = [1, 1]} : vector<2x128xf32> to vector<2x32xf32>
    %cst_307 = arith.constant 2.000000e+00 : f32
    %835 = vector.broadcast %cst_307 : f32 to vector<2x32xf32>
    %836 = arith.mulf %834, %835 : vector<2x32xf32>
    %cst_308 = arith.constant 1.000000e+00 : f32
    %837 = vector.broadcast %cst_308 : f32 to vector<2x32xf32>
    %838 = arith.subf %836, %837 : vector<2x32xf32>
    %839 = vector.extract_strided_slice %831 {offsets = [0, 96], sizes = [2, 32], strides = [1, 1]} : vector<2x128xf32> to vector<2x32xf32>
    %840 = arith.mulf %833, %784 : vector<2x32xf32>
    %841 = arith.mulf %832, %838 : vector<2x32xf32>
    %842 = arith.addf %840, %841 : vector<2x32xf32>
    %843 = math.tanh %842 : vector<2x32xf32>
    %844 = arith.mulf %839, %843 : vector<2x32xf32>
    %845 = arith.truncf %844 : vector<2x32xf32> to vector<2x32xbf16>
    %c3_309 = arith.constant 3 : index
    %c0_310 = arith.constant 0 : index
    %c0_311 = arith.constant 0 : index
    %846 = vector.load %arg1[%c3_309, %c0_310, %c0_311] : memref<4x32x128xbf16, #tpu.memory_space<vmem>>, vector<1x32x128xbf16>
    %847 = vector.shape_cast %846 : vector<1x32x128xbf16> to vector<32x128xbf16>
    %cst_312 = arith.constant dense<0.000000e+00> : vector<2x128xf32>
    %848 = tpu.matmul %787, %847, %cst_312 {dimension_numbers = #tpu.dot_dimension_numbers<[1], [0], [0], [1], [0, 0, 1, 1], [], []>} : vector<2x32xbf16>, vector<32x128xbf16>, vector<2x128xf32> -> vector<2x128xf32>
    %c3_313 = arith.constant 3 : index
    %c0_314 = arith.constant 0 : index
    %c0_315 = arith.constant 0 : index
    %849 = vector.load %arg2[%c3_313, %c0_314, %c0_315] : memref<4x32x128xbf16, #tpu.memory_space<vmem>>, vector<1x32x128xbf16>
    %850 = vector.shape_cast %849 : vector<1x32x128xbf16> to vector<32x128xbf16>
    %cst_316 = arith.constant dense<0.000000e+00> : vector<2x128xf32>
    %851 = tpu.matmul %816, %850, %cst_316 {dimension_numbers = #tpu.dot_dimension_numbers<[1], [0], [0], [1], [0, 0, 1, 1], [], []>} : vector<2x32xbf16>, vector<32x128xbf16>, vector<2x128xf32> -> vector<2x128xf32>
    %852 = arith.addf %848, %851 : vector<2x128xf32>
    %853 = vector.extract_strided_slice %0 {offsets = [3, 0], sizes = [1, 128], strides = [1, 1]} : vector<4x128xf32> to vector<1x128xf32>
    %854 = vector.broadcast %853 : vector<1x128xf32> to vector<2x128xf32>
    %855 = arith.addf %852, %854 : vector<2x128xf32>
    %856 = arith.negf %855 : vector<2x128xf32>
    %857 = math.exp %856 : vector<2x128xf32>
    %cst_317 = arith.constant 1.000000e+00 : f32
    %858 = vector.broadcast %cst_317 : f32 to vector<2x128xf32>
    %859 = arith.addf %858, %857 : vector<2x128xf32>
    %860 = arith.divf %858, %859 : vector<2x128xf32>
    %861 = vector.extract_strided_slice %860 {offsets = [0, 0], sizes = [2, 32], strides = [1, 1]} : vector<2x128xf32> to vector<2x32xf32>
    %862 = vector.extract_strided_slice %860 {offsets = [0, 32], sizes = [2, 32], strides = [1, 1]} : vector<2x128xf32> to vector<2x32xf32>
    %863 = vector.extract_strided_slice %860 {offsets = [0, 64], sizes = [2, 32], strides = [1, 1]} : vector<2x128xf32> to vector<2x32xf32>
    %cst_318 = arith.constant 2.000000e+00 : f32
    %864 = vector.broadcast %cst_318 : f32 to vector<2x32xf32>
    %865 = arith.mulf %863, %864 : vector<2x32xf32>
    %cst_319 = arith.constant 1.000000e+00 : f32
    %866 = vector.broadcast %cst_319 : f32 to vector<2x32xf32>
    %867 = arith.subf %865, %866 : vector<2x32xf32>
    %868 = vector.extract_strided_slice %860 {offsets = [0, 96], sizes = [2, 32], strides = [1, 1]} : vector<2x128xf32> to vector<2x32xf32>
    %869 = arith.mulf %862, %813 : vector<2x32xf32>
    %870 = arith.mulf %861, %867 : vector<2x32xf32>
    %871 = arith.addf %869, %870 : vector<2x32xf32>
    %872 = math.tanh %871 : vector<2x32xf32>
    %873 = arith.mulf %868, %872 : vector<2x32xf32>
    %874 = arith.truncf %873 : vector<2x32xf32> to vector<2x32xbf16>
    %c3_320 = arith.constant 3 : index
    %c0_321 = arith.constant 0 : index
    %c0_322 = arith.constant 0 : index
    %875 = vector.load %arg1[%c3_320, %c0_321, %c0_322] : memref<4x32x128xbf16, #tpu.memory_space<vmem>>, vector<1x32x128xbf16>
    %876 = vector.shape_cast %875 : vector<1x32x128xbf16> to vector<32x128xbf16>
    %cst_323 = arith.constant dense<0.000000e+00> : vector<2x128xf32>
    %877 = tpu.matmul %845, %876, %cst_323 {dimension_numbers = #tpu.dot_dimension_numbers<[1], [0], [0], [1], [0, 0, 1, 1], [], []>} : vector<2x32xbf16>, vector<32x128xbf16>, vector<2x128xf32> -> vector<2x128xf32>
    %c3_324 = arith.constant 3 : index
    %c0_325 = arith.constant 0 : index
    %c0_326 = arith.constant 0 : index
    %878 = vector.load %arg2[%c3_324, %c0_325, %c0_326] : memref<4x32x128xbf16, #tpu.memory_space<vmem>>, vector<1x32x128xbf16>
    %879 = vector.shape_cast %878 : vector<1x32x128xbf16> to vector<32x128xbf16>
    %cst_327 = arith.constant dense<0.000000e+00> : vector<2x128xf32>
    %880 = tpu.matmul %874, %879, %cst_327 {dimension_numbers = #tpu.dot_dimension_numbers<[1], [0], [0], [1], [0, 0, 1, 1], [], []>} : vector<2x32xbf16>, vector<32x128xbf16>, vector<2x128xf32> -> vector<2x128xf32>
    %881 = arith.addf %877, %880 : vector<2x128xf32>
    %882 = vector.extract_strided_slice %0 {offsets = [3, 0], sizes = [1, 128], strides = [1, 1]} : vector<4x128xf32> to vector<1x128xf32>
    %883 = vector.broadcast %882 : vector<1x128xf32> to vector<2x128xf32>
    %884 = arith.addf %881, %883 : vector<2x128xf32>
    %885 = arith.negf %884 : vector<2x128xf32>
    %886 = math.exp %885 : vector<2x128xf32>
    %cst_328 = arith.constant 1.000000e+00 : f32
    %887 = vector.broadcast %cst_328 : f32 to vector<2x128xf32>
    %888 = arith.addf %887, %886 : vector<2x128xf32>
    %889 = arith.divf %887, %888 : vector<2x128xf32>
    %890 = vector.extract_strided_slice %889 {offsets = [0, 0], sizes = [2, 32], strides = [1, 1]} : vector<2x128xf32> to vector<2x32xf32>
    %891 = vector.extract_strided_slice %889 {offsets = [0, 32], sizes = [2, 32], strides = [1, 1]} : vector<2x128xf32> to vector<2x32xf32>
    %892 = vector.extract_strided_slice %889 {offsets = [0, 64], sizes = [2, 32], strides = [1, 1]} : vector<2x128xf32> to vector<2x32xf32>
    %cst_329 = arith.constant 2.000000e+00 : f32
    %893 = vector.broadcast %cst_329 : f32 to vector<2x32xf32>
    %894 = arith.mulf %892, %893 : vector<2x32xf32>
    %cst_330 = arith.constant 1.000000e+00 : f32
    %895 = vector.broadcast %cst_330 : f32 to vector<2x32xf32>
    %896 = arith.subf %894, %895 : vector<2x32xf32>
    %897 = vector.extract_strided_slice %889 {offsets = [0, 96], sizes = [2, 32], strides = [1, 1]} : vector<2x128xf32> to vector<2x32xf32>
    %898 = arith.mulf %891, %871 : vector<2x32xf32>
    %899 = arith.mulf %890, %896 : vector<2x32xf32>
    %900 = arith.addf %898, %899 : vector<2x32xf32>
    %901 = math.tanh %900 : vector<2x32xf32>
    %902 = arith.mulf %897, %901 : vector<2x32xf32>
    %c0_331 = arith.constant 0 : index
    %c0_332 = arith.constant 0 : index
    %903 = vector.load %arg4[%c0_331, %c0_332] : memref<2x32xf32, #tpu.memory_space<vmem>>, vector<2x32xf32>
    tpu.vector_store %arg4[%c0_331, %c0_332], %902 {strides = array<i32>} : memref<2x32xf32, #tpu.memory_space<vmem>>, vector<2x32xf32>,
    return
  }
}

</mosaic_0001>

<llo_original>
// kernel: encoder_pallas.1
$region0: #{encoder_pallas.1}
  #allocation0 [shape = 'u32[]', space=smem, size = 0x4, offset = 0x4, fixed_abs, tag = 'smem constant byte address 0x4 - core index']
  #allocation1 [shape = 'u32[144,128]{1,0:T(1,128)}', space=vmem, size = 0x12000, scoped, tag = 'internal scratch']
  %s0 = inlined_call_operand.vmem [shape: bf16[16,32], index: 0, kind: input, shape index: {}]
  %s1 = inlined_call_operand.hbm [shape: bf16[4,32,128], index: 1, kind: input, shape index: {}]
  %s2 = inlined_call_operand.hbm [shape: bf16[4,32,128], index: 2, kind: input, shape index: {}]
  %s3 = inlined_call_operand.vmem [shape: f32[4,128], index: 3, kind: input, shape index: {}]
  %s4 = inlined_call_operand.hbm [shape: f32[2,32], index: 4, kind: output, shape index: {}]
  %s5 = sld [smem:[#allocation0]]
  $region34: #{encoder_pallas.1} parent=0
    _
  %s7 = ssub.s32 1, %s5
  %s8 = scalar_select 0, %s7, %s5
  $region1: #{encoder_pallas.1} parent=0
    #allocation2 [shape = 'u8[32768]{0}', space=vmem, size = 0x8000, scoped, tag = 'input window, operand 1, single buffered']
    #allocation3 [shape = 's32[1]{0}', space=sflag, size = 0x4, scoped, tag = 'scoped memory for encoder_pallas.1']
    #allocation4 [shape = 's32[1]{0}', space=sflag, size = 0x4, scoped, tag = 'scoped memory for encoder_pallas.1']
    #allocation5 [shape = 'u8[32768]{0}', space=vmem, size = 0x8000, scoped, tag = 'input window, operand 2, single buffered']
    #allocation6 [shape = 's32[1]{0}', space=sflag, size = 0x4, scoped, tag = 'scoped memory for encoder_pallas.1']
    #allocation7 [shape = 'u8[1024]{0}', space=vmem, size = 0x400, scoped, tag = 'output window, operand 0, single buffered']
    %9 = vsyncpa [#allocation3], 0
    %10 = vsyncpa [#allocation6], 0
    %11 = vsyncpa [#allocation4], 0
    // Predicated region
    $region2: #{encoder_pallas.1} parent=1 // pred_check
      _
    $region3: #{encoder_pallas.1} parent=1 // pred_check_branch
      %13 = sbr.rel (0) target = $region5
    $region4: #{encoder_pallas.1} parent=1 // pred_region
      _
    $region5: #{encoder_pallas.1} parent=1 // pred_fallthru
      _
    // Predicated region
    $region6: #{encoder_pallas.1} parent=1 // pred_check
      _
    $region7: #{encoder_pallas.1} parent=1 // pred_check_branch
      %15 = sbr.rel (0) target = $region9
    $region8: #{encoder_pallas.1} parent=1 // pred_region
      %s17 = ssub.s32 1024, 1024
      %18 = vsyncadd [#allocation3], %s17
      %s19 = sshll.u32 [#allocation2], 4
      %s20 = int_to_ptr.vmem [resolvable:$true] %s19
      %25 = dma.hbm_to_vmem [thread:$0]  %s1, 1024, %s20, [#allocation3], 64, 64, 4
    $region9: #{encoder_pallas.1} parent=1 // pred_fallthru
      _
    // Predicated region
    $region10: #{encoder_pallas.1} parent=1 // pred_check
      _
    $region11: #{encoder_pallas.1} parent=1 // pred_check_branch
      %27 = sbr.rel (0) target = $region13
    $region12: #{encoder_pallas.1} parent=1 // pred_region
      %s29 = ssub.s32 1024, 1024
      %30 = vsyncadd [#allocation6], %s29
      %s31 = sshll.u32 [#allocation5], 4
      %s32 = int_to_ptr.vmem [resolvable:$true] %s31
      %37 = dma.hbm_to_vmem [thread:$0]  %s2, 1024, %s32, [#allocation6], 64, 64, 4
    $region13: #{encoder_pallas.1} parent=1 // pred_fallthru
      _
    // Predicated region
    $region14: #{encoder_pallas.1} parent=1 // pred_check
      _
    $region15: #{encoder_pallas.1} parent=1 // pred_check_branch
      %39 = sbr.rel (0) target = $region17
    $region16: #{encoder_pallas.1} parent=1 // pred_region
      _
    $region17: #{encoder_pallas.1} parent=1 // pred_fallthru
      _
    // Predicated region
    $region18: #{encoder_pallas.1} parent=1 // pred_check
      _
    $region19: #{encoder_pallas.1} parent=1 // pred_check_branch
      %41 = sbr.rel (0) target = $region21
    $region20: #{encoder_pallas.1} parent=1 // pred_region
      %42 = dma.done [#allocation3], 1024
    $region21: #{encoder_pallas.1} parent=1 // pred_fallthru
      _
    // Predicated region
    $region22: #{encoder_pallas.1} parent=1 // pred_check
      _
    $region23: #{encoder_pallas.1} parent=1 // pred_check_branch
      %44 = sbr.rel (0) target = $region25
    $region24: #{encoder_pallas.1} parent=1 // pred_region
      %45 = dma.done [#allocation6], 1024
    $region25: #{encoder_pallas.1} parent=1 // pred_fallthru
      _
    %v47 = vld [vmem:[%s3] sm:$0xf]
    %v48 = vld [vmem:[%s0] sm:$0xf]
    %v49 = vld [vmem:[%s0 + $0x4] sm:$0xf]
    %v50 = vld [vmem:[#allocation2] sm:$0xf]
    %v51 = vld [vmem:[#allocation2 + $0x4] sm:$0xf]
    %v52 = vld [vmem:[#allocation2 + $0x8] sm:$0xf]
    %v53 = vld [vmem:[#allocation2 + $0xc] sm:$0xf]
    %v54 = vlaneseq
    %v55 = vshrl.u32 %v54, 7
    %v56 = vsub.s32 0, %v55
    %v57 = vrot.slane %v47, %v56
    %v60 = vunpack.c.l.b16 %v48
    %v61 = vunpack.c.l.b16 %v49
    %v62 = vpack.c.b16 %v61, %v60
    %v67 = vunpack.c.l.b16 %v50
    %v68 = vunpack.c.l.b16 %v51
    %v69 = vunpack.c.l.b16 %v52
    %v70 = vunpack.c.l.b16 %v53
    %v71 = vpack.c.b16 %v68, %v67
    %v72 = vpack.c.b16 %v70, %v69
    %vm75 = vcmask 261120
    %v77 = vsel %vm75, %v62, 0
    %79 = vmatprep.subr.bf16.mxu0 0
    %80 = vmatpush1.bf16.msra.mxu0 0
    %81 = vmatprep.subr.bf16.mxu0 0
    %82 = vmatpush1.bf16.msra.mxu0 0
    %83 = vmatprep.subr.bf16.mxu0 0
    %84 = vmatpush1.bf16.msra.mxu0 0
    %85 = vmatprep.subr.bf16.mxu0 0
    %86 = vmatpush1.bf16.msra.mxu0 0
    %87 = vmatprep.subr.bf16.mxu0 0
    %88 = vmatpush1.bf16.msra.mxu0 0
    %89 = vmatprep.subr.bf16.mxu0 0
    %90 = vmatpush1.bf16.msra.mxu0 0
    %91 = vmatprep.subr.bf16.mxu0 0
    %92 = vmatpush1.bf16.msra.mxu0 %v72
    %93 = vmatprep.subr.bf16.mxu0 0
    %94 = vmatpush1.bf16.msra.mxu0 %v71
    %95 = vmatprep.subr.bf16.mxu0 0
    %96 = vmatpush2.bf16.msra.mxu0 0
    %97 = vmatprep.subr.bf16.mxu0 0
    %98 = vmatpush2.bf16.msra.mxu0 0
    %99 = vmatprep.subr.bf16.mxu0 0
    %100 = vmatpush2.bf16.msra.mxu0 0
    %101 = vmatprep.subr.bf16.mxu0 0
    %102 = vmatpush2.bf16.msra.mxu0 0
    %103 = vmatprep.subr.bf16.mxu0 0
    %104 = vmatpush2.bf16.msra.mxu0 0
    %105 = vmatprep.subr.bf16.mxu0 0
    %106 = vmatpush2.bf16.msra.mxu0 0
    %107 = vmatprep.subr.bf16.mxu0 0
    %108 = vmatpush2.bf16.msra.mxu0 0
    %109 = vmatprep.subr.bf16.mxu0 0
    %110 = vmatpush2.bf16.msra.mxu0 0
    %111 = vmatprep.mubr.bf16.mxu0 0
    %112 = vmatmul.mubr.bf16.gmra.mxu0 %v77
    %v113 = vpop.f32.mrf.mxu0
    %v114 = vadd.f32 %v57, %v113
    %v115 = vpop.f32.mrf.mxu0
    %v116 = vpop.f32.mrf.mxu0
    %v117 = vadd.f32 %v57, %v116
    %v118 = vpop.f32.mrf.mxu0
    %119 = vdwg.mxu0
    %v120 = vld [vmem:[#allocation5] sm:$0xf]
    %v121 = vld [vmem:[#allocation5 + $0x4] sm:$0xf]
    %v122 = vld [vmem:[#allocation5 + $0x8] sm:$0xf]
    %v123 = vld [vmem:[#allocation5 + $0xc] sm:$0xf]
    %v128 = vunpack.c.l.b16 %v120
    %v129 = vunpack.c.l.b16 %v121
    %v130 = vunpack.c.l.b16 %v122
    %v131 = vunpack.c.l.b16 %v123
    %v132 = vpack.c.b16 %v129, %v128
    %v133 = vpack.c.b16 %v131, %v130
    %v137 = vsel %vm75, 0, 0
    %139 = vmatprep.subr.bf16.mxu0 0
    %140 = vmatpush1.bf16.msra.mxu0 0
    %141 = vmatprep.subr.bf16.mxu0 0
    %142 = vmatpush1.bf16.msra.mxu0 0
    %143 = vmatprep.subr.bf16.mxu0 0
    %144 = vmatpush1.bf16.msra.mxu0 0
    %145 = vmatprep.subr.bf16.mxu0 0
    %146 = vmatpush1.bf16.msra.mxu0 0
    %147 = vmatprep.subr.bf16.mxu0 0
    %148 = vmatpush1.bf16.msra.mxu0 0
    %149 = vmatprep.subr.bf16.mxu0 0
    %150 = vmatpush1.bf16.msra.mxu0 0
    %151 = vmatprep.subr.bf16.mxu0 0
    %152 = vmatpush1.bf16.msra.mxu0 %v133
    %153 = vmatprep.subr.bf16.mxu0 0
    %154 = vmatpush1.bf16.msra.mxu0 %v132
    %155 = vmatprep.subr.bf16.mxu0 0
    %156 = vmatpush2.bf16.msra.mxu0 0
    %157 = vmatprep.subr.bf16.mxu0 0
    %158 = vmatpush2.bf16.msra.mxu0 0
    %159 = vmatprep.subr.bf16.mxu0 0
    %160 = vmatpush2.bf16.msra.mxu0 0
    %161 = vmatprep.subr.bf16.mxu0 0
    %162 = vmatpush2.bf16.msra.mxu0 0
    %163 = vmatprep.subr.bf16.mxu0 0
    %164 = vmatpush2.bf16.msra.mxu0 0
    %165 = vmatprep.subr.bf16.mxu0 0
    %166 = vmatpush2.bf16.msra.mxu0 0
    %167 = vmatprep.subr.bf16.mxu0 0
    %168 = vmatpush2.bf16.msra.mxu0 0
    %169 = vmatprep.subr.bf16.mxu0 0
    %170 = vmatpush2.bf16.msra.mxu0 0
    %171 = vmatprep.mubr.bf16.mxu0 0
    %172 = vmatmul.mubr.bf16.gmra.mxu0 %v137
    %v173 = vpop.f32.mrf.mxu0
    %v174 = vadd.f32 0.0, %v173
    %v175 = vpop.f32.mrf.mxu0
    %v176 = vpop.f32.mrf.mxu0
    %v177 = vpop.f32.mrf.mxu0
    %178 = vdwg.mxu0
    %v179 = vadd.f32 %v114, %v174
    %v180 = vxor.u32 %v179, 2147483648
    %v181 = vmul.f32 %v180, 1.442695
    %v182 = vpow.pop %v181
    %v183 = vadd.f32 %v182, 1.0
    %v184 = vrcp.pop %v183
    %v185 = vmul.f32 1.0, %v184
    %v186 = vmul.f32 %v185, 2.0
    %v187 = vsub.f32 %v186, 1.0
    %v188 = vmul.f32 %v185, 0.0
    %190 = vrot.lane.b32.xlu0 %v187, 64
    %v191 = vpop.permute.xlu0 %190
    %v193 = vmul.f32 %v185, %v191
    %195 = vrot.lane.b32.xlu0 %v193, 32
    %v196 = vpop.permute.xlu0 %195
    %v198 = vadd.f32 %v188, %v196
    %v199 = vtanh.pop %v198
    %201 = vrot.lane.b32.xlu0 %v199, 64
    %v202 = vpop.permute.xlu0 %201
    %v204 = vmul.f32 %v185, %v202
    %v205 = vpack.c.bf16 %v204, %v204
    %207 = vrot.lane.b32.xlu0 %v205, 32
    %v208 = vpop.permute.xlu0 %207
    %v210 = vsel %vm75, %v208, 0
    %212 = vmatprep.subr.bf16.mxu0 0
    %213 = vmatpush1.bf16.msra.mxu0 0
    %214 = vmatprep.subr.bf16.mxu0 0
    %215 = vmatpush1.bf16.msra.mxu0 0
    %216 = vmatprep.subr.bf16.mxu0 0
    %217 = vmatpush1.bf16.msra.mxu0 0
    %218 = vmatprep.subr.bf16.mxu0 0
    %219 = vmatpush1.bf16.msra.mxu0 0
    %220 = vmatprep.subr.bf16.mxu0 0
    %221 = vmatpush1.bf16.msra.mxu0 0
    %222 = vmatprep.subr.bf16.mxu0 0
    %223 = vmatpush1.bf16.msra.mxu0 0
    %224 = vmatprep.subr.bf16.mxu0 0
    %225 = vmatpush1.bf16.msra.mxu0 %v133
    %226 = vmatprep.subr.bf16.mxu0 0
    %227 = vmatpush1.bf16.msra.mxu0 %v132
    %228 = vmatprep.subr.bf16.mxu0 0
    %229 = vmatpush2.bf16.msra.mxu0 0
    %230 = vmatprep.subr.bf16.mxu0 0
    %231 = vmatpush2.bf16.msra.mxu0 0
    %232 = vmatprep.subr.bf16.mxu0 0
    %233 = vmatpush2.bf16.msra.mxu0 0
    %234 = vmatprep.subr.bf16.mxu0 0
    %235 = vmatpush2.bf16.msra.mxu0 0
    %236 = vmatprep.subr.bf16.mxu0 0
    %237 = vmatpush2.bf16.msra.mxu0 0
    %238 = vmatprep.subr.bf16.mxu0 0
    %239 = vmatpush2.bf16.msra.mxu0 0
    %240 = vmatprep.subr.bf16.mxu0 0
    %241 = vmatpush2.bf16.msra.mxu0 0
    %242 = vmatprep.subr.bf16.mxu0 0
    %243 = vmatpush2.bf16.msra.mxu0 0
    %244 = vmatprep.mubr.bf16.mxu0 0
    %245 = vmatmul.mubr.bf16.gmra.mxu0 %v210
    %v246 = vpop.f32.mrf.mxu0
    %v247 = vadd.f32 0.0, %v246
    %v248 = vpop.f32.mrf.mxu0
    %v249 = vpop.f32.mrf.mxu0
    %v250 = vpop.f32.mrf.mxu0
    %251 = vdwg.mxu0
    %v253 = vrot.slane %v247, 6
    %v255 = vadd.f32 %v114, %v253
    %v256 = vxor.u32 %v255, 2147483648
    %v257 = vmul.f32 %v256, 1.442695
    %v258 = vpow.pop %v257
    %v259 = vadd.f32 %v258, 1.0
    %v260 = vrcp.pop %v259
    %v261 = vmul.f32 1.0, %v260
    %v262 = vmul.f32 %v261, 2.0
    %v263 = vsub.f32 %v262, 1.0
    %v265 = vrot.slane %v198, 6
    %v267 = vmul.f32 %v261, %v265
    %269 = vrot.lane.b32.xlu0 %v263, 64
    %v270 = vpop.permute.xlu0 %269
    %v272 = vmul.f32 %v261, %v270
    %274 = vrot.lane.b32.xlu0 %v272, 32
    %v275 = vpop.permute.xlu0 %274
    %v277 = vadd.f32 %v267, %v275
    %v278 = vtanh.pop %v277
    %280 = vrot.lane.b32.xlu0 %v278, 64
    %v281 = vpop.permute.xlu0 %280
    %v283 = vmul.f32 %v261, %v281
    %v284 = vpack.c.bf16 %v283, %v283
    %s285 = scalar_lea.vmem [#allocation2], 16
    %v286 = vld [vmem:[%s285] sm:$0xf]
    %v287 = vld [vmem:[%s285 + $0x4] sm:$0xf]
    %v288 = vld [vmem:[%s285 + $0x8] sm:$0xf]
    %v289 = vld [vmem:[%s285 + $0xc] sm:$0xf]
    %s290 = scalar_lea.vmem [#allocation5], 16
    %v291 = vld [vmem:[%s290] sm:$0xf]
    %v292 = vld [vmem:[%s290 + $0x4] sm:$0xf]
    %v293 = vld [vmem:[%s290 + $0x8] sm:$0xf]
    %v294 = vld [vmem:[%s290 + $0xc] sm:$0xf]
    %v299 = vunpack.c.l.b16 %v291
    %v300 = vunpack.c.l.b16 %v292
    %v301 = vunpack.c.l.b16 %v293
    %v302 = vunpack.c.l.b16 %v294
    %v303 = vpack.c.b16 %v300, %v299
    %v304 = vpack.c.b16 %v302, %v301
    %307 = vmatprep.subr.bf16.mxu0 0
    %308 = vmatpush1.bf16.msra.mxu0 0
    %309 = vmatprep.subr.bf16.mxu0 0
    %310 = vmatpush1.bf16.msra.mxu0 0
    %311 = vmatprep.subr.bf16.mxu0 0
    %312 = vmatpush1.bf16.msra.mxu0 0
    %313 = vmatprep.subr.bf16.mxu0 0
    %314 = vmatpush1.bf16.msra.mxu0 0
    %315 = vmatprep.subr.bf16.mxu0 0
    %316 = vmatpush1.bf16.msra.mxu0 0
    %317 = vmatprep.subr.bf16.mxu0 0
    %318 = vmatpush1.bf16.msra.mxu0 0
    %319 = vmatprep.subr.bf16.mxu0 0
    %320 = vmatpush1.bf16.msra.mxu0 %v304
    %321 = vmatprep.subr.bf16.mxu0 0
    %322 = vmatpush1.bf16.msra.mxu0 %v303
    %323 = vmatprep.subr.bf16.mxu0 0
    %324 = vmatpush2.bf16.msra.mxu0 0
    %325 = vmatprep.subr.bf16.mxu0 0
    %326 = vmatpush2.bf16.msra.mxu0 0
    %327 = vmatprep.subr.bf16.mxu0 0
    %328 = vmatpush2.bf16.msra.mxu0 0
    %329 = vmatprep.subr.bf16.mxu0 0
    %330 = vmatpush2.bf16.msra.mxu0 0
    %331 = vmatprep.subr.bf16.mxu0 0
    %332 = vmatpush2.bf16.msra.mxu0 0
    %333 = vmatprep.subr.bf16.mxu0 0
    %334 = vmatpush2.bf16.msra.mxu0 0
    %335 = vmatprep.subr.bf16.mxu0 0
    %336 = vmatpush2.bf16.msra.mxu0 0
    %337 = vmatprep.subr.bf16.mxu0 0
    %338 = vmatpush2.bf16.msra.mxu0 0
    %339 = vmatprep.mubr.bf16.mxu0 0
    %340 = vmatmul.mubr.bf16.gmra.mxu0 %v137
    %v341 = vpop.f32.mrf.mxu0
    %v342 = vadd.f32 0.0, %v341
    %v343 = vpop.f32.mrf.mxu0
    %v344 = vpop.f32.mrf.mxu0
    %v345 = vpop.f32.mrf.mxu0
    %346 = vdwg.mxu0
    %v351 = vunpack.c.l.b16 %v286
    %v352 = vunpack.c.l.b16 %v287
    %v353 = vunpack.c.l.b16 %v288
    %v354 = vunpack.c.l.b16 %v289
    %v355 = vpack.c.b16 %v352, %v351
    %v356 = vpack.c.b16 %v354, %v353
    %359 = vmatprep.subr.bf16.mxu0 0
    %360 = vmatpush1.bf16.msra.mxu0 0
    %361 = vmatprep.subr.bf16.mxu0 0
    %362 = vmatpush1.bf16.msra.mxu0 0
    %363 = vmatprep.subr.bf16.mxu0 0
    %364 = vmatpush1.bf16.msra.mxu0 0
    %365 = vmatprep.subr.bf16.mxu0 0
    %366 = vmatpush1.bf16.msra.mxu0 0
    %367 = vmatprep.subr.bf16.mxu0 0
    %368 = vmatpush1.bf16.msra.mxu0 0
    %369 = vmatprep.subr.bf16.mxu0 0
    %370 = vmatpush1.bf16.msra.mxu0 0
    %371 = vmatprep.subr.bf16.mxu0 0
    %372 = vmatpush1.bf16.msra.mxu0 %v356
    %373 = vmatprep.subr.bf16.mxu0 0
    %374 = vmatpush1.bf16.msra.mxu0 %v355
    %375 = vmatprep.subr.bf16.mxu0 0
    %376 = vmatpush2.bf16.msra.mxu0 0
    %377 = vmatprep.subr.bf16.mxu0 0
    %378 = vmatpush2.bf16.msra.mxu0 0
    %379 = vmatprep.subr.bf16.mxu0 0
    %380 = vmatpush2.bf16.msra.mxu0 0
    %381 = vmatprep.subr.bf16.mxu0 0
    %382 = vmatpush2.bf16.msra.mxu0 0
    %383 = vmatprep.subr.bf16.mxu0 0
    %384 = vmatpush2.bf16.msra.mxu0 0
    %385 = vmatprep.subr.bf16.mxu0 0
    %386 = vmatpush2.bf16.msra.mxu0 0
    %387 = vmatprep.subr.bf16.mxu0 0
    %388 = vmatpush2.bf16.msra.mxu0 0
    %389 = vmatprep.subr.bf16.mxu0 0
    %390 = vmatpush2.bf16.msra.mxu0 0
    %391 = vmatprep.mubr.bf16.mxu0 0
    %392 = vmatmul.mubr.bf16.gmra.mxu0 %v210
    %v393 = vpop.f32.mrf.mxu0
    %v394 = vadd.f32 %v342, %v393
    %v395 = vpop.f32.mrf.mxu0
    %v396 = vpop.f32.mrf.mxu0
    %v397 = vpop.f32.mrf.mxu0
    %398 = vdwg.mxu0
    %v399 = vlaneseq
    %v400 = vshrl.u32 %v399, 7
    %v401 = vsub.s32 1, %v400
    %v402 = vrot.slane %v47, %v401
    %v403 = vadd.f32 %v394, %v402
    %v404 = vxor.u32 %v403, 2147483648
    %v405 = vmul.f32 %v404, 1.442695
    %v406 = vpow.pop %v405
    %v407 = vadd.f32 %v406, 1.0
    %v408 = vrcp.pop %v407
    %v409 = vmul.f32 1.0, %v408
    %v410 = vmul.f32 %v409, 2.0
    %v411 = vsub.f32 %v410, 1.0
    %v412 = vmul.f32 %v409, 0.0
    %414 = vrot.lane.b32.xlu0 %v411, 64
    %v415 = vpop.permute.xlu0 %414
    %v417 = vmul.f32 %v409, %v415
    %419 = vrot.lane.b32.xlu0 %v417, 32
    %v420 = vpop.permute.xlu0 %419
    %v422 = vadd.f32 %v412, %v420
    %v423 = vtanh.pop %v422
    %425 = vrot.lane.b32.xlu0 %v423, 64
    %v426 = vpop.permute.xlu0 %425
    %v428 = vmul.f32 %v409, %v426
    %v429 = vpack.c.bf16 %v428, %v428
    %v431 = vrot.slane %v284, 1
    %432 = vrot.lane.b32.xlu0 %v431, 32
    %v433 = vpop.permute.xlu0 %432
    %v435 = vsel %vm75, %v433, 0
    %437 = vmatprep.subr.bf16.mxu0 0
    %438 = vmatpush1.bf16.msra.mxu0 0
    %439 = vmatprep.subr.bf16.mxu0 0
    %440 = vmatpush1.bf16.msra.mxu0 0
    %441 = vmatprep.subr.bf16.mxu0 0
    %442 = vmatpush1.bf16.msra.mxu0 0
    %443 = vmatprep.subr.bf16.mxu0 0
    %444 = vmatpush1.bf16.msra.mxu0 0
    %445 = vmatprep.subr.bf16.mxu0 0
    %446 = vmatpush1.bf16.msra.mxu0 0
    %447 = vmatprep.subr.bf16.mxu0 0
    %448 = vmatpush1.bf16.msra.mxu0 0
    %449 = vmatprep.subr.bf16.mxu0 0
    %450 = vmatpush1.bf16.msra.mxu0 %v133
    %451 = vmatprep.subr.bf16.mxu0 0
    %452 = vmatpush1.bf16.msra.mxu0 %v132
    %453 = vmatprep.subr.bf16.mxu0 0
    %454 = vmatpush2.bf16.msra.mxu0 0
    %455 = vmatprep.subr.bf16.mxu0 0
    %456 = vmatpush2.bf16.msra.mxu0 0
    %457 = vmatprep.subr.bf16.mxu0 0
    %458 = vmatpush2.bf16.msra.mxu0 0
    %459 = vmatprep.subr.bf16.mxu0 0
    %460 = vmatpush2.bf16.msra.mxu0 0
    %461 = vmatprep.subr.bf16.mxu0 0
    %462 = vmatpush2.bf16.msra.mxu0 0
    %463 = vmatprep.subr.bf16.mxu0 0
    %464 = vmatpush2.bf16.msra.mxu0 0
    %465 = vmatprep.subr.bf16.mxu0 0
    %466 = vmatpush2.bf16.msra.mxu0 0
    %467 = vmatprep.subr.bf16.mxu0 0
    %468 = vmatpush2.bf16.msra.mxu0 0
    %469 = vmatprep.mubr.bf16.mxu0 0
    %470 = vmatmul.mubr.bf16.gmra.mxu0 %v435
    %v471 = vpop.f32.mrf.mxu0
    %v472 = vadd.f32 0.0, %v471
    %v473 = vpop.f32.mrf.mxu0
    %v474 = vpop.f32.mrf.mxu0
    %v475 = vpop.f32.mrf.mxu0
    %476 = vdwg.mxu0
    %v478 = vrot.slane %v472, 4
    %v480 = vadd.f32 %v114, %v478
    %v481 = vxor.u32 %v480, 2147483648
    %v482 = vmul.f32 %v481, 1.442695
    %v483 = vpow.pop %v482
    %v484 = vadd.f32 %v483, 1.0
    %v485 = vrcp.pop %v484
    %v486 = vmul.f32 1.0, %v485
    %v487 = vmul.f32 %v486, 2.0
    %v488 = vsub.f32 %v487, 1.0
    %v490 = vrot.slane %v277, 6
    %v492 = vmul.f32 %v486, %v490
    %494 = vrot.lane.b32.xlu0 %v488, 64
    %v495 = vpop.permute.xlu0 %494
    %v497 = vmul.f32 %v486, %v495
    %499 = vrot.lane.b32.xlu0 %v497, 32
    %v500 = vpop.permute.xlu0 %499
    %v502 = vadd.f32 %v492, %v500
    %v503 = vtanh.pop %v502
    %505 = vrot.lane.b32.xlu0 %v503, 64
    %v506 = vpop.permute.xlu0 %505
    %v508 = vmul.f32 %v486, %v506
    %v509 = vpack.c.bf16 %v508, %v508
    %511 = vrot.lane.b32.xlu0 %v429, 32
    %v512 = vpop.permute.xlu0 %511
    %v514 = vsel %vm75, %v512, 0
    %516 = vmatprep.subr.bf16.mxu0 0
    %517 = vmatpush1.bf16.msra.mxu0 0
    %518 = vmatprep.subr.bf16.mxu0 0
    %519 = vmatpush1.bf16.msra.mxu0 0
    %520 = vmatprep.subr.bf16.mxu0 0
    %521 = vmatpush1.bf16.msra.mxu0 0
    %522 = vmatprep.subr.bf16.mxu0 0
    %523 = vmatpush1.bf16.msra.mxu0 0
    %524 = vmatprep.subr.bf16.mxu0 0
    %525 = vmatpush1.bf16.msra.mxu0 0
    %526 = vmatprep.subr.bf16.mxu0 0
    %527 = vmatpush1.bf16.msra.mxu0 0
    %528 = vmatprep.subr.bf16.mxu0 0
    %529 = vmatpush1.bf16.msra.mxu0 %v304
    %530 = vmatprep.subr.bf16.mxu0 0
    %531 = vmatpush1.bf16.msra.mxu0 %v303
    %532 = vmatprep.subr.bf16.mxu0 0
    %533 = vmatpush2.bf16.msra.mxu0 0
    %534 = vmatprep.subr.bf16.mxu0 0
    %535 = vmatpush2.bf16.msra.mxu0 0
    %536 = vmatprep.subr.bf16.mxu0 0
    %537 = vmatpush2.bf16.msra.mxu0 0
    %538 = vmatprep.subr.bf16.mxu0 0
    %539 = vmatpush2.bf16.msra.mxu0 0
    %540 = vmatprep.subr.bf16.mxu0 0
    %541 = vmatpush2.bf16.msra.mxu0 0
    %542 = vmatprep.subr.bf16.mxu0 0
    %543 = vmatpush2.bf16.msra.mxu0 0
    %544 = vmatprep.subr.bf16.mxu0 0
    %545 = vmatpush2.bf16.msra.mxu0 0
    %546 = vmatprep.subr.bf16.mxu0 0
    %547 = vmatpush2.bf16.msra.mxu0 0
    %548 = vmatprep.mubr.bf16.mxu0 0
    %549 = vmatmul.mubr.bf16.gmra.mxu0 %v514
    %v550 = vpop.f32.mrf.mxu0
    %v551 = vadd.f32 0.0, %v550
    %v552 = vpop.f32.mrf.mxu0
    %v553 = vpop.f32.mrf.mxu0
    %v554 = vpop.f32.mrf.mxu0
    %555 = vdwg.mxu0
    %556 = vmatprep.subr.bf16.mxu0 0
    %557 = vmatpush1.bf16.msra.mxu0 0
    %558 = vmatprep.subr.bf16.mxu0 0
    %559 = vmatpush1.bf16.msra.mxu0 0
    %560 = vmatprep.subr.bf16.mxu0 0
    %561 = vmatpush1.bf16.msra.mxu0 0
    %562 = vmatprep.subr.bf16.mxu0 0
    %563 = vmatpush1.bf16.msra.mxu0 0
    %564 = vmatprep.subr.bf16.mxu0 0
    %565 = vmatpush1.bf16.msra.mxu0 0
    %566 = vmatprep.subr.bf16.mxu0 0
    %567 = vmatpush1.bf16.msra.mxu0 0
    %568 = vmatprep.subr.bf16.mxu0 0
    %569 = vmatpush1.bf16.msra.mxu0 %v356
    %570 = vmatprep.subr.bf16.mxu0 0
    %571 = vmatpush1.bf16.msra.mxu0 %v355
    %572 = vmatprep.subr.bf16.mxu0 0
    %573 = vmatpush2.bf16.msra.mxu0 0
    %574 = vmatprep.subr.bf16.mxu0 0
    %575 = vmatpush2.bf16.msra.mxu0 0
    %576 = vmatprep.subr.bf16.mxu0 0
    %577 = vmatpush2.bf16.msra.mxu0 0
    %578 = vmatprep.subr.bf16.mxu0 0
    %579 = vmatpush2.bf16.msra.mxu0 0
    %580 = vmatprep.subr.bf16.mxu0 0
    %581 = vmatpush2.bf16.msra.mxu0 0
    %582 = vmatprep.subr.bf16.mxu0 0
    %583 = vmatpush2.bf16.msra.mxu0 0
    %584 = vmatprep.subr.bf16.mxu0 0
    %585 = vmatpush2.bf16.msra.mxu0 0
    %586 = vmatprep.subr.bf16.mxu0 0
    %587 = vmatpush2.bf16.msra.mxu0 0
    %588 = vmatprep.mubr.bf16.mxu0 0
    %589 = vmatmul.mubr.bf16.gmra.mxu0 %v435
    %v590 = vpop.f32.mrf.mxu0
    %v591 = vadd.f32 %v551, %v590
    %v592 = vpop.f32.mrf.mxu0
    %v593 = vpop.f32.mrf.mxu0
    %v594 = vpop.f32.mrf.mxu0
    %595 = vdwg.mxu0
    %v596 = vadd.f32 %v591, %v402
    %v597 = vxor.u32 %v596, 2147483648
    %v598 = vmul.f32 %v597, 1.442695
    %v599 = vpow.pop %v598
    %v600 = vadd.f32 %v599, 1.0
    %v601 = vrcp.pop %v600
    %v602 = vmul.f32 1.0, %v601
    %v603 = vmul.f32 %v602, 2.0
    %v604 = vsub.f32 %v603, 1.0
    %v605 = vmul.f32 %v602, %v422
    %607 = vrot.lane.b32.xlu0 %v604, 64
    %v608 = vpop.permute.xlu0 %607
    %v610 = vmul.f32 %v602, %v608
    %612 = vrot.lane.b32.xlu0 %v610, 32
    %v613 = vpop.permute.xlu0 %612
    %v615 = vadd.f32 %v605, %v613
    %v616 = vtanh.pop %v615
    %618 = vrot.lane.b32.xlu0 %v616, 64
    %v619 = vpop.permute.xlu0 %618
    %v621 = vmul.f32 %v602, %v619
    %v622 = vpack.c.bf16 %v621, %v621
    %s623 = scalar_lea.vmem [#allocation2], 32
    %v624 = vld [vmem:[%s623] sm:$0xf]
    %v625 = vld [vmem:[%s623 + $0x4] sm:$0xf]
    %v626 = vld [vmem:[%s623 + $0x8] sm:$0xf]
    %v627 = vld [vmem:[%s623 + $0xc] sm:$0xf]
    %s628 = scalar_lea.vmem [#allocation5], 32
    %v629 = vld [vmem:[%s628] sm:$0xf]
    %v630 = vld [vmem:[%s628 + $0x4] sm:$0xf]
    %v631 = vld [vmem:[%s628 + $0x8] sm:$0xf]
    %v632 = vld [vmem:[%s628 + $0xc] sm:$0xf]
    %v637 = vunpack.c.l.b16 %v629
    %v638 = vunpack.c.l.b16 %v630
    %v639 = vunpack.c.l.b16 %v631
    %v640 = vunpack.c.l.b16 %v632
    %v641 = vpack.c.b16 %v638, %v637
    %v642 = vpack.c.b16 %v640, %v639
    %645 = vmatprep.subr.bf16.mxu0 0
    %646 = vmatpush1.bf16.msra.mxu0 0
    %647 = vmatprep.subr.bf16.mxu0 0
    %648 = vmatpush1.bf16.msra.mxu0 0
    %649 = vmatprep.subr.bf16.mxu0 0
    %650 = vmatpush1.bf16.msra.mxu0 0
    %651 = vmatprep.subr.bf16.mxu0 0
    %652 = vmatpush1.bf16.msra.mxu0 0
    %653 = vmatprep.subr.bf16.mxu0 0
    %654 = vmatpush1.bf16.msra.mxu0 0
    %655 = vmatprep.subr.bf16.mxu0 0
    %656 = vmatpush1.bf16.msra.mxu0 0
    %657 = vmatprep.subr.bf16.mxu0 0
    %658 = vmatpush1.bf16.msra.mxu0 %v642
    %659 = vmatprep.subr.bf16.mxu0 0
    %660 = vmatpush1.bf16.msra.mxu0 %v641
    %661 = vmatprep.subr.bf16.mxu0 0
    %662 = vmatpush2.bf16.msra.mxu0 0
    %663 = vmatprep.subr.bf16.mxu0 0
    %664 = vmatpush2.bf16.msra.mxu0 0
    %665 = vmatprep.subr.bf16.mxu0 0
    %666 = vmatpush2.bf16.msra.mxu0 0
    %667 = vmatprep.subr.bf16.mxu0 0
    %668 = vmatpush2.bf16.msra.mxu0 0
    %669 = vmatprep.subr.bf16.mxu0 0
    %670 = vmatpush2.bf16.msra.mxu0 0
    %671 = vmatprep.subr.bf16.mxu0 0
    %672 = vmatpush2.bf16.msra.mxu0 0
    %673 = vmatprep.subr.bf16.mxu0 0
    %674 = vmatpush2.bf16.msra.mxu0 0
    %675 = vmatprep.subr.bf16.mxu0 0
    %676 = vmatpush2.bf16.msra.mxu0 0
    %677 = vmatprep.mubr.bf16.mxu0 0
    %678 = vmatmul.mubr.bf16.gmra.mxu0 %v137
    %v679 = vpop.f32.mrf.mxu0
    %v680 = vadd.f32 0.0, %v679
    %v681 = vpop.f32.mrf.mxu0
    %v682 = vpop.f32.mrf.mxu0
    %v683 = vpop.f32.mrf.mxu0
    %684 = vdwg.mxu0
    %v689 = vunpack.c.l.b16 %v624
    %v690 = vunpack.c.l.b16 %v625
    %v691 = vunpack.c.l.b16 %v626
    %v692 = vunpack.c.l.b16 %v627
    %v693 = vpack.c.b16 %v690, %v689
    %v694 = vpack.c.b16 %v692, %v691
    %697 = vmatprep.subr.bf16.mxu0 0
    %698 = vmatpush1.bf16.msra.mxu0 0
    %699 = vmatprep.subr.bf16.mxu0 0
    %700 = vmatpush1.bf16.msra.mxu0 0
    %701 = vmatprep.subr.bf16.mxu0 0
    %702 = vmatpush1.bf16.msra.mxu0 0
    %703 = vmatprep.subr.bf16.mxu0 0
    %704 = vmatpush1.bf16.msra.mxu0 0
    %705 = vmatprep.subr.bf16.mxu0 0
    %706 = vmatpush1.bf16.msra.mxu0 0
    %707 = vmatprep.subr.bf16.mxu0 0
    %708 = vmatpush1.bf16.msra.mxu0 0
    %709 = vmatprep.subr.bf16.mxu0 0
    %710 = vmatpush1.bf16.msra.mxu0 %v694
    %711 = vmatprep.subr.bf16.mxu0 0
    %712 = vmatpush1.bf16.msra.mxu0 %v693
    %713 = vmatprep.subr.bf16.mxu0 0
    %714 = vmatpush2.bf16.msra.mxu0 0
    %715 = vmatprep.subr.bf16.mxu0 0
    %716 = vmatpush2.bf16.msra.mxu0 0
    %717 = vmatprep.subr.bf16.mxu0 0
    %718 = vmatpush2.bf16.msra.mxu0 0
    %719 = vmatprep.subr.bf16.mxu0 0
    %720 = vmatpush2.bf16.msra.mxu0 0
    %721 = vmatprep.subr.bf16.mxu0 0
    %722 = vmatpush2.bf16.msra.mxu0 0
    %723 = vmatprep.subr.bf16.mxu0 0
    %724 = vmatpush2.bf16.msra.mxu0 0
    %725 = vmatprep.subr.bf16.mxu0 0
    %726 = vmatpush2.bf16.msra.mxu0 0
    %727 = vmatprep.subr.bf16.mxu0 0
    %728 = vmatpush2.bf16.msra.mxu0 0
    %729 = vmatprep.mubr.bf16.mxu0 0
    %730 = vmatmul.mubr.bf16.gmra.mxu0 %v514
    %v731 = vpop.f32.mrf.mxu0
    %v732 = vadd.f32 %v680, %v731
    %v733 = vpop.f32.mrf.mxu0
    %v734 = vpop.f32.mrf.mxu0
    %v735 = vpop.f32.mrf.mxu0
    %736 = vdwg.mxu0
    %v737 = vlaneseq
    %v738 = vshrl.u32 %v737, 7
    %v739 = vsub.s32 2, %v738
    %v740 = vrot.slane %v47, %v739
    %v741 = vadd.f32 %v732, %v740
    %v742 = vxor.u32 %v741, 2147483648
    %v743 = vmul.f32 %v742, 1.442695
    %v744 = vpow.pop %v743
    %v745 = vadd.f32 %v744, 1.0
    %v746 = vrcp.pop %v745
    %v747 = vmul.f32 1.0, %v746
    %v748 = vmul.f32 %v747, 2.0
    %v749 = vsub.f32 %v748, 1.0
    %v750 = vmul.f32 %v747, 0.0
    %752 = vrot.lane.b32.xlu0 %v749, 64
    %v753 = vpop.permute.xlu0 %752
    %v755 = vmul.f32 %v747, %v753
    %757 = vrot.lane.b32.xlu0 %v755, 32
    %v758 = vpop.permute.xlu0 %757
    %v760 = vadd.f32 %v750, %v758
    %v761 = vtanh.pop %v760
    %763 = vrot.lane.b32.xlu0 %v761, 64
    %v764 = vpop.permute.xlu0 %763
    %v766 = vmul.f32 %v747, %v764
    %v767 = vpack.c.bf16 %v766, %v766
    %v769 = vrot.slane %v509, 2
    %770 = vrot.lane.b32.xlu0 %v769, 32
    %v771 = vpop.permute.xlu0 %770
    %v773 = vsel %vm75, %v771, 0
    %775 = vmatprep.subr.bf16.mxu0 0
    %776 = vmatpush1.bf16.msra.mxu0 0
    %777 = vmatprep.subr.bf16.mxu0 0
    %778 = vmatpush1.bf16.msra.mxu0 0
    %779 = vmatprep.subr.bf16.mxu0 0
    %780 = vmatpush1.bf16.msra.mxu0 0
    %781 = vmatprep.subr.bf16.mxu0 0
    %782 = vmatpush1.bf16.msra.mxu0 0
    %783 = vmatprep.subr.bf16.mxu0 0
    %784 = vmatpush1.bf16.msra.mxu0 0
    %785 = vmatprep.subr.bf16.mxu0 0
    %786 = vmatpush1.bf16.msra.mxu0 0
    %787 = vmatprep.subr.bf16.mxu0 0
    %788 = vmatpush1.bf16.msra.mxu0 %v133
    %789 = vmatprep.subr.bf16.mxu0 0
    %790 = vmatpush1.bf16.msra.mxu0 %v132
    %791 = vmatprep.subr.bf16.mxu0 0
    %792 = vmatpush2.bf16.msra.mxu0 0
    %793 = vmatprep.subr.bf16.mxu0 0
    %794 = vmatpush2.bf16.msra.mxu0 0
    %795 = vmatprep.subr.bf16.mxu0 0
    %796 = vmatpush2.bf16.msra.mxu0 0
    %797 = vmatprep.subr.bf16.mxu0 0
    %798 = vmatpush2.bf16.msra.mxu0 0
    %799 = vmatprep.subr.bf16.mxu0 0
    %800 = vmatpush2.bf16.msra.mxu0 0
    %801 = vmatprep.subr.bf16.mxu0 0
    %802 = vmatpush2.bf16.msra.mxu0 0
    %803 = vmatprep.subr.bf16.mxu0 0
    %804 = vmatpush2.bf16.msra.mxu0 0
    %805 = vmatprep.subr.bf16.mxu0 0
    %806 = vmatpush2.bf16.msra.mxu0 0
    %807 = vmatprep.mubr.bf16.mxu0 0
    %808 = vmatmul.mubr.bf16.gmra.mxu0 %v773
    %v809 = vpop.f32.mrf.mxu0
    %v810 = vadd.f32 0.0, %v809
    %v811 = vpop.f32.mrf.mxu0
    %v812 = vpop.f32.mrf.mxu0
    %v813 = vpop.f32.mrf.mxu0
    %814 = vdwg.mxu0
    %v816 = vrot.slane %v810, 2
    %v818 = vadd.f32 %v114, %v816
    %v819 = vxor.u32 %v818, 2147483648
    %v820 = vmul.f32 %v819, 1.442695
    %v821 = vpow.pop %v820
    %v822 = vadd.f32 %v821, 1.0
    %v823 = vrcp.pop %v822
    %v824 = vmul.f32 1.0, %v823
    %v825 = vmul.f32 %v824, 2.0
    %v826 = vsub.f32 %v825, 1.0
    %v828 = vrot.slane %v502, 6
    %v830 = vmul.f32 %v824, %v828
    %832 = vrot.lane.b32.xlu0 %v826, 64
    %v833 = vpop.permute.xlu0 %832
    %v835 = vmul.f32 %v824, %v833
    %837 = vrot.lane.b32.xlu0 %v835, 32
    %v838 = vpop.permute.xlu0 %837
    %v840 = vadd.f32 %v830, %v838
    %v841 = vtanh.pop %v840
    %843 = vrot.lane.b32.xlu0 %v841, 64
    %v844 = vpop.permute.xlu0 %843
    %v846 = vmul.f32 %v824, %v844
    %v847 = vpack.c.bf16 %v846, %v846
    %849 = vrot.lane.b32.xlu0 %v622, 32
    %v850 = vpop.permute.xlu0 %849
    %v852 = vsel %vm75, %v850, 0
    %854 = vmatprep.subr.bf16.mxu0 0
    %855 = vmatpush1.bf16.msra.mxu0 0
    %856 = vmatprep.subr.bf16.mxu0 0
    %857 = vmatpush1.bf16.msra.mxu0 0
    %858 = vmatprep.subr.bf16.mxu0 0
    %859 = vmatpush1.bf16.msra.mxu0 0
    %860 = vmatprep.subr.bf16.mxu0 0
    %861 = vmatpush1.bf16.msra.mxu0 0
    %862 = vmatprep.subr.bf16.mxu0 0
    %863 = vmatpush1.bf16.msra.mxu0 0
    %864 = vmatprep.subr.bf16.mxu0 0
    %865 = vmatpush1.bf16.msra.mxu0 0
    %866 = vmatprep.subr.bf16.mxu0 0
    %867 = vmatpush1.bf16.msra.mxu0 %v304
    %868 = vmatprep.subr.bf16.mxu0 0
    %869 = vmatpush1.bf16.msra.mxu0 %v303
    %870 = vmatprep.subr.bf16.mxu0 0
    %871 = vmatpush2.bf16.msra.mxu0 0
    %872 = vmatprep.subr.bf16.mxu0 0
    %873 = vmatpush2.bf16.msra.mxu0 0
    %874 = vmatprep.subr.bf16.mxu0 0
    %875 = vmatpush2.bf16.msra.mxu0 0
    %876 = vmatprep.subr.bf16.mxu0 0
    %877 = vmatpush2.bf16.msra.mxu0 0
    %878 = vmatprep.subr.bf16.mxu0 0
    %879 = vmatpush2.bf16.msra.mxu0 0
    %880 = vmatprep.subr.bf16.mxu0 0
    %881 = vmatpush2.bf16.msra.mxu0 0
    %882 = vmatprep.subr.bf16.mxu0 0
    %883 = vmatpush2.bf16.msra.mxu0 0
    %884 = vmatprep.subr.bf16.mxu0 0
    %885 = vmatpush2.bf16.msra.mxu0 0
    %886 = vmatprep.mubr.bf16.mxu0 0
    %887 = vmatmul.mubr.bf16.gmra.mxu0 %v852
    %v888 = vpop.f32.mrf.mxu0
    %v889 = vadd.f32 0.0, %v888
    %v890 = vpop.f32.mrf.mxu0
    %v891 = vpop.f32.mrf.mxu0
    %v892 = vpop.f32.mrf.mxu0
    %893 = vdwg.mxu0
    %894 = vmatprep.subr.bf16.mxu0 0
    %895 = vmatpush1.bf16.msra.mxu0 0
    %896 = vmatprep.subr.bf16.mxu0 0
    %897 = vmatpush1.bf16.msra.mxu0 0
    %898 = vmatprep.subr.bf16.mxu0 0
    %899 = vmatpush1.bf16.msra.mxu0 0
    %900 = vmatprep.subr.bf16.mxu0 0
    %901 = vmatpush1.bf16.msra.mxu0 0
    %902 = vmatprep.subr.bf16.mxu0 0
    %903 = vmatpush1.bf16.msra.mxu0 0
    %904 = vmatprep.subr.bf16.mxu0 0
    %905 = vmatpush1.bf16.msra.mxu0 0
    %906 = vmatprep.subr.bf16.mxu0 0
    %907 = vmatpush1.bf16.msra.mxu0 %v356
    %908 = vmatprep.subr.bf16.mxu0 0
    %909 = vmatpush1.bf16.msra.mxu0 %v355
    %910 = vmatprep.subr.bf16.mxu0 0
    %911 = vmatpush2.bf16.msra.mxu0 0
    %912 = vmatprep.subr.bf16.mxu0 0
    %913 = vmatpush2.bf16.msra.mxu0 0
    %914 = vmatprep.subr.bf16.mxu0 0
    %915 = vmatpush2.bf16.msra.mxu0 0
    %916 = vmatprep.subr.bf16.mxu0 0
    %917 = vmatpush2.bf16.msra.mxu0 0
    %918 = vmatprep.subr.bf16.mxu0 0
    %919 = vmatpush2.bf16.msra.mxu0 0
    %920 = vmatprep.subr.bf16.mxu0 0
    %921 = vmatpush2.bf16.msra.mxu0 0
    %922 = vmatprep.subr.bf16.mxu0 0
    %923 = vmatpush2.bf16.msra.mxu0 0
    %924 = vmatprep.subr.bf16.mxu0 0
    %925 = vmatpush2.bf16.msra.mxu0 0
    %926 = vmatprep.mubr.bf16.mxu0 0
    %927 = vmatmul.mubr.bf16.gmra.mxu0 %v773
    %v928 = vpop.f32.mrf.mxu0
    %v929 = vadd.f32 %v889, %v928
    %v930 = vpop.f32.mrf.mxu0
    %v931 = vpop.f32.mrf.mxu0
    %v932 = vpop.f32.mrf.mxu0
    %933 = vdwg.mxu0
    %v934 = vadd.f32 %v929, %v402
    %v935 = vxor.u32 %v934, 2147483648
    %v936 = vmul.f32 %v935, 1.442695
    %v937 = vpow.pop %v936
    %v938 = vadd.f32 %v937, 1.0
    %v939 = vrcp.pop %v938
    %v940 = vmul.f32 1.0, %v939
    %v941 = vmul.f32 %v940, 2.0
    %v942 = vsub.f32 %v941, 1.0
    %v943 = vmul.f32 %v940, %v615
    %945 = vrot.lane.b32.xlu0 %v942, 64
    %v946 = vpop.permute.xlu0 %945
    %v948 = vmul.f32 %v940, %v946
    %950 = vrot.lane.b32.xlu0 %v948, 32
    %v951 = vpop.permute.xlu0 %950
    %v953 = vadd.f32 %v943, %v951
    %v954 = vtanh.pop %v953
    %956 = vrot.lane.b32.xlu0 %v954, 64
    %v957 = vpop.permute.xlu0 %956
    %v959 = vmul.f32 %v940, %v957
    %v960 = vpack.c.bf16 %v959, %v959
    %962 = vrot.lane.b32.xlu0 %v767, 32
    %v963 = vpop.permute.xlu0 %962
    %v965 = vsel %vm75, %v963, 0
    %967 = vmatprep.subr.bf16.mxu0 0
    %968 = vmatpush1.bf16.msra.mxu0 0
    %969 = vmatprep.subr.bf16.mxu0 0
    %970 = vmatpush1.bf16.msra.mxu0 0
    %971 = vmatprep.subr.bf16.mxu0 0
    %972 = vmatpush1.bf16.msra.mxu0 0
    %973 = vmatprep.subr.bf16.mxu0 0
    %974 = vmatpush1.bf16.msra.mxu0 0
    %975 = vmatprep.subr.bf16.mxu0 0
    %976 = vmatpush1.bf16.msra.mxu0 0
    %977 = vmatprep.subr.bf16.mxu0 0
    %978 = vmatpush1.bf16.msra.mxu0 0
    %979 = vmatprep.subr.bf16.mxu0 0
    %980 = vmatpush1.bf16.msra.mxu0 %v642
    %981 = vmatprep.subr.bf16.mxu0 0
    %982 = vmatpush1.bf16.msra.mxu0 %v641
    %983 = vmatprep.subr.bf16.mxu0 0
    %984 = vmatpush2.bf16.msra.mxu0 0
    %985 = vmatprep.subr.bf16.mxu0 0
    %986 = vmatpush2.bf16.msra.mxu0 0
    %987 = vmatprep.subr.bf16.mxu0 0
    %988 = vmatpush2.bf16.msra.mxu0 0
    %989 = vmatprep.subr.bf16.mxu0 0
    %990 = vmatpush2.bf16.msra.mxu0 0
    %991 = vmatprep.subr.bf16.mxu0 0
    %992 = vmatpush2.bf16.msra.mxu0 0
    %993 = vmatprep.subr.bf16.mxu0 0
    %994 = vmatpush2.bf16.msra.mxu0 0
    %995 = vmatprep.subr.bf16.mxu0 0
    %996 = vmatpush2.bf16.msra.mxu0 0
    %997 = vmatprep.subr.bf16.mxu0 0
    %998 = vmatpush2.bf16.msra.mxu0 0
    %999 = vmatprep.mubr.bf16.mxu0 0
    %1000 = vmatmul.mubr.bf16.gmra.mxu0 %v965
    %v1001 = vpop.f32.mrf.mxu0
    %v1002 = vadd.f32 0.0, %v1001
    %v1003 = vpop.f32.mrf.mxu0
    %v1004 = vpop.f32.mrf.mxu0
    %v1005 = vpop.f32.mrf.mxu0
    %1006 = vdwg.mxu0
    %1007 = vmatprep.subr.bf16.mxu0 0
    %1008 = vmatpush1.bf16.msra.mxu0 0
    %1009 = vmatprep.subr.bf16.mxu0 0
    %1010 = vmatpush1.bf16.msra.mxu0 0
    %1011 = vmatprep.subr.bf16.mxu0 0
    %1012 = vmatpush1.bf16.msra.mxu0 0
    %1013 = vmatprep.subr.bf16.mxu0 0
    %1014 = vmatpush1.bf16.msra.mxu0 0
    %1015 = vmatprep.subr.bf16.mxu0 0
    %1016 = vmatpush1.bf16.msra.mxu0 0
    %1017 = vmatprep.subr.bf16.mxu0 0
    %1018 = vmatpush1.bf16.msra.mxu0 0
    %1019 = vmatprep.subr.bf16.mxu0 0
    %1020 = vmatpush1.bf16.msra.mxu0 %v694
    %1021 = vmatprep.subr.bf16.mxu0 0
    %1022 = vmatpush1.bf16.msra.mxu0 %v693
    %1023 = vmatprep.subr.bf16.mxu0 0
    %1024 = vmatpush2.bf16.msra.mxu0 0
    %1025 = vmatprep.subr.bf16.mxu0 0
    %1026 = vmatpush2.bf16.msra.mxu0 0
    %1027 = vmatprep.subr.bf16.mxu0 0
    %1028 = vmatpush2.bf16.msra.mxu0 0
    %1029 = vmatprep.subr.bf16.mxu0 0
    %1030 = vmatpush2.bf16.msra.mxu0 0
    %1031 = vmatprep.subr.bf16.mxu0 0
    %1032 = vmatpush2.bf16.msra.mxu0 0
    %1033 = vmatprep.subr.bf16.mxu0 0
    %1034 = vmatpush2.bf16.msra.mxu0 0
    %1035 = vmatprep.subr.bf16.mxu0 0
    %1036 = vmatpush2.bf16.msra.mxu0 0
    %1037 = vmatprep.subr.bf16.mxu0 0
    %1038 = vmatpush2.bf16.msra.mxu0 0
    %1039 = vmatprep.mubr.bf16.mxu0 0
    %1040 = vmatmul.mubr.bf16.gmra.mxu0 %v852
    %v1041 = vpop.f32.mrf.mxu0
    %v1042 = vadd.f32 %v1002, %v1041
    %v1043 = vpop.f32.mrf.mxu0
    %v1044 = vpop.f32.mrf.mxu0
    %v1045 = vpop.f32.mrf.mxu0
    %1046 = vdwg.mxu0
    %v1047 = vadd.f32 %v1042, %v740
    %v1048 = vxor.u32 %v1047, 2147483648
    %v1049 = vmul.f32 %v1048, 1.442695
    %v1050 = vpow.pop %v1049
    %v1051 = vadd.f32 %v1050, 1.0
    %v1052 = vrcp.pop %v1051
    %v1053 = vmul.f32 1.0, %v1052
    %v1054 = vmul.f32 %v1053, 2.0
    %v1055 = vsub.f32 %v1054, 1.0
    %v1056 = vmul.f32 %v1053, %v760
    %1058 = vrot.lane.b32.xlu0 %v1055, 64
    %v1059 = vpop.permute.xlu0 %1058
    %v1061 = vmul.f32 %v1053, %v1059
    %1063 = vrot.lane.b32.xlu0 %v1061, 32
    %v1064 = vpop.permute.xlu0 %1063
    %v1066 = vadd.f32 %v1056, %v1064
    %v1067 = vtanh.pop %v1066
    %1069 = vrot.lane.b32.xlu0 %v1067, 64
    %v1070 = vpop.permute.xlu0 %1069
    %v1072 = vmul.f32 %v1053, %v1070
    %v1073 = vpack.c.bf16 %v1072, %v1072
    %s1074 = scalar_lea.vmem [#allocation2], 48
    %v1075 = vld [vmem:[%s1074] sm:$0xf]
    %v1076 = vld [vmem:[%s1074 + $0x4] sm:$0xf]
    %v1077 = vld [vmem:[%s1074 + $0x8] sm:$0xf]
    %v1078 = vld [vmem:[%s1074 + $0xc] sm:$0xf]
    %s1079 = scalar_lea.vmem [#allocation5], 48
    %v1080 = vld [vmem:[%s1079] sm:$0xf]
    %v1081 = vld [vmem:[%s1079 + $0x4] sm:$0xf]
    %v1082 = vld [vmem:[%s1079 + $0x8] sm:$0xf]
    %v1083 = vld [vmem:[%s1079 + $0xc] sm:$0xf]
    %v1088 = vunpack.c.l.b16 %v1080
    %v1089 = vunpack.c.l.b16 %v1081
    %v1090 = vunpack.c.l.b16 %v1082
    %v1091 = vunpack.c.l.b16 %v1083
    %v1092 = vpack.c.b16 %v1089, %v1088
    %v1093 = vpack.c.b16 %v1091, %v1090
    %1096 = vmatprep.subr.bf16.mxu0 0
    %1097 = vmatpush1.bf16.msra.mxu0 0
    %1098 = vmatprep.subr.bf16.mxu0 0
    %1099 = vmatpush1.bf16.msra.mxu0 0
    %1100 = vmatprep.subr.bf16.mxu0 0
    %1101 = vmatpush1.bf16.msra.mxu0 0
    %1102 = vmatprep.subr.bf16.mxu0 0
    %1103 = vmatpush1.bf16.msra.mxu0 0
    %1104 = vmatprep.subr.bf16.mxu0 0
    %1105 = vmatpush1.bf16.msra.mxu0 0
    %1106 = vmatprep.subr.bf16.mxu0 0
    %1107 = vmatpush1.bf16.msra.mxu0 0
    %1108 = vmatprep.subr.bf16.mxu0 0
    %1109 = vmatpush1.bf16.msra.mxu0 %v1093
    %1110 = vmatprep.subr.bf16.mxu0 0
    %1111 = vmatpush1.bf16.msra.mxu0 %v1092
    %1112 = vmatprep.subr.bf16.mxu0 0
    %1113 = vmatpush2.bf16.msra.mxu0 0
    %1114 = vmatprep.subr.bf16.mxu0 0
    %1115 = vmatpush2.bf16.msra.mxu0 0
    %1116 = vmatprep.subr.bf16.mxu0 0
    %1117 = vmatpush2.bf16.msra.mxu0 0
    %1118 = vmatprep.subr.bf16.mxu0 0
    %1119 = vmatpush2.bf16.msra.mxu0 0
    %1120 = vmatprep.subr.bf16.mxu0 0
    %1121 = vmatpush2.bf16.msra.mxu0 0
    %1122 = vmatprep.subr.bf16.mxu0 0
    %1123 = vmatpush2.bf16.msra.mxu0 0
    %1124 = vmatprep.subr.bf16.mxu0 0
    %1125 = vmatpush2.bf16.msra.mxu0 0
    %1126 = vmatprep.subr.bf16.mxu0 0
    %1127 = vmatpush2.bf16.msra.mxu0 0
    %1128 = vmatprep.mubr.bf16.mxu0 0
    %1129 = vmatmul.mubr.bf16.gmra.mxu0 %v137
    %v1130 = vpop.f32.mrf.mxu0
    %v1131 = vadd.f32 0.0, %v1130
    %v1132 = vpop.f32.mrf.mxu0
    %v1133 = vpop.f32.mrf.mxu0
    %v1134 = vpop.f32.mrf.mxu0
    %1135 = vdwg.mxu0
    %v1140 = vunpack.c.l.b16 %v1075
    %v1141 = vunpack.c.l.b16 %v1076
    %v1142 = vunpack.c.l.b16 %v1077
    %v1143 = vunpack.c.l.b16 %v1078
    %v1144 = vpack.c.b16 %v1141, %v1140
    %v1145 = vpack.c.b16 %v1143, %v1142
    %1148 = vmatprep.subr.bf16.mxu0 0
    %1149 = vmatpush1.bf16.msra.mxu0 0
    %1150 = vmatprep.subr.bf16.mxu0 0
    %1151 = vmatpush1.bf16.msra.mxu0 0
    %1152 = vmatprep.subr.bf16.mxu0 0
    %1153 = vmatpush1.bf16.msra.mxu0 0
    %1154 = vmatprep.subr.bf16.mxu0 0
    %1155 = vmatpush1.bf16.msra.mxu0 0
    %1156 = vmatprep.subr.bf16.mxu0 0
    %1157 = vmatpush1.bf16.msra.mxu0 0
    %1158 = vmatprep.subr.bf16.mxu0 0
    %1159 = vmatpush1.bf16.msra.mxu0 0
    %1160 = vmatprep.subr.bf16.mxu0 0
    %1161 = vmatpush1.bf16.msra.mxu0 %v1145
    %1162 = vmatprep.subr.bf16.mxu0 0
    %1163 = vmatpush1.bf16.msra.mxu0 %v1144
    %1164 = vmatprep.subr.bf16.mxu0 0
    %1165 = vmatpush2.bf16.msra.mxu0 0
    %1166 = vmatprep.subr.bf16.mxu0 0
    %1167 = vmatpush2.bf16.msra.mxu0 0
    %1168 = vmatprep.subr.bf16.mxu0 0
    %1169 = vmatpush2.bf16.msra.mxu0 0
    %1170 = vmatprep.subr.bf16.mxu0 0
    %1171 = vmatpush2.bf16.msra.mxu0 0
    %1172 = vmatprep.subr.bf16.mxu0 0
    %1173 = vmatpush2.bf16.msra.mxu0 0
    %1174 = vmatprep.subr.bf16.mxu0 0
    %1175 = vmatpush2.bf16.msra.mxu0 0
    %1176 = vmatprep.subr.bf16.mxu0 0
    %1177 = vmatpush2.bf16.msra.mxu0 0
    %1178 = vmatprep.subr.bf16.mxu0 0
    %1179 = vmatpush2.bf16.msra.mxu0 0
    %1180 = vmatprep.mubr.bf16.mxu0 0
    %1181 = vmatmul.mubr.bf16.gmra.mxu0 %v965
    %v1182 = vpop.f32.mrf.mxu0
    %v1183 = vadd.f32 %v1131, %v1182
    %v1184 = vpop.f32.mrf.mxu0
    %v1185 = vpop.f32.mrf.mxu0
    %v1186 = vpop.f32.mrf.mxu0
    %1187 = vdwg.mxu0
    %v1188 = vlaneseq
    %v1189 = vshrl.u32 %v1188, 7
    %v1190 = vsub.s32 3, %v1189
    %v1191 = vrot.slane %v47, %v1190
    %v1192 = vadd.f32 %v1183, %v1191
    %v1193 = vxor.u32 %v1192, 2147483648
    %v1194 = vmul.f32 %v1193, 1.442695
    %v1195 = vpow.pop %v1194
    %v1196 = vadd.f32 %v1195, 1.0
    %v1197 = vrcp.pop %v1196
    %v1198 = vmul.f32 1.0, %v1197
    %v1199 = vmul.f32 %v1198, 2.0
    %v1200 = vsub.f32 %v1199, 1.0
    %v1201 = vmul.f32 %v1198, 0.0
    %1203 = vrot.lane.b32.xlu0 %v1200, 64
    %v1204 = vpop.permute.xlu0 %1203
    %v1206 = vmul.f32 %v1198, %v1204
    %1208 = vrot.lane.b32.xlu0 %v1206, 32
    %v1209 = vpop.permute.xlu0 %1208
    %v1211 = vadd.f32 %v1201, %v1209
    %v1212 = vtanh.pop %v1211
    %1214 = vrot.lane.b32.xlu0 %v1212, 64
    %v1215 = vpop.permute.xlu0 %1214
    %v1217 = vmul.f32 %v1198, %v1215
    %v1218 = vpack.c.bf16 %v1217, %v1217
    %v1220 = vrot.slane %v847, 3
    %1221 = vrot.lane.b32.xlu0 %v1220, 32
    %v1222 = vpop.permute.xlu0 %1221
    %v1224 = vsel %vm75, %v1222, 0
    %1226 = vmatprep.subr.bf16.mxu0 0
    %1227 = vmatpush1.bf16.msra.mxu0 0
    %1228 = vmatprep.subr.bf16.mxu0 0
    %1229 = vmatpush1.bf16.msra.mxu0 0
    %1230 = vmatprep.subr.bf16.mxu0 0
    %1231 = vmatpush1.bf16.msra.mxu0 0
    %1232 = vmatprep.subr.bf16.mxu0 0
    %1233 = vmatpush1.bf16.msra.mxu0 0
    %1234 = vmatprep.subr.bf16.mxu0 0
    %1235 = vmatpush1.bf16.msra.mxu0 0
    %1236 = vmatprep.subr.bf16.mxu0 0
    %1237 = vmatpush1.bf16.msra.mxu0 0
    %1238 = vmatprep.subr.bf16.mxu0 0
    %1239 = vmatpush1.bf16.msra.mxu0 %v133
    %1240 = vmatprep.subr.bf16.mxu0 0
    %1241 = vmatpush1.bf16.msra.mxu0 %v132
    %1242 = vmatprep.subr.bf16.mxu0 0
    %1243 = vmatpush2.bf16.msra.mxu0 0
    %1244 = vmatprep.subr.bf16.mxu0 0
    %1245 = vmatpush2.bf16.msra.mxu0 0
    %1246 = vmatprep.subr.bf16.mxu0 0
    %1247 = vmatpush2.bf16.msra.mxu0 0
    %1248 = vmatprep.subr.bf16.mxu0 0
    %1249 = vmatpush2.bf16.msra.mxu0 0
    %1250 = vmatprep.subr.bf16.mxu0 0
    %1251 = vmatpush2.bf16.msra.mxu0 0
    %1252 = vmatprep.subr.bf16.mxu0 0
    %1253 = vmatpush2.bf16.msra.mxu0 0
    %1254 = vmatprep.subr.bf16.mxu0 0
    %1255 = vmatpush2.bf16.msra.mxu0 0
    %1256 = vmatprep.subr.bf16.mxu0 0
    %1257 = vmatpush2.bf16.msra.mxu0 0
    %1258 = vmatprep.mubr.bf16.mxu0 0
    %1259 = vmatmul.mubr.bf16.gmra.mxu0 %v1224
    %v1260 = vpop.f32.mrf.mxu0
    %v1261 = vadd.f32 0.0, %v1260
    %v1262 = vpop.f32.mrf.mxu0
    %v1263 = vpop.f32.mrf.mxu0
    %v1264 = vpop.f32.mrf.mxu0
    %1265 = vdwg.mxu0
    %v1266 = vadd.f32 %v117, %v1261
    %v1267 = vxor.u32 %v1266, 2147483648
    %v1268 = vmul.f32 %v1267, 1.442695
    %v1269 = vpow.pop %v1268
    %v1270 = vadd.f32 %v1269, 1.0
    %v1271 = vrcp.pop %v1270
    %v1272 = vmul.f32 1.0, %v1271
    %v1273 = vmul.f32 %v1272, 2.0
    %v1274 = vsub.f32 %v1273, 1.0
    %v1276 = vrot.slane %v840, 6
    %v1278 = vmul.f32 %v1272, %v1276
    %1280 = vrot.lane.b32.xlu0 %v1274, 64
    %v1281 = vpop.permute.xlu0 %1280
    %v1283 = vmul.f32 %v1272, %v1281
    %1285 = vrot.lane.b32.xlu0 %v1283, 32
    %v1286 = vpop.permute.xlu0 %1285
    %v1288 = vadd.f32 %v1278, %v1286
    %v1289 = vtanh.pop %v1288
    %1291 = vrot.lane.b32.xlu0 %v1289, 64
    %v1292 = vpop.permute.xlu0 %1291
    %v1294 = vmul.f32 %v1272, %v1292
    %v1295 = vpack.c.bf16 %v1294, %v1294
    %1297 = vrot.lane.b32.xlu0 %v960, 32
    %v1298 = vpop.permute.xlu0 %1297
    %v1300 = vsel %vm75, %v1298, 0
    %1302 = vmatprep.subr.bf16.mxu0 0
    %1303 = vmatpush1.bf16.msra.mxu0 0
    %1304 = vmatprep.subr.bf16.mxu0 0
    %1305 = vmatpush1.bf16.msra.mxu0 0
    %1306 = vmatprep.subr.bf16.mxu0 0
    %1307 = vmatpush1.bf16.msra.mxu0 0
    %1308 = vmatprep.subr.bf16.mxu0 0
    %1309 = vmatpush1.bf16.msra.mxu0 0
    %1310 = vmatprep.subr.bf16.mxu0 0
    %1311 = vmatpush1.bf16.msra.mxu0 0
    %1312 = vmatprep.subr.bf16.mxu0 0
    %1313 = vmatpush1.bf16.msra.mxu0 0
    %1314 = vmatprep.subr.bf16.mxu0 0
    %1315 = vmatpush1.bf16.msra.mxu0 %v304
    %1316 = vmatprep.subr.bf16.mxu0 0
    %1317 = vmatpush1.bf16.msra.mxu0 %v303
    %1318 = vmatprep.subr.bf16.mxu0 0
    %1319 = vmatpush2.bf16.msra.mxu0 0
    %1320 = vmatprep.subr.bf16.mxu0 0
    %1321 = vmatpush2.bf16.msra.mxu0 0
    %1322 = vmatprep.subr.bf16.mxu0 0
    %1323 = vmatpush2.bf16.msra.mxu0 0
    %1324 = vmatprep.subr.bf16.mxu0 0
    %1325 = vmatpush2.bf16.msra.mxu0 0
    %1326 = vmatprep.subr.bf16.mxu0 0
    %1327 = vmatpush2.bf16.msra.mxu0 0
    %1328 = vmatprep.subr.bf16.mxu0 0
    %1329 = vmatpush2.bf16.msra.mxu0 0
    %1330 = vmatprep.subr.bf16.mxu0 0
    %1331 = vmatpush2.bf16.msra.mxu0 0
    %1332 = vmatprep.subr.bf16.mxu0 0
    %1333 = vmatpush2.bf16.msra.mxu0 0
    %1334 = vmatprep.mubr.bf16.mxu0 0
    %1335 = vmatmul.mubr.bf16.gmra.mxu0 %v1300
    %v1336 = vpop.f32.mrf.mxu0
    %v1337 = vadd.f32 0.0, %v1336
    %v1338 = vpop.f32.mrf.mxu0
    %v1339 = vpop.f32.mrf.mxu0
    %v1340 = vpop.f32.mrf.mxu0
    %1341 = vdwg.mxu0
    %1342 = vmatprep.subr.bf16.mxu0 0
    %1343 = vmatpush1.bf16.msra.mxu0 0
    %1344 = vmatprep.subr.bf16.mxu0 0
    %1345 = vmatpush1.bf16.msra.mxu0 0
    %1346 = vmatprep.subr.bf16.mxu0 0
    %1347 = vmatpush1.bf16.msra.mxu0 0
    %1348 = vmatprep.subr.bf16.mxu0 0
    %1349 = vmatpush1.bf16.msra.mxu0 0
    %1350 = vmatprep.subr.bf16.mxu0 0
    %1351 = vmatpush1.bf16.msra.mxu0 0
    %1352 = vmatprep.subr.bf16.mxu0 0
    %1353 = vmatpush1.bf16.msra.mxu0 0
    %1354 = vmatprep.subr.bf16.mxu0 0
    %1355 = vmatpush1.bf16.msra.mxu0 %v356
    %1356 = vmatprep.subr.bf16.mxu0 0
    %1357 = vmatpush1.bf16.msra.mxu0 %v355
    %1358 = vmatprep.subr.bf16.mxu0 0
    %1359 = vmatpush2.bf16.msra.mxu0 0
    %1360 = vmatprep.subr.bf16.mxu0 0
    %1361 = vmatpush2.bf16.msra.mxu0 0
    %1362 = vmatprep.subr.bf16.mxu0 0
    %1363 = vmatpush2.bf16.msra.mxu0 0
    %1364 = vmatprep.subr.bf16.mxu0 0
    %1365 = vmatpush2.bf16.msra.mxu0 0
    %1366 = vmatprep.subr.bf16.mxu0 0
    %1367 = vmatpush2.bf16.msra.mxu0 0
    %1368 = vmatprep.subr.bf16.mxu0 0
    %1369 = vmatpush2.bf16.msra.mxu0 0
    %1370 = vmatprep.subr.bf16.mxu0 0
    %1371 = vmatpush2.bf16.msra.mxu0 0
    %1372 = vmatprep.subr.bf16.mxu0 0
    %1373 = vmatpush2.bf16.msra.mxu0 0
    %1374 = vmatprep.mubr.bf16.mxu0 0
    %1375 = vmatmul.mubr.bf16.gmra.mxu0 %v1224
    %v1376 = vpop.f32.mrf.mxu0
    %v1377 = vadd.f32 %v1337, %v1376
    %v1378 = vpop.f32.mrf.mxu0
    %v1379 = vpop.f32.mrf.mxu0
    %v1380 = vpop.f32.mrf.mxu0
    %1381 = vdwg.mxu0
    %v1382 = vadd.f32 %v1377, %v402
    %v1383 = vxor.u32 %v1382, 2147483648
    %v1384 = vmul.f32 %v1383, 1.442695
    %v1385 = vpow.pop %v1384
    %v1386 = vadd.f32 %v1385, 1.0
    %v1387 = vrcp.pop %v1386
    %v1388 = vmul.f32 1.0, %v1387
    %v1389 = vmul.f32 %v1388, 2.0
    %v1390 = vsub.f32 %v1389, 1.0
    %v1391 = vmul.f32 %v1388, %v953
    %1393 = vrot.lane.b32.xlu0 %v1390, 64
    %v1394 = vpop.permute.xlu0 %1393
    %v1396 = vmul.f32 %v1388, %v1394
    %1398 = vrot.lane.b32.xlu0 %v1396, 32
    %v1399 = vpop.permute.xlu0 %1398
    %v1401 = vadd.f32 %v1391, %v1399
    %v1402 = vtanh.pop %v1401
    %1404 = vrot.lane.b32.xlu0 %v1402, 64
    %v1405 = vpop.permute.xlu0 %1404
    %v1407 = vmul.f32 %v1388, %v1405
    %v1408 = vpack.c.bf16 %v1407, %v1407
    %1410 = vrot.lane.b32.xlu0 %v1073, 32
    %v1411 = vpop.permute.xlu0 %1410
    %v1413 = vsel %vm75, %v1411, 0
    %1415 = vmatprep.subr.bf16.mxu0 0
    %1416 = vmatpush1.bf16.msra.mxu0 0
    %1417 = vmatprep.subr.bf16.mxu0 0
    %1418 = vmatpush1.bf16.msra.mxu0 0
    %1419 = vmatprep.subr.bf16.mxu0 0
    %1420 = vmatpush1.bf16.msra.mxu0 0
    %1421 = vmatprep.subr.bf16.mxu0 0
    %1422 = vmatpush1.bf16.msra.mxu0 0
    %1423 = vmatprep.subr.bf16.mxu0 0
    %1424 = vmatpush1.bf16.msra.mxu0 0
    %1425 = vmatprep.subr.bf16.mxu0 0
    %1426 = vmatpush1.bf16.msra.mxu0 0
    %1427 = vmatprep.subr.bf16.mxu0 0
    %1428 = vmatpush1.bf16.msra.mxu0 %v642
    %1429 = vmatprep.subr.bf16.mxu0 0
    %1430 = vmatpush1.bf16.msra.mxu0 %v641
    %1431 = vmatprep.subr.bf16.mxu0 0
    %1432 = vmatpush2.bf16.msra.mxu0 0
    %1433 = vmatprep.subr.bf16.mxu0 0
    %1434 = vmatpush2.bf16.msra.mxu0 0
    %1435 = vmatprep.subr.bf16.mxu0 0
    %1436 = vmatpush2.bf16.msra.mxu0 0
    %1437 = vmatprep.subr.bf16.mxu0 0
    %1438 = vmatpush2.bf16.msra.mxu0 0
    %1439 = vmatprep.subr.bf16.mxu0 0
    %1440 = vmatpush2.bf16.msra.mxu0 0
    %1441 = vmatprep.subr.bf16.mxu0 0
    %1442 = vmatpush2.bf16.msra.mxu0 0
    %1443 = vmatprep.subr.bf16.mxu0 0
    %1444 = vmatpush2.bf16.msra.mxu0 0
    %1445 = vmatprep.subr.bf16.mxu0 0
    %1446 = vmatpush2.bf16.msra.mxu0 0
    %1447 = vmatprep.mubr.bf16.mxu0 0
    %1448 = vmatmul.mubr.bf16.gmra.mxu0 %v1413
    %v1449 = vpop.f32.mrf.mxu0
    %v1450 = vadd.f32 0.0, %v1449
    %v1451 = vpop.f32.mrf.mxu0
    %v1452 = vpop.f32.mrf.mxu0
    %v1453 = vpop.f32.mrf.mxu0
    %1454 = vdwg.mxu0
    %1455 = vmatprep.subr.bf16.mxu0 0
    %1456 = vmatpush1.bf16.msra.mxu0 0
    %1457 = vmatprep.subr.bf16.mxu0 0
    %1458 = vmatpush1.bf16.msra.mxu0 0
    %1459 = vmatprep.subr.bf16.mxu0 0
    %1460 = vmatpush1.bf16.msra.mxu0 0
    %1461 = vmatprep.subr.bf16.mxu0 0
    %1462 = vmatpush1.bf16.msra.mxu0 0
    %1463 = vmatprep.subr.bf16.mxu0 0
    %1464 = vmatpush1.bf16.msra.mxu0 0
    %1465 = vmatprep.subr.bf16.mxu0 0
    %1466 = vmatpush1.bf16.msra.mxu0 0
    %1467 = vmatprep.subr.bf16.mxu0 0
    %1468 = vmatpush1.bf16.msra.mxu0 %v694
    %1469 = vmatprep.subr.bf16.mxu0 0
    %1470 = vmatpush1.bf16.msra.mxu0 %v693
    %1471 = vmatprep.subr.bf16.mxu0 0
    %1472 = vmatpush2.bf16.msra.mxu0 0
    %1473 = vmatprep.subr.bf16.mxu0 0
    %1474 = vmatpush2.bf16.msra.mxu0 0
    %1475 = vmatprep.subr.bf16.mxu0 0
    %1476 = vmatpush2.bf16.msra.mxu0 0
    %1477 = vmatprep.subr.bf16.mxu0 0
    %1478 = vmatpush2.bf16.msra.mxu0 0
    %1479 = vmatprep.subr.bf16.mxu0 0
    %1480 = vmatpush2.bf16.msra.mxu0 0
    %1481 = vmatprep.subr.bf16.mxu0 0
    %1482 = vmatpush2.bf16.msra.mxu0 0
    %1483 = vmatprep.subr.bf16.mxu0 0
    %1484 = vmatpush2.bf16.msra.mxu0 0
    %1485 = vmatprep.subr.bf16.mxu0 0
    %1486 = vmatpush2.bf16.msra.mxu0 0
    %1487 = vmatprep.mubr.bf16.mxu0 0
    %1488 = vmatmul.mubr.bf16.gmra.mxu0 %v1300
    %v1489 = vpop.f32.mrf.mxu0
    %v1490 = vadd.f32 %v1450, %v1489
    %v1491 = vpop.f32.mrf.mxu0
    %v1492 = vpop.f32.mrf.mxu0
    %v1493 = vpop.f32.mrf.mxu0
    %1494 = vdwg.mxu0
    %v1495 = vadd.f32 %v1490, %v740
    %v1496 = vxor.u32 %v1495, 2147483648
    %v1497 = vmul.f32 %v1496, 1.442695
    %v1498 = vpow.pop %v1497
    %v1499 = vadd.f32 %v1498, 1.0
    %v1500 = vrcp.pop %v1499
    %v1501 = vmul.f32 1.0, %v1500
    %v1502 = vmul.f32 %v1501, 2.0
    %v1503 = vsub.f32 %v1502, 1.0
    %v1504 = vmul.f32 %v1501, %v1066
    %1506 = vrot.lane.b32.xlu0 %v1503, 64
    %v1507 = vpop.permute.xlu0 %1506
    %v1509 = vmul.f32 %v1501, %v1507
    %1511 = vrot.lane.b32.xlu0 %v1509, 32
    %v1512 = vpop.permute.xlu0 %1511
    %v1514 = vadd.f32 %v1504, %v1512
    %v1515 = vtanh.pop %v1514
    %1517 = vrot.lane.b32.xlu0 %v1515, 64
    %v1518 = vpop.permute.xlu0 %1517
    %v1520 = vmul.f32 %v1501, %v1518
    %v1521 = vpack.c.bf16 %v1520, %v1520
    %1523 = vrot.lane.b32.xlu0 %v1218, 32
    %v1524 = vpop.permute.xlu0 %1523
    %v1526 = vsel %vm75, %v1524, 0
    %1528 = vmatprep.subr.bf16.mxu0 0
    %1529 = vmatpush1.bf16.msra.mxu0 0
    %1530 = vmatprep.subr.bf16.mxu0 0
    %1531 = vmatpush1.bf16.msra.mxu0 0
    %1532 = vmatprep.subr.bf16.mxu0 0
    %1533 = vmatpush1.bf16.msra.mxu0 0
    %1534 = vmatprep.subr.bf16.mxu0 0
    %1535 = vmatpush1.bf16.msra.mxu0 0
    %1536 = vmatprep.subr.bf16.mxu0 0
    %1537 = vmatpush1.bf16.msra.mxu0 0
    %1538 = vmatprep.subr.bf16.mxu0 0
    %1539 = vmatpush1.bf16.msra.mxu0 0
    %1540 = vmatprep.subr.bf16.mxu0 0
    %1541 = vmatpush1.bf16.msra.mxu0 %v1093
    %1542 = vmatprep.subr.bf16.mxu0 0
    %1543 = vmatpush1.bf16.msra.mxu0 %v1092
    %1544 = vmatprep.subr.bf16.mxu0 0
    %1545 = vmatpush2.bf16.msra.mxu0 0
    %1546 = vmatprep.subr.bf16.mxu0 0
    %1547 = vmatpush2.bf16.msra.mxu0 0
    %1548 = vmatprep.subr.bf16.mxu0 0
    %1549 = vmatpush2.bf16.msra.mxu0 0
    %1550 = vmatprep.subr.bf16.mxu0 0
    %1551 = vmatpush2.bf16.msra.mxu0 0
    %1552 = vmatprep.subr.bf16.mxu0 0
    %1553 = vmatpush2.bf16.msra.mxu0 0
    %1554 = vmatprep.subr.bf16.mxu0 0
    %1555 = vmatpush2.bf16.msra.mxu0 0
    %1556 = vmatprep.subr.bf16.mxu0 0
    %1557 = vmatpush2.bf16.msra.mxu0 0
    %1558 = vmatprep.subr.bf16.mxu0 0
    %1559 = vmatpush2.bf16.msra.mxu0 0
    %1560 = vmatprep.mubr.bf16.mxu0 0
    %1561 = vmatmul.mubr.bf16.gmra.mxu0 %v1526
    %v1562 = vpop.f32.mrf.mxu0
    %v1563 = vadd.f32 0.0, %v1562
    %v1564 = vpop.f32.mrf.mxu0
    %v1565 = vpop.f32.mrf.mxu0
    %v1566 = vpop.f32.mrf.mxu0
    %1567 = vdwg.mxu0
    %1568 = vmatprep.subr.bf16.mxu0 0
    %1569 = vmatpush1.bf16.msra.mxu0 0
    %1570 = vmatprep.subr.bf16.mxu0 0
    %1571 = vmatpush1.bf16.msra.mxu0 0
    %1572 = vmatprep.subr.bf16.mxu0 0
    %1573 = vmatpush1.bf16.msra.mxu0 0
    %1574 = vmatprep.subr.bf16.mxu0 0
    %1575 = vmatpush1.bf16.msra.mxu0 0
    %1576 = vmatprep.subr.bf16.mxu0 0
    %1577 = vmatpush1.bf16.msra.mxu0 0
    %1578 = vmatprep.subr.bf16.mxu0 0
    %1579 = vmatpush1.bf16.msra.mxu0 0
    %1580 = vmatprep.subr.bf16.mxu0 0
    %1581 = vmatpush1.bf16.msra.mxu0 %v1145
    %1582 = vmatprep.subr.bf16.mxu0 0
    %1583 = vmatpush1.bf16.msra.mxu0 %v1144
    %1584 = vmatprep.subr.bf16.mxu0 0
    %1585 = vmatpush2.bf16.msra.mxu0 0
    %1586 = vmatprep.subr.bf16.mxu0 0
    %1587 = vmatpush2.bf16.msra.mxu0 0
    %1588 = vmatprep.subr.bf16.mxu0 0
    %1589 = vmatpush2.bf16.msra.mxu0 0
    %1590 = vmatprep.subr.bf16.mxu0 0
    %1591 = vmatpush2.bf16.msra.mxu0 0
    %1592 = vmatprep.subr.bf16.mxu0 0
    %1593 = vmatpush2.bf16.msra.mxu0 0
    %1594 = vmatprep.subr.bf16.mxu0 0
    %1595 = vmatpush2.bf16.msra.mxu0 0
    %1596 = vmatprep.subr.bf16.mxu0 0
    %1597 = vmatpush2.bf16.msra.mxu0 0
    %1598 = vmatprep.subr.bf16.mxu0 0
    %1599 = vmatpush2.bf16.msra.mxu0 0
    %1600 = vmatprep.mubr.bf16.mxu0 0
    %1601 = vmatmul.mubr.bf16.gmra.mxu0 %v1413
    %v1602 = vpop.f32.mrf.mxu0
    %v1603 = vadd.f32 %v1563, %v1602
    %v1604 = vpop.f32.mrf.mxu0
    %v1605 = vpop.f32.mrf.mxu0
    %v1606 = vpop.f32.mrf.mxu0
    %1607 = vdwg.mxu0
    %v1608 = vadd.f32 %v1603, %v1191
    %v1609 = vxor.u32 %v1608, 2147483648
    %v1610 = vmul.f32 %v1609, 1.442695
    %v1611 = vpow.pop %v1610
    %v1612 = vadd.f32 %v1611, 1.0
    %v1613 = vrcp.pop %v1612
    %v1614 = vmul.f32 1.0, %v1613
    %v1615 = vmul.f32 %v1614, 2.0
    %v1616 = vsub.f32 %v1615, 1.0
    %v1617 = vmul.f32 %v1614, %v1211
    %1619 = vrot.lane.b32.xlu0 %v1616, 64
    %v1620 = vpop.permute.xlu0 %1619
    %v1622 = vmul.f32 %v1614, %v1620
    %1624 = vrot.lane.b32.xlu0 %v1622, 32
    %v1625 = vpop.permute.xlu0 %1624
    %v1627 = vadd.f32 %v1617, %v1625
    %v1628 = vtanh.pop %v1627
    %1630 = vrot.lane.b32.xlu0 %v1628, 64
    %v1631 = vpop.permute.xlu0 %1630
    %v1633 = vmul.f32 %v1614, %v1631
    %v1634 = vpack.c.bf16 %v1633, %v1633
    %1636 = vrot.lane.b32.xlu0 %v1295, 32
    %v1637 = vpop.permute.xlu0 %1636
    %v1639 = vsel %vm75, %v1637, 0
    %1641 = vmatprep.subr.bf16.mxu0 0
    %1642 = vmatpush1.bf16.msra.mxu0 0
    %1643 = vmatprep.subr.bf16.mxu0 0
    %1644 = vmatpush1.bf16.msra.mxu0 0
    %1645 = vmatprep.subr.bf16.mxu0 0
    %1646 = vmatpush1.bf16.msra.mxu0 0
    %1647 = vmatprep.subr.bf16.mxu0 0
    %1648 = vmatpush1.bf16.msra.mxu0 0
    %1649 = vmatprep.subr.bf16.mxu0 0
    %1650 = vmatpush1.bf16.msra.mxu0 0
    %1651 = vmatprep.subr.bf16.mxu0 0
    %1652 = vmatpush1.bf16.msra.mxu0 0
    %1653 = vmatprep.subr.bf16.mxu0 0
    %1654 = vmatpush1.bf16.msra.mxu0 %v133
    %1655 = vmatprep.subr.bf16.mxu0 0
    %1656 = vmatpush1.bf16.msra.mxu0 %v132
    %1657 = vmatprep.subr.bf16.mxu0 0
    %1658 = vmatpush2.bf16.msra.mxu0 0
    %1659 = vmatprep.subr.bf16.mxu0 0
    %1660 = vmatpush2.bf16.msra.mxu0 0
    %1661 = vmatprep.subr.bf16.mxu0 0
    %1662 = vmatpush2.bf16.msra.mxu0 0
    %1663 = vmatprep.subr.bf16.mxu0 0
    %1664 = vmatpush2.bf16.msra.mxu0 0
    %1665 = vmatprep.subr.bf16.mxu0 0
    %1666 = vmatpush2.bf16.msra.mxu0 0
    %1667 = vmatprep.subr.bf16.mxu0 0
    %1668 = vmatpush2.bf16.msra.mxu0 0
    %1669 = vmatprep.subr.bf16.mxu0 0
    %1670 = vmatpush2.bf16.msra.mxu0 0
    %1671 = vmatprep.subr.bf16.mxu0 0
    %1672 = vmatpush2.bf16.msra.mxu0 0
    %1673 = vmatprep.mubr.bf16.mxu0 0
    %1674 = vmatmul.mubr.bf16.gmra.mxu0 %v1639
    %v1675 = vpop.f32.mrf.mxu0
    %v1676 = vadd.f32 0.0, %v1675
    %v1677 = vpop.f32.mrf.mxu0
    %v1678 = vpop.f32.mrf.mxu0
    %v1679 = vpop.f32.mrf.mxu0
    %1680 = vdwg.mxu0
    %v1682 = vrot.slane %v1676, 6
    %v1684 = vadd.f32 %v117, %v1682
    %v1685 = vxor.u32 %v1684, 2147483648
    %v1686 = vmul.f32 %v1685, 1.442695
    %v1687 = vpow.pop %v1686
    %v1688 = vadd.f32 %v1687, 1.0
    %v1689 = vrcp.pop %v1688
    %v1690 = vmul.f32 1.0, %v1689
    %v1691 = vmul.f32 %v1690, 2.0
    %v1692 = vsub.f32 %v1691, 1.0
    %v1694 = vrot.slane %v1288, 6
    %v1696 = vmul.f32 %v1690, %v1694
    %1698 = vrot.lane.b32.xlu0 %v1692, 64
    %v1699 = vpop.permute.xlu0 %1698
    %v1701 = vmul.f32 %v1690, %v1699
    %1703 = vrot.lane.b32.xlu0 %v1701, 32
    %v1704 = vpop.permute.xlu0 %1703
    %v1706 = vadd.f32 %v1696, %v1704
    %v1707 = vtanh.pop %v1706
    %1709 = vrot.lane.b32.xlu0 %v1707, 64
    %v1710 = vpop.permute.xlu0 %1709
    %v1712 = vmul.f32 %v1690, %v1710
    %v1713 = vpack.c.bf16 %v1712, %v1712
    %1715 = vrot.lane.b32.xlu0 %v1408, 32
    %v1716 = vpop.permute.xlu0 %1715
    %v1718 = vsel %vm75, %v1716, 0
    %1720 = vmatprep.subr.bf16.mxu0 0
    %1721 = vmatpush1.bf16.msra.mxu0 0
    %1722 = vmatprep.subr.bf16.mxu0 0
    %1723 = vmatpush1.bf16.msra.mxu0 0
    %1724 = vmatprep.subr.bf16.mxu0 0
    %1725 = vmatpush1.bf16.msra.mxu0 0
    %1726 = vmatprep.subr.bf16.mxu0 0
    %1727 = vmatpush1.bf16.msra.mxu0 0
    %1728 = vmatprep.subr.bf16.mxu0 0
    %1729 = vmatpush1.bf16.msra.mxu0 0
    %1730 = vmatprep.subr.bf16.mxu0 0
    %1731 = vmatpush1.bf16.msra.mxu0 0
    %1732 = vmatprep.subr.bf16.mxu0 0
    %1733 = vmatpush1.bf16.msra.mxu0 %v304
    %1734 = vmatprep.subr.bf16.mxu0 0
    %1735 = vmatpush1.bf16.msra.mxu0 %v303
    %1736 = vmatprep.subr.bf16.mxu0 0
    %1737 = vmatpush2.bf16.msra.mxu0 0
    %1738 = vmatprep.subr.bf16.mxu0 0
    %1739 = vmatpush2.bf16.msra.mxu0 0
    %1740 = vmatprep.subr.bf16.mxu0 0
    %1741 = vmatpush2.bf16.msra.mxu0 0
    %1742 = vmatprep.subr.bf16.mxu0 0
    %1743 = vmatpush2.bf16.msra.mxu0 0
    %1744 = vmatprep.subr.bf16.mxu0 0
    %1745 = vmatpush2.bf16.msra.mxu0 0
    %1746 = vmatprep.subr.bf16.mxu0 0
    %1747 = vmatpush2.bf16.msra.mxu0 0
    %1748 = vmatprep.subr.bf16.mxu0 0
    %1749 = vmatpush2.bf16.msra.mxu0 0
    %1750 = vmatprep.subr.bf16.mxu0 0
    %1751 = vmatpush2.bf16.msra.mxu0 0
    %1752 = vmatprep.mubr.bf16.mxu0 0
    %1753 = vmatmul.mubr.bf16.gmra.mxu0 %v1718
    %v1754 = vpop.f32.mrf.mxu0
    %v1755 = vadd.f32 0.0, %v1754
    %v1756 = vpop.f32.mrf.mxu0
    %v1757 = vpop.f32.mrf.mxu0
    %v1758 = vpop.f32.mrf.mxu0
    %1759 = vdwg.mxu0
    %1760 = vmatprep.subr.bf16.mxu0 0
    %1761 = vmatpush1.bf16.msra.mxu0 0
    %1762 = vmatprep.subr.bf16.mxu0 0
    %1763 = vmatpush1.bf16.msra.mxu0 0
    %1764 = vmatprep.subr.bf16.mxu0 0
    %1765 = vmatpush1.bf16.msra.mxu0 0
    %1766 = vmatprep.subr.bf16.mxu0 0
    %1767 = vmatpush1.bf16.msra.mxu0 0
    %1768 = vmatprep.subr.bf16.mxu0 0
    %1769 = vmatpush1.bf16.msra.mxu0 0
    %1770 = vmatprep.subr.bf16.mxu0 0
    %1771 = vmatpush1.bf16.msra.mxu0 0
    %1772 = vmatprep.subr.bf16.mxu0 0
    %1773 = vmatpush1.bf16.msra.mxu0 %v356
    %1774 = vmatprep.subr.bf16.mxu0 0
    %1775 = vmatpush1.bf16.msra.mxu0 %v355
    %1776 = vmatprep.subr.bf16.mxu0 0
    %1777 = vmatpush2.bf16.msra.mxu0 0
    %1778 = vmatprep.subr.bf16.mxu0 0
    %1779 = vmatpush2.bf16.msra.mxu0 0
    %1780 = vmatprep.subr.bf16.mxu0 0
    %1781 = vmatpush2.bf16.msra.mxu0 0
    %1782 = vmatprep.subr.bf16.mxu0 0
    %1783 = vmatpush2.bf16.msra.mxu0 0
    %1784 = vmatprep.subr.bf16.mxu0 0
    %1785 = vmatpush2.bf16.msra.mxu0 0
    %1786 = vmatprep.subr.bf16.mxu0 0
    %1787 = vmatpush2.bf16.msra.mxu0 0
    %1788 = vmatprep.subr.bf16.mxu0 0
    %1789 = vmatpush2.bf16.msra.mxu0 0
    %1790 = vmatprep.subr.bf16.mxu0 0
    %1791 = vmatpush2.bf16.msra.mxu0 0
    %1792 = vmatprep.mubr.bf16.mxu0 0
    %1793 = vmatmul.mubr.bf16.gmra.mxu0 %v1639
    %v1794 = vpop.f32.mrf.mxu0
    %v1795 = vadd.f32 %v1755, %v1794
    %v1796 = vpop.f32.mrf.mxu0
    %v1797 = vpop.f32.mrf.mxu0
    %v1798 = vpop.f32.mrf.mxu0
    %1799 = vdwg.mxu0
    %v1800 = vadd.f32 %v1795, %v402
    %v1801 = vxor.u32 %v1800, 2147483648
    %v1802 = vmul.f32 %v1801, 1.442695
    %v1803 = vpow.pop %v1802
    %v1804 = vadd.f32 %v1803, 1.0
    %v1805 = vrcp.pop %v1804
    %v1806 = vmul.f32 1.0, %v1805
    %v1807 = vmul.f32 %v1806, 2.0
    %v1808 = vsub.f32 %v1807, 1.0
    %v1809 = vmul.f32 %v1806, %v1401
    %1811 = vrot.lane.b32.xlu0 %v1808, 64
    %v1812 = vpop.permute.xlu0 %1811
    %v1814 = vmul.f32 %v1806, %v1812
    %1816 = vrot.lane.b32.xlu0 %v1814, 32
    %v1817 = vpop.permute.xlu0 %1816
    %v1819 = vadd.f32 %v1809, %v1817
    %v1820 = vtanh.pop %v1819
    %1822 = vrot.lane.b32.xlu0 %v1820, 64
    %v1823 = vpop.permute.xlu0 %1822
    %v1825 = vmul.f32 %v1806, %v1823
    %v1826 = vpack.c.bf16 %v1825, %v1825
    %1828 = vrot.lane.b32.xlu0 %v1521, 32
    %v1829 = vpop.permute.xlu0 %1828
    %v1831 = vsel %vm75, %v1829, 0
    %1833 = vmatprep.subr.bf16.mxu0 0
    %1834 = vmatpush1.bf16.msra.mxu0 0
    %1835 = vmatprep.subr.bf16.mxu0 0
    %1836 = vmatpush1.bf16.msra.mxu0 0
    %1837 = vmatprep.subr.bf16.mxu0 0
    %1838 = vmatpush1.bf16.msra.mxu0 0
    %1839 = vmatprep.subr.bf16.mxu0 0
    %1840 = vmatpush1.bf16.msra.mxu0 0
    %1841 = vmatprep.subr.bf16.mxu0 0
    %1842 = vmatpush1.bf16.msra.mxu0 0
    %1843 = vmatprep.subr.bf16.mxu0 0
    %1844 = vmatpush1.bf16.msra.mxu0 0
    %1845 = vmatprep.subr.bf16.mxu0 0
    %1846 = vmatpush1.bf16.msra.mxu0 %v642
    %1847 = vmatprep.subr.bf16.mxu0 0
    %1848 = vmatpush1.bf16.msra.mxu0 %v641
    %1849 = vmatprep.subr.bf16.mxu0 0
    %1850 = vmatpush2.bf16.msra.mxu0 0
    %1851 = vmatprep.subr.bf16.mxu0 0
    %1852 = vmatpush2.bf16.msra.mxu0 0
    %1853 = vmatprep.subr.bf16.mxu0 0
    %1854 = vmatpush2.bf16.msra.mxu0 0
    %1855 = vmatprep.subr.bf16.mxu0 0
    %1856 = vmatpush2.bf16.msra.mxu0 0
    %1857 = vmatprep.subr.bf16.mxu0 0
    %1858 = vmatpush2.bf16.msra.mxu0 0
    %1859 = vmatprep.subr.bf16.mxu0 0
    %1860 = vmatpush2.bf16.msra.mxu0 0
    %1861 = vmatprep.subr.bf16.mxu0 0
    %1862 = vmatpush2.bf16.msra.mxu0 0
    %1863 = vmatprep.subr.bf16.mxu0 0
    %1864 = vmatpush2.bf16.msra.mxu0 0
    %1865 = vmatprep.mubr.bf16.mxu0 0
    %1866 = vmatmul.mubr.bf16.gmra.mxu0 %v1831
    %v1867 = vpop.f32.mrf.mxu0
    %v1868 = vadd.f32 0.0, %v1867
    %v1869 = vpop.f32.mrf.mxu0
    %v1870 = vpop.f32.mrf.mxu0
    %v1871 = vpop.f32.mrf.mxu0
    %1872 = vdwg.mxu0
    %1873 = vmatprep.subr.bf16.mxu0 0
    %1874 = vmatpush1.bf16.msra.mxu0 0
    %1875 = vmatprep.subr.bf16.mxu0 0
    %1876 = vmatpush1.bf16.msra.mxu0 0
    %1877 = vmatprep.subr.bf16.mxu0 0
    %1878 = vmatpush1.bf16.msra.mxu0 0
    %1879 = vmatprep.subr.bf16.mxu0 0
    %1880 = vmatpush1.bf16.msra.mxu0 0
    %1881 = vmatprep.subr.bf16.mxu0 0
    %1882 = vmatpush1.bf16.msra.mxu0 0
    %1883 = vmatprep.subr.bf16.mxu0 0
    %1884 = vmatpush1.bf16.msra.mxu0 0
    %1885 = vmatprep.subr.bf16.mxu0 0
    %1886 = vmatpush1.bf16.msra.mxu0 %v694
    %1887 = vmatprep.subr.bf16.mxu0 0
    %1888 = vmatpush1.bf16.msra.mxu0 %v693
    %1889 = vmatprep.subr.bf16.mxu0 0
    %1890 = vmatpush2.bf16.msra.mxu0 0
    %1891 = vmatprep.subr.bf16.mxu0 0
    %1892 = vmatpush2.bf16.msra.mxu0 0
    %1893 = vmatprep.subr.bf16.mxu0 0
    %1894 = vmatpush2.bf16.msra.mxu0 0
    %1895 = vmatprep.subr.bf16.mxu0 0
    %1896 = vmatpush2.bf16.msra.mxu0 0
    %1897 = vmatprep.subr.bf16.mxu0 0
    %1898 = vmatpush2.bf16.msra.mxu0 0
    %1899 = vmatprep.subr.bf16.mxu0 0
    %1900 = vmatpush2.bf16.msra.mxu0 0
    %1901 = vmatprep.subr.bf16.mxu0 0
    %1902 = vmatpush2.bf16.msra.mxu0 0
    %1903 = vmatprep.subr.bf16.mxu0 0
    %1904 = vmatpush2.bf16.msra.mxu0 0
    %1905 = vmatprep.mubr.bf16.mxu0 0
    %1906 = vmatmul.mubr.bf16.gmra.mxu0 %v1718
    %v1907 = vpop.f32.mrf.mxu0
    %v1908 = vadd.f32 %v1868, %v1907
    %v1909 = vpop.f32.mrf.mxu0
    %v1910 = vpop.f32.mrf.mxu0
    %v1911 = vpop.f32.mrf.mxu0
    %1912 = vdwg.mxu0
    %v1913 = vadd.f32 %v1908, %v740
    %v1914 = vxor.u32 %v1913, 2147483648
    %v1915 = vmul.f32 %v1914, 1.442695
    %v1916 = vpow.pop %v1915
    %v1917 = vadd.f32 %v1916, 1.0
    %v1918 = vrcp.pop %v1917
    %v1919 = vmul.f32 1.0, %v1918
    %v1920 = vmul.f32 %v1919, 2.0
    %v1921 = vsub.f32 %v1920, 1.0
    %v1922 = vmul.f32 %v1919, %v1514
    %1924 = vrot.lane.b32.xlu0 %v1921, 64
    %v1925 = vpop.permute.xlu0 %1924
    %v1927 = vmul.f32 %v1919, %v1925
    %1929 = vrot.lane.b32.xlu0 %v1927, 32
    %v1930 = vpop.permute.xlu0 %1929
    %v1932 = vadd.f32 %v1922, %v1930
    %v1933 = vtanh.pop %v1932
    %1935 = vrot.lane.b32.xlu0 %v1933, 64
    %v1936 = vpop.permute.xlu0 %1935
    %v1938 = vmul.f32 %v1919, %v1936
    %v1939 = vpack.c.bf16 %v1938, %v1938
    %1941 = vrot.lane.b32.xlu0 %v1634, 32
    %v1942 = vpop.permute.xlu0 %1941
    %v1944 = vsel %vm75, %v1942, 0
    %1946 = vmatprep.subr.bf16.mxu0 0
    %1947 = vmatpush1.bf16.msra.mxu0 0
    %1948 = vmatprep.subr.bf16.mxu0 0
    %1949 = vmatpush1.bf16.msra.mxu0 0
    %1950 = vmatprep.subr.bf16.mxu0 0
    %1951 = vmatpush1.bf16.msra.mxu0 0
    %1952 = vmatprep.subr.bf16.mxu0 0
    %1953 = vmatpush1.bf16.msra.mxu0 0
    %1954 = vmatprep.subr.bf16.mxu0 0
    %1955 = vmatpush1.bf16.msra.mxu0 0
    %1956 = vmatprep.subr.bf16.mxu0 0
    %1957 = vmatpush1.bf16.msra.mxu0 0
    %1958 = vmatprep.subr.bf16.mxu0 0
    %1959 = vmatpush1.bf16.msra.mxu0 %v1093
    %1960 = vmatprep.subr.bf16.mxu0 0
    %1961 = vmatpush1.bf16.msra.mxu0 %v1092
    %1962 = vmatprep.subr.bf16.mxu0 0
    %1963 = vmatpush2.bf16.msra.mxu0 0
    %1964 = vmatprep.subr.bf16.mxu0 0
    %1965 = vmatpush2.bf16.msra.mxu0 0
    %1966 = vmatprep.subr.bf16.mxu0 0
    %1967 = vmatpush2.bf16.msra.mxu0 0
    %1968 = vmatprep.subr.bf16.mxu0 0
    %1969 = vmatpush2.bf16.msra.mxu0 0
    %1970 = vmatprep.subr.bf16.mxu0 0
    %1971 = vmatpush2.bf16.msra.mxu0 0
    %1972 = vmatprep.subr.bf16.mxu0 0
    %1973 = vmatpush2.bf16.msra.mxu0 0
    %1974 = vmatprep.subr.bf16.mxu0 0
    %1975 = vmatpush2.bf16.msra.mxu0 0
    %1976 = vmatprep.subr.bf16.mxu0 0
    %1977 = vmatpush2.bf16.msra.mxu0 0
    %1978 = vmatprep.mubr.bf16.mxu0 0
    %1979 = vmatmul.mubr.bf16.gmra.mxu0 %v1944
    %v1980 = vpop.f32.mrf.mxu0
    %v1981 = vadd.f32 0.0, %v1980
    %v1982 = vpop.f32.mrf.mxu0
    %v1983 = vpop.f32.mrf.mxu0
    %v1984 = vpop.f32.mrf.mxu0
    %1985 = vdwg.mxu0
    %1986 = vmatprep.subr.bf16.mxu0 0
    %1987 = vmatpush1.bf16.msra.mxu0 0
    %1988 = vmatprep.subr.bf16.mxu0 0
    %1989 = vmatpush1.bf16.msra.mxu0 0
    %1990 = vmatprep.subr.bf16.mxu0 0
    %1991 = vmatpush1.bf16.msra.mxu0 0
    %1992 = vmatprep.subr.bf16.mxu0 0
    %1993 = vmatpush1.bf16.msra.mxu0 0
    %1994 = vmatprep.subr.bf16.mxu0 0
    %1995 = vmatpush1.bf16.msra.mxu0 0
    %1996 = vmatprep.subr.bf16.mxu0 0
    %1997 = vmatpush1.bf16.msra.mxu0 0
    %1998 = vmatprep.subr.bf16.mxu0 0
    %1999 = vmatpush1.bf16.msra.mxu0 %v1145
    %2000 = vmatprep.subr.bf16.mxu0 0
    %2001 = vmatpush1.bf16.msra.mxu0 %v1144
    %2002 = vmatprep.subr.bf16.mxu0 0
    %2003 = vmatpush2.bf16.msra.mxu0 0
    %2004 = vmatprep.subr.bf16.mxu0 0
    %2005 = vmatpush2.bf16.msra.mxu0 0
    %2006 = vmatprep.subr.bf16.mxu0 0
    %2007 = vmatpush2.bf16.msra.mxu0 0
    %2008 = vmatprep.subr.bf16.mxu0 0
    %2009 = vmatpush2.bf16.msra.mxu0 0
    %2010 = vmatprep.subr.bf16.mxu0 0
    %2011 = vmatpush2.bf16.msra.mxu0 0
    %2012 = vmatprep.subr.bf16.mxu0 0
    %2013 = vmatpush2.bf16.msra.mxu0 0
    %2014 = vmatprep.subr.bf16.mxu0 0
    %2015 = vmatpush2.bf16.msra.mxu0 0
    %2016 = vmatprep.subr.bf16.mxu0 0
    %2017 = vmatpush2.bf16.msra.mxu0 0
    %2018 = vmatprep.mubr.bf16.mxu0 0
    %2019 = vmatmul.mubr.bf16.gmra.mxu0 %v1831
    %v2020 = vpop.f32.mrf.mxu0
    %v2021 = vadd.f32 %v1981, %v2020
    %v2022 = vpop.f32.mrf.mxu0
    %v2023 = vpop.f32.mrf.mxu0
    %v2024 = vpop.f32.mrf.mxu0
    %2025 = vdwg.mxu0
    %v2026 = vadd.f32 %v2021, %v1191
    %v2027 = vxor.u32 %v2026, 2147483648
    %v2028 = vmul.f32 %v2027, 1.442695
    %v2029 = vpow.pop %v2028
    %v2030 = vadd.f32 %v2029, 1.0
    %v2031 = vrcp.pop %v2030
    %v2032 = vmul.f32 1.0, %v2031
    %v2033 = vmul.f32 %v2032, 2.0
    %v2034 = vsub.f32 %v2033, 1.0
    %v2035 = vmul.f32 %v2032, %v1627
    %2037 = vrot.lane.b32.xlu0 %v2034, 64
    %v2038 = vpop.permute.xlu0 %2037
    %v2040 = vmul.f32 %v2032, %v2038
    %2042 = vrot.lane.b32.xlu0 %v2040, 32
    %v2043 = vpop.permute.xlu0 %2042
    %v2045 = vadd.f32 %v2035, %v2043
    %v2046 = vtanh.pop %v2045
    %2048 = vrot.lane.b32.xlu0 %v2046, 64
    %v2049 = vpop.permute.xlu0 %2048
    %v2051 = vmul.f32 %v2032, %v2049
    %v2052 = vpack.c.bf16 %v2051, %v2051
    %v2054 = vrot.slane %v1713, 1
    %2055 = vrot.lane.b32.xlu0 %v2054, 32
    %v2056 = vpop.permute.xlu0 %2055
    %v2058 = vsel %vm75, %v2056, 0
    %2060 = vmatprep.subr.bf16.mxu0 0
    %2061 = vmatpush1.bf16.msra.mxu0 0
    %2062 = vmatprep.subr.bf16.mxu0 0
    %2063 = vmatpush1.bf16.msra.mxu0 0
    %2064 = vmatprep.subr.bf16.mxu0 0
    %2065 = vmatpush1.bf16.msra.mxu0 0
    %2066 = vmatprep.subr.bf16.mxu0 0
    %2067 = vmatpush1.bf16.msra.mxu0 0
    %2068 = vmatprep.subr.bf16.mxu0 0
    %2069 = vmatpush1.bf16.msra.mxu0 0
    %2070 = vmatprep.subr.bf16.mxu0 0
    %2071 = vmatpush1.bf16.msra.mxu0 0
    %2072 = vmatprep.subr.bf16.mxu0 0
    %2073 = vmatpush1.bf16.msra.mxu0 %v133
    %2074 = vmatprep.subr.bf16.mxu0 0
    %2075 = vmatpush1.bf16.msra.mxu0 %v132
    %2076 = vmatprep.subr.bf16.mxu0 0
    %2077 = vmatpush2.bf16.msra.mxu0 0
    %2078 = vmatprep.subr.bf16.mxu0 0
    %2079 = vmatpush2.bf16.msra.mxu0 0
    %2080 = vmatprep.subr.bf16.mxu0 0
    %2081 = vmatpush2.bf16.msra.mxu0 0
    %2082 = vmatprep.subr.bf16.mxu0 0
    %2083 = vmatpush2.bf16.msra.mxu0 0
    %2084 = vmatprep.subr.bf16.mxu0 0
    %2085 = vmatpush2.bf16.msra.mxu0 0
    %2086 = vmatprep.subr.bf16.mxu0 0
    %2087 = vmatpush2.bf16.msra.mxu0 0
    %2088 = vmatprep.subr.bf16.mxu0 0
    %2089 = vmatpush2.bf16.msra.mxu0 0
    %2090 = vmatprep.subr.bf16.mxu0 0
    %2091 = vmatpush2.bf16.msra.mxu0 0
    %2092 = vmatprep.mubr.bf16.mxu0 0
    %2093 = vmatmul.mubr.bf16.gmra.mxu0 %v2058
    %v2094 = vpop.f32.mrf.mxu0
    %v2095 = vadd.f32 0.0, %v2094
    %v2096 = vpop.f32.mrf.mxu0
    %v2097 = vpop.f32.mrf.mxu0
    %v2098 = vpop.f32.mrf.mxu0
    %2099 = vdwg.mxu0
    %v2101 = vrot.slane %v2095, 4
    %v2103 = vadd.f32 %v117, %v2101
    %v2104 = vxor.u32 %v2103, 2147483648
    %v2105 = vmul.f32 %v2104, 1.442695
    %v2106 = vpow.pop %v2105
    %v2107 = vadd.f32 %v2106, 1.0
    %v2108 = vrcp.pop %v2107
    %v2109 = vmul.f32 1.0, %v2108
    %v2110 = vmul.f32 %v2109, 2.0
    %v2111 = vsub.f32 %v2110, 1.0
    %v2113 = vrot.slane %v1706, 6
    %v2115 = vmul.f32 %v2109, %v2113
    %2117 = vrot.lane.b32.xlu0 %v2111, 64
    %v2118 = vpop.permute.xlu0 %2117
    %v2120 = vmul.f32 %v2109, %v2118
    %2122 = vrot.lane.b32.xlu0 %v2120, 32
    %v2123 = vpop.permute.xlu0 %2122
    %v2125 = vadd.f32 %v2115, %v2123
    %v2126 = vtanh.pop %v2125
    %2128 = vrot.lane.b32.xlu0 %v2126, 64
    %v2129 = vpop.permute.xlu0 %2128
    %v2131 = vmul.f32 %v2109, %v2129
    %v2132 = vpack.c.bf16 %v2131, %v2131
    %2134 = vrot.lane.b32.xlu0 %v1826, 32
    %v2135 = vpop.permute.xlu0 %2134
    %v2137 = vsel %vm75, %v2135, 0
    %2139 = vmatprep.subr.bf16.mxu0 0
    %2140 = vmatpush1.bf16.msra.mxu0 0
    %2141 = vmatprep.subr.bf16.mxu0 0
    %2142 = vmatpush1.bf16.msra.mxu0 0
    %2143 = vmatprep.subr.bf16.mxu0 0
    %2144 = vmatpush1.bf16.msra.mxu0 0
    %2145 = vmatprep.subr.bf16.mxu0 0
    %2146 = vmatpush1.bf16.msra.mxu0 0
    %2147 = vmatprep.subr.bf16.mxu0 0
    %2148 = vmatpush1.bf16.msra.mxu0 0
    %2149 = vmatprep.subr.bf16.mxu0 0
    %2150 = vmatpush1.bf16.msra.mxu0 0
    %2151 = vmatprep.subr.bf16.mxu0 0
    %2152 = vmatpush1.bf16.msra.mxu0 %v304
    %2153 = vmatprep.subr.bf16.mxu0 0
    %2154 = vmatpush1.bf16.msra.mxu0 %v303
    %2155 = vmatprep.subr.bf16.mxu0 0
    %2156 = vmatpush2.bf16.msra.mxu0 0
    %2157 = vmatprep.subr.bf16.mxu0 0
    %2158 = vmatpush2.bf16.msra.mxu0 0
    %2159 = vmatprep.subr.bf16.mxu0 0
    %2160 = vmatpush2.bf16.msra.mxu0 0
    %2161 = vmatprep.subr.bf16.mxu0 0
    %2162 = vmatpush2.bf16.msra.mxu0 0
    %2163 = vmatprep.subr.bf16.mxu0 0
    %2164 = vmatpush2.bf16.msra.mxu0 0
    %2165 = vmatprep.subr.bf16.mxu0 0
    %2166 = vmatpush2.bf16.msra.mxu0 0
    %2167 = vmatprep.subr.bf16.mxu0 0
    %2168 = vmatpush2.bf16.msra.mxu0 0
    %2169 = vmatprep.subr.bf16.mxu0 0
    %2170 = vmatpush2.bf16.msra.mxu0 0
    %2171 = vmatprep.mubr.bf16.mxu0 0
    %2172 = vmatmul.mubr.bf16.gmra.mxu0 %v2137
    %v2173 = vpop.f32.mrf.mxu0
    %v2174 = vadd.f32 0.0, %v2173
    %v2175 = vpop.f32.mrf.mxu0
    %v2176 = vpop.f32.mrf.mxu0
    %v2177 = vpop.f32.mrf.mxu0
    %2178 = vdwg.mxu0
    %2179 = vmatprep.subr.bf16.mxu0 0
    %2180 = vmatpush1.bf16.msra.mxu0 0
    %2181 = vmatprep.subr.bf16.mxu0 0
    %2182 = vmatpush1.bf16.msra.mxu0 0
    %2183 = vmatprep.subr.bf16.mxu0 0
    %2184 = vmatpush1.bf16.msra.mxu0 0
    %2185 = vmatprep.subr.bf16.mxu0 0
    %2186 = vmatpush1.bf16.msra.mxu0 0
    %2187 = vmatprep.subr.bf16.mxu0 0
    %2188 = vmatpush1.bf16.msra.mxu0 0
    %2189 = vmatprep.subr.bf16.mxu0 0
    %2190 = vmatpush1.bf16.msra.mxu0 0
    %2191 = vmatprep.subr.bf16.mxu0 0
    %2192 = vmatpush1.bf16.msra.mxu0 %v356
    %2193 = vmatprep.subr.bf16.mxu0 0
    %2194 = vmatpush1.bf16.msra.mxu0 %v355
    %2195 = vmatprep.subr.bf16.mxu0 0
    %2196 = vmatpush2.bf16.msra.mxu0 0
    %2197 = vmatprep.subr.bf16.mxu0 0
    %2198 = vmatpush2.bf16.msra.mxu0 0
    %2199 = vmatprep.subr.bf16.mxu0 0
    %2200 = vmatpush2.bf16.msra.mxu0 0
    %2201 = vmatprep.subr.bf16.mxu0 0
    %2202 = vmatpush2.bf16.msra.mxu0 0
    %2203 = vmatprep.subr.bf16.mxu0 0
    %2204 = vmatpush2.bf16.msra.mxu0 0
    %2205 = vmatprep.subr.bf16.mxu0 0
    %2206 = vmatpush2.bf16.msra.mxu0 0
    %2207 = vmatprep.subr.bf16.mxu0 0
    %2208 = vmatpush2.bf16.msra.mxu0 0
    %2209 = vmatprep.subr.bf16.mxu0 0
    %2210 = vmatpush2.bf16.msra.mxu0 0
    %2211 = vmatprep.mubr.bf16.mxu0 0
    %2212 = vmatmul.mubr.bf16.gmra.mxu0 %v2058
    %v2213 = vpop.f32.mrf.mxu0
    %v2214 = vadd.f32 %v2174, %v2213
    %v2215 = vpop.f32.mrf.mxu0
    %v2216 = vpop.f32.mrf.mxu0
    %v2217 = vpop.f32.mrf.mxu0
    %2218 = vdwg.mxu0
    %v2219 = vadd.f32 %v2214, %v402
    %v2220 = vxor.u32 %v2219, 2147483648
    %v2221 = vmul.f32 %v2220, 1.442695
    %v2222 = vpow.pop %v2221
    %v2223 = vadd.f32 %v2222, 1.0
    %v2224 = vrcp.pop %v2223
    %v2225 = vmul.f32 1.0, %v2224
    %v2226 = vmul.f32 %v2225, 2.0
    %v2227 = vsub.f32 %v2226, 1.0
    %v2228 = vmul.f32 %v2225, %v1819
    %2230 = vrot.lane.b32.xlu0 %v2227, 64
    %v2231 = vpop.permute.xlu0 %2230
    %v2233 = vmul.f32 %v2225, %v2231
    %2235 = vrot.lane.b32.xlu0 %v2233, 32
    %v2236 = vpop.permute.xlu0 %2235
    %v2238 = vadd.f32 %v2228, %v2236
    %v2239 = vtanh.pop %v2238
    %2241 = vrot.lane.b32.xlu0 %v2239, 64
    %v2242 = vpop.permute.xlu0 %2241
    %v2244 = vmul.f32 %v2225, %v2242
    %v2245 = vpack.c.bf16 %v2244, %v2244
    %2247 = vrot.lane.b32.xlu0 %v1939, 32
    %v2248 = vpop.permute.xlu0 %2247
    %v2250 = vsel %vm75, %v2248, 0
    %2252 = vmatprep.subr.bf16.mxu0 0
    %2253 = vmatpush1.bf16.msra.mxu0 0
    %2254 = vmatprep.subr.bf16.mxu0 0
    %2255 = vmatpush1.bf16.msra.mxu0 0
    %2256 = vmatprep.subr.bf16.mxu0 0
    %2257 = vmatpush1.bf16.msra.mxu0 0
    %2258 = vmatprep.subr.bf16.mxu0 0
    %2259 = vmatpush1.bf16.msra.mxu0 0
    %2260 = vmatprep.subr.bf16.mxu0 0
    %2261 = vmatpush1.bf16.msra.mxu0 0
    %2262 = vmatprep.subr.bf16.mxu0 0
    %2263 = vmatpush1.bf16.msra.mxu0 0
    %2264 = vmatprep.subr.bf16.mxu0 0
    %2265 = vmatpush1.bf16.msra.mxu0 %v642
    %2266 = vmatprep.subr.bf16.mxu0 0
    %2267 = vmatpush1.bf16.msra.mxu0 %v641
    %2268 = vmatprep.subr.bf16.mxu0 0
    %2269 = vmatpush2.bf16.msra.mxu0 0
    %2270 = vmatprep.subr.bf16.mxu0 0
    %2271 = vmatpush2.bf16.msra.mxu0 0
    %2272 = vmatprep.subr.bf16.mxu0 0
    %2273 = vmatpush2.bf16.msra.mxu0 0
    %2274 = vmatprep.subr.bf16.mxu0 0
    %2275 = vmatpush2.bf16.msra.mxu0 0
    %2276 = vmatprep.subr.bf16.mxu0 0
    %2277 = vmatpush2.bf16.msra.mxu0 0
    %2278 = vmatprep.subr.bf16.mxu0 0
    %2279 = vmatpush2.bf16.msra.mxu0 0
    %2280 = vmatprep.subr.bf16.mxu0 0
    %2281 = vmatpush2.bf16.msra.mxu0 0
    %2282 = vmatprep.subr.bf16.mxu0 0
    %2283 = vmatpush2.bf16.msra.mxu0 0
    %2284 = vmatprep.mubr.bf16.mxu0 0
    %2285 = vmatmul.mubr.bf16.gmra.mxu0 %v2250
    %v2286 = vpop.f32.mrf.mxu0
    %v2287 = vadd.f32 0.0, %v2286
    %v2288 = vpop.f32.mrf.mxu0
    %v2289 = vpop.f32.mrf.mxu0
    %v2290 = vpop.f32.mrf.mxu0
    %2291 = vdwg.mxu0
    %2292 = vmatprep.subr.bf16.mxu0 0
    %2293 = vmatpush1.bf16.msra.mxu0 0
    %2294 = vmatprep.subr.bf16.mxu0 0
    %2295 = vmatpush1.bf16.msra.mxu0 0
    %2296 = vmatprep.subr.bf16.mxu0 0
    %2297 = vmatpush1.bf16.msra.mxu0 0
    %2298 = vmatprep.subr.bf16.mxu0 0
    %2299 = vmatpush1.bf16.msra.mxu0 0
    %2300 = vmatprep.subr.bf16.mxu0 0
    %2301 = vmatpush1.bf16.msra.mxu0 0
    %2302 = vmatprep.subr.bf16.mxu0 0
    %2303 = vmatpush1.bf16.msra.mxu0 0
    %2304 = vmatprep.subr.bf16.mxu0 0
    %2305 = vmatpush1.bf16.msra.mxu0 %v694
    %2306 = vmatprep.subr.bf16.mxu0 0
    %2307 = vmatpush1.bf16.msra.mxu0 %v693
    %2308 = vmatprep.subr.bf16.mxu0 0
    %2309 = vmatpush2.bf16.msra.mxu0 0
    %2310 = vmatprep.subr.bf16.mxu0 0
    %2311 = vmatpush2.bf16.msra.mxu0 0
    %2312 = vmatprep.subr.bf16.mxu0 0
    %2313 = vmatpush2.bf16.msra.mxu0 0
    %2314 = vmatprep.subr.bf16.mxu0 0
    %2315 = vmatpush2.bf16.msra.mxu0 0
    %2316 = vmatprep.subr.bf16.mxu0 0
    %2317 = vmatpush2.bf16.msra.mxu0 0
    %2318 = vmatprep.subr.bf16.mxu0 0
    %2319 = vmatpush2.bf16.msra.mxu0 0
    %2320 = vmatprep.subr.bf16.mxu0 0
    %2321 = vmatpush2.bf16.msra.mxu0 0
    %2322 = vmatprep.subr.bf16.mxu0 0
    %2323 = vmatpush2.bf16.msra.mxu0 0
    %2324 = vmatprep.mubr.bf16.mxu0 0
    %2325 = vmatmul.mubr.bf16.gmra.mxu0 %v2137
    %v2326 = vpop.f32.mrf.mxu0
    %v2327 = vadd.f32 %v2287, %v2326
    %v2328 = vpop.f32.mrf.mxu0
    %v2329 = vpop.f32.mrf.mxu0
    %v2330 = vpop.f32.mrf.mxu0
    %2331 = vdwg.mxu0
    %v2332 = vadd.f32 %v2327, %v740
    %v2333 = vxor.u32 %v2332, 2147483648
    %v2334 = vmul.f32 %v2333, 1.442695
    %v2335 = vpow.pop %v2334
    %v2336 = vadd.f32 %v2335, 1.0
    %v2337 = vrcp.pop %v2336
    %v2338 = vmul.f32 1.0, %v2337
    %v2339 = vmul.f32 %v2338, 2.0
    %v2340 = vsub.f32 %v2339, 1.0
    %v2341 = vmul.f32 %v2338, %v1932
    %2343 = vrot.lane.b32.xlu0 %v2340, 64
    %v2344 = vpop.permute.xlu0 %2343
    %v2346 = vmul.f32 %v2338, %v2344
    %2348 = vrot.lane.b32.xlu0 %v2346, 32
    %v2349 = vpop.permute.xlu0 %2348
    %v2351 = vadd.f32 %v2341, %v2349
    %v2352 = vtanh.pop %v2351
    %2354 = vrot.lane.b32.xlu0 %v2352, 64
    %v2355 = vpop.permute.xlu0 %2354
    %v2357 = vmul.f32 %v2338, %v2355
    %v2358 = vpack.c.bf16 %v2357, %v2357
    %2360 = vrot.lane.b32.xlu0 %v2052, 32
    %v2361 = vpop.permute.xlu0 %2360
    %v2363 = vsel %vm75, %v2361, 0
    %2365 = vmatprep.subr.bf16.mxu0 0
    %2366 = vmatpush1.bf16.msra.mxu0 0
    %2367 = vmatprep.subr.bf16.mxu0 0
    %2368 = vmatpush1.bf16.msra.mxu0 0
    %2369 = vmatprep.subr.bf16.mxu0 0
    %2370 = vmatpush1.bf16.msra.mxu0 0
    %2371 = vmatprep.subr.bf16.mxu0 0
    %2372 = vmatpush1.bf16.msra.mxu0 0
    %2373 = vmatprep.subr.bf16.mxu0 0
    %2374 = vmatpush1.bf16.msra.mxu0 0
    %2375 = vmatprep.subr.bf16.mxu0 0
    %2376 = vmatpush1.bf16.msra.mxu0 0
    %2377 = vmatprep.subr.bf16.mxu0 0
    %2378 = vmatpush1.bf16.msra.mxu0 %v1093
    %2379 = vmatprep.subr.bf16.mxu0 0
    %2380 = vmatpush1.bf16.msra.mxu0 %v1092
    %2381 = vmatprep.subr.bf16.mxu0 0
    %2382 = vmatpush2.bf16.msra.mxu0 0
    %2383 = vmatprep.subr.bf16.mxu0 0
    %2384 = vmatpush2.bf16.msra.mxu0 0
    %2385 = vmatprep.subr.bf16.mxu0 0
    %2386 = vmatpush2.bf16.msra.mxu0 0
    %2387 = vmatprep.subr.bf16.mxu0 0
    %2388 = vmatpush2.bf16.msra.mxu0 0
    %2389 = vmatprep.subr.bf16.mxu0 0
    %2390 = vmatpush2.bf16.msra.mxu0 0
    %2391 = vmatprep.subr.bf16.mxu0 0
    %2392 = vmatpush2.bf16.msra.mxu0 0
    %2393 = vmatprep.subr.bf16.mxu0 0
    %2394 = vmatpush2.bf16.msra.mxu0 0
    %2395 = vmatprep.subr.bf16.mxu0 0
    %2396 = vmatpush2.bf16.msra.mxu0 0
    %2397 = vmatprep.mubr.bf16.mxu0 0
    %2398 = vmatmul.mubr.bf16.gmra.mxu0 %v2363
    %v2399 = vpop.f32.mrf.mxu0
    %v2400 = vadd.f32 0.0, %v2399
    %v2401 = vpop.f32.mrf.mxu0
    %v2402 = vpop.f32.mrf.mxu0
    %v2403 = vpop.f32.mrf.mxu0
    %2404 = vdwg.mxu0
    %2405 = vmatprep.subr.bf16.mxu0 0
    %2406 = vmatpush1.bf16.msra.mxu0 0
    %2407 = vmatprep.subr.bf16.mxu0 0
    %2408 = vmatpush1.bf16.msra.mxu0 0
    %2409 = vmatprep.subr.bf16.mxu0 0
    %2410 = vmatpush1.bf16.msra.mxu0 0
    %2411 = vmatprep.subr.bf16.mxu0 0
    %2412 = vmatpush1.bf16.msra.mxu0 0
    %2413 = vmatprep.subr.bf16.mxu0 0
    %2414 = vmatpush1.bf16.msra.mxu0 0
    %2415 = vmatprep.subr.bf16.mxu0 0
    %2416 = vmatpush1.bf16.msra.mxu0 0
    %2417 = vmatprep.subr.bf16.mxu0 0
    %2418 = vmatpush1.bf16.msra.mxu0 %v1145
    %2419 = vmatprep.subr.bf16.mxu0 0
    %2420 = vmatpush1.bf16.msra.mxu0 %v1144
    %2421 = vmatprep.subr.bf16.mxu0 0
    %2422 = vmatpush2.bf16.msra.mxu0 0
    %2423 = vmatprep.subr.bf16.mxu0 0
    %2424 = vmatpush2.bf16.msra.mxu0 0
    %2425 = vmatprep.subr.bf16.mxu0 0
    %2426 = vmatpush2.bf16.msra.mxu0 0
    %2427 = vmatprep.subr.bf16.mxu0 0
    %2428 = vmatpush2.bf16.msra.mxu0 0
    %2429 = vmatprep.subr.bf16.mxu0 0
    %2430 = vmatpush2.bf16.msra.mxu0 0
    %2431 = vmatprep.subr.bf16.mxu0 0
    %2432 = vmatpush2.bf16.msra.mxu0 0
    %2433 = vmatprep.subr.bf16.mxu0 0
    %2434 = vmatpush2.bf16.msra.mxu0 0
    %2435 = vmatprep.subr.bf16.mxu0 0
    %2436 = vmatpush2.bf16.msra.mxu0 0
    %2437 = vmatprep.mubr.bf16.mxu0 0
    %2438 = vmatmul.mubr.bf16.gmra.mxu0 %v2250
    %v2439 = vpop.f32.mrf.mxu0
    %v2440 = vadd.f32 %v2400, %v2439
    %v2441 = vpop.f32.mrf.mxu0
    %v2442 = vpop.f32.mrf.mxu0
    %v2443 = vpop.f32.mrf.mxu0
    %2444 = vdwg.mxu0
    %v2445 = vadd.f32 %v2440, %v1191
    %v2446 = vxor.u32 %v2445, 2147483648
    %v2447 = vmul.f32 %v2446, 1.442695
    %v2448 = vpow.pop %v2447
    %v2449 = vadd.f32 %v2448, 1.0
    %v2450 = vrcp.pop %v2449
    %v2451 = vmul.f32 1.0, %v2450
    %v2452 = vmul.f32 %v2451, 2.0
    %v2453 = vsub.f32 %v2452, 1.0
    %v2454 = vmul.f32 %v2451, %v2045
    %2456 = vrot.lane.b32.xlu0 %v2453, 64
    %v2457 = vpop.permute.xlu0 %2456
    %v2459 = vmul.f32 %v2451, %v2457
    %2461 = vrot.lane.b32.xlu0 %v2459, 32
    %v2462 = vpop.permute.xlu0 %2461
    %v2464 = vadd.f32 %v2454, %v2462
    %v2465 = vtanh.pop %v2464
    %2467 = vrot.lane.b32.xlu0 %v2465, 64
    %v2468 = vpop.permute.xlu0 %2467
    %v2470 = vmul.f32 %v2451, %v2468
    %v2471 = vpack.c.bf16 %v2470, %v2470
    %v2473 = vrot.slane %v2132, 2
    %2474 = vrot.lane.b32.xlu0 %v2473, 32
    %v2475 = vpop.permute.xlu0 %2474
    %v2477 = vsel %vm75, %v2475, 0
    %2479 = vmatprep.subr.bf16.mxu0 0
    %2480 = vmatpush1.bf16.msra.mxu0 0
    %2481 = vmatprep.subr.bf16.mxu0 0
    %2482 = vmatpush1.bf16.msra.mxu0 0
    %2483 = vmatprep.subr.bf16.mxu0 0
    %2484 = vmatpush1.bf16.msra.mxu0 0
    %2485 = vmatprep.subr.bf16.mxu0 0
    %2486 = vmatpush1.bf16.msra.mxu0 0
    %2487 = vmatprep.subr.bf16.mxu0 0
    %2488 = vmatpush1.bf16.msra.mxu0 0
    %2489 = vmatprep.subr.bf16.mxu0 0
    %2490 = vmatpush1.bf16.msra.mxu0 0
    %2491 = vmatprep.subr.bf16.mxu0 0
    %2492 = vmatpush1.bf16.msra.mxu0 %v133
    %2493 = vmatprep.subr.bf16.mxu0 0
    %2494 = vmatpush1.bf16.msra.mxu0 %v132
    %2495 = vmatprep.subr.bf16.mxu0 0
    %2496 = vmatpush2.bf16.msra.mxu0 0
    %2497 = vmatprep.subr.bf16.mxu0 0
    %2498 = vmatpush2.bf16.msra.mxu0 0
    %2499 = vmatprep.subr.bf16.mxu0 0
    %2500 = vmatpush2.bf16.msra.mxu0 0
    %2501 = vmatprep.subr.bf16.mxu0 0
    %2502 = vmatpush2.bf16.msra.mxu0 0
    %2503 = vmatprep.subr.bf16.mxu0 0
    %2504 = vmatpush2.bf16.msra.mxu0 0
    %2505 = vmatprep.subr.bf16.mxu0 0
    %2506 = vmatpush2.bf16.msra.mxu0 0
    %2507 = vmatprep.subr.bf16.mxu0 0
    %2508 = vmatpush2.bf16.msra.mxu0 0
    %2509 = vmatprep.subr.bf16.mxu0 0
    %2510 = vmatpush2.bf16.msra.mxu0 0
    %2511 = vmatprep.mubr.bf16.mxu0 0
    %2512 = vmatmul.mubr.bf16.gmra.mxu0 %v2477
    %v2513 = vpop.f32.mrf.mxu0
    %v2514 = vadd.f32 0.0, %v2513
    %v2515 = vpop.f32.mrf.mxu0
    %v2516 = vpop.f32.mrf.mxu0
    %v2517 = vpop.f32.mrf.mxu0
    %2518 = vdwg.mxu0
    %v2520 = vrot.slane %v2514, 2
    %v2522 = vadd.f32 %v117, %v2520
    %v2523 = vxor.u32 %v2522, 2147483648
    %v2524 = vmul.f32 %v2523, 1.442695
    %v2525 = vpow.pop %v2524
    %v2526 = vadd.f32 %v2525, 1.0
    %v2527 = vrcp.pop %v2526
    %v2528 = vmul.f32 1.0, %v2527
    %v2529 = vmul.f32 %v2528, 2.0
    %v2530 = vsub.f32 %v2529, 1.0
    %v2532 = vrot.slane %v2125, 6
    %v2534 = vmul.f32 %v2528, %v2532
    %2536 = vrot.lane.b32.xlu0 %v2530, 64
    %v2537 = vpop.permute.xlu0 %2536
    %v2539 = vmul.f32 %v2528, %v2537
    %2541 = vrot.lane.b32.xlu0 %v2539, 32
    %v2542 = vpop.permute.xlu0 %2541
    %v2544 = vadd.f32 %v2534, %v2542
    %v2545 = vtanh.pop %v2544
    %2547 = vrot.lane.b32.xlu0 %v2545, 64
    %v2548 = vpop.permute.xlu0 %2547
    %v2550 = vmul.f32 %v2528, %v2548
    %v2551 = vpack.c.bf16 %v2550, %v2550
    %2553 = vrot.lane.b32.xlu0 %v2245, 32
    %v2554 = vpop.permute.xlu0 %2553
    %v2556 = vsel %vm75, %v2554, 0
    %2558 = vmatprep.subr.bf16.mxu0 0
    %2559 = vmatpush1.bf16.msra.mxu0 0
    %2560 = vmatprep.subr.bf16.mxu0 0
    %2561 = vmatpush1.bf16.msra.mxu0 0
    %2562 = vmatprep.subr.bf16.mxu0 0
    %2563 = vmatpush1.bf16.msra.mxu0 0
    %2564 = vmatprep.subr.bf16.mxu0 0
    %2565 = vmatpush1.bf16.msra.mxu0 0
    %2566 = vmatprep.subr.bf16.mxu0 0
    %2567 = vmatpush1.bf16.msra.mxu0 0
    %2568 = vmatprep.subr.bf16.mxu0 0
    %2569 = vmatpush1.bf16.msra.mxu0 0
    %2570 = vmatprep.subr.bf16.mxu0 0
    %2571 = vmatpush1.bf16.msra.mxu0 %v304
    %2572 = vmatprep.subr.bf16.mxu0 0
    %2573 = vmatpush1.bf16.msra.mxu0 %v303
    %2574 = vmatprep.subr.bf16.mxu0 0
    %2575 = vmatpush2.bf16.msra.mxu0 0
    %2576 = vmatprep.subr.bf16.mxu0 0
    %2577 = vmatpush2.bf16.msra.mxu0 0
    %2578 = vmatprep.subr.bf16.mxu0 0
    %2579 = vmatpush2.bf16.msra.mxu0 0
    %2580 = vmatprep.subr.bf16.mxu0 0
    %2581 = vmatpush2.bf16.msra.mxu0 0
    %2582 = vmatprep.subr.bf16.mxu0 0
    %2583 = vmatpush2.bf16.msra.mxu0 0
    %2584 = vmatprep.subr.bf16.mxu0 0
    %2585 = vmatpush2.bf16.msra.mxu0 0
    %2586 = vmatprep.subr.bf16.mxu0 0
    %2587 = vmatpush2.bf16.msra.mxu0 0
    %2588 = vmatprep.subr.bf16.mxu0 0
    %2589 = vmatpush2.bf16.msra.mxu0 0
    %2590 = vmatprep.mubr.bf16.mxu0 0
    %2591 = vmatmul.mubr.bf16.gmra.mxu0 %v2556
    %v2592 = vpop.f32.mrf.mxu0
    %v2593 = vadd.f32 0.0, %v2592
    %v2594 = vpop.f32.mrf.mxu0
    %v2595 = vpop.f32.mrf.mxu0
    %v2596 = vpop.f32.mrf.mxu0
    %2597 = vdwg.mxu0
    %2598 = vmatprep.subr.bf16.mxu0 0
    %2599 = vmatpush1.bf16.msra.mxu0 0
    %2600 = vmatprep.subr.bf16.mxu0 0
    %2601 = vmatpush1.bf16.msra.mxu0 0
    %2602 = vmatprep.subr.bf16.mxu0 0
    %2603 = vmatpush1.bf16.msra.mxu0 0
    %2604 = vmatprep.subr.bf16.mxu0 0
    %2605 = vmatpush1.bf16.msra.mxu0 0
    %2606 = vmatprep.subr.bf16.mxu0 0
    %2607 = vmatpush1.bf16.msra.mxu0 0
    %2608 = vmatprep.subr.bf16.mxu0 0
    %2609 = vmatpush1.bf16.msra.mxu0 0
    %2610 = vmatprep.subr.bf16.mxu0 0
    %2611 = vmatpush1.bf16.msra.mxu0 %v356
    %2612 = vmatprep.subr.bf16.mxu0 0
    %2613 = vmatpush1.bf16.msra.mxu0 %v355
    %2614 = vmatprep.subr.bf16.mxu0 0
    %2615 = vmatpush2.bf16.msra.mxu0 0
    %2616 = vmatprep.subr.bf16.mxu0 0
    %2617 = vmatpush2.bf16.msra.mxu0 0
    %2618 = vmatprep.subr.bf16.mxu0 0
    %2619 = vmatpush2.bf16.msra.mxu0 0
    %2620 = vmatprep.subr.bf16.mxu0 0
    %2621 = vmatpush2.bf16.msra.mxu0 0
    %2622 = vmatprep.subr.bf16.mxu0 0
    %2623 = vmatpush2.bf16.msra.mxu0 0
    %2624 = vmatprep.subr.bf16.mxu0 0
    %2625 = vmatpush2.bf16.msra.mxu0 0
    %2626 = vmatprep.subr.bf16.mxu0 0
    %2627 = vmatpush2.bf16.msra.mxu0 0
    %2628 = vmatprep.subr.bf16.mxu0 0
    %2629 = vmatpush2.bf16.msra.mxu0 0
    %2630 = vmatprep.mubr.bf16.mxu0 0
    %2631 = vmatmul.mubr.bf16.gmra.mxu0 %v2477
    %v2632 = vpop.f32.mrf.mxu0
    %v2633 = vadd.f32 %v2593, %v2632
    %v2634 = vpop.f32.mrf.mxu0
    %v2635 = vpop.f32.mrf.mxu0
    %v2636 = vpop.f32.mrf.mxu0
    %2637 = vdwg.mxu0
    %v2638 = vadd.f32 %v2633, %v402
    %v2639 = vxor.u32 %v2638, 2147483648
    %v2640 = vmul.f32 %v2639, 1.442695
    %v2641 = vpow.pop %v2640
    %v2642 = vadd.f32 %v2641, 1.0
    %v2643 = vrcp.pop %v2642
    %v2644 = vmul.f32 1.0, %v2643
    %v2645 = vmul.f32 %v2644, 2.0
    %v2646 = vsub.f32 %v2645, 1.0
    %v2647 = vmul.f32 %v2644, %v2238
    %2649 = vrot.lane.b32.xlu0 %v2646, 64
    %v2650 = vpop.permute.xlu0 %2649
    %v2652 = vmul.f32 %v2644, %v2650
    %2654 = vrot.lane.b32.xlu0 %v2652, 32
    %v2655 = vpop.permute.xlu0 %2654
    %v2657 = vadd.f32 %v2647, %v2655
    %v2658 = vtanh.pop %v2657
    %2660 = vrot.lane.b32.xlu0 %v2658, 64
    %v2661 = vpop.permute.xlu0 %2660
    %v2663 = vmul.f32 %v2644, %v2661
    %v2664 = vpack.c.bf16 %v2663, %v2663
    %2666 = vrot.lane.b32.xlu0 %v2358, 32
    %v2667 = vpop.permute.xlu0 %2666
    %v2669 = vsel %vm75, %v2667, 0
    %2671 = vmatprep.subr.bf16.mxu0 0
    %2672 = vmatpush1.bf16.msra.mxu0 0
    %2673 = vmatprep.subr.bf16.mxu0 0
    %2674 = vmatpush1.bf16.msra.mxu0 0
    %2675 = vmatprep.subr.bf16.mxu0 0
    %2676 = vmatpush1.bf16.msra.mxu0 0
    %2677 = vmatprep.subr.bf16.mxu0 0
    %2678 = vmatpush1.bf16.msra.mxu0 0
    %2679 = vmatprep.subr.bf16.mxu0 0
    %2680 = vmatpush1.bf16.msra.mxu0 0
    %2681 = vmatprep.subr.bf16.mxu0 0
    %2682 = vmatpush1.bf16.msra.mxu0 0
    %2683 = vmatprep.subr.bf16.mxu0 0
    %2684 = vmatpush1.bf16.msra.mxu0 %v642
    %2685 = vmatprep.subr.bf16.mxu0 0
    %2686 = vmatpush1.bf16.msra.mxu0 %v641
    %2687 = vmatprep.subr.bf16.mxu0 0
    %2688 = vmatpush2.bf16.msra.mxu0 0
    %2689 = vmatprep.subr.bf16.mxu0 0
    %2690 = vmatpush2.bf16.msra.mxu0 0
    %2691 = vmatprep.subr.bf16.mxu0 0
    %2692 = vmatpush2.bf16.msra.mxu0 0
    %2693 = vmatprep.subr.bf16.mxu0 0
    %2694 = vmatpush2.bf16.msra.mxu0 0
    %2695 = vmatprep.subr.bf16.mxu0 0
    %2696 = vmatpush2.bf16.msra.mxu0 0
    %2697 = vmatprep.subr.bf16.mxu0 0
    %2698 = vmatpush2.bf16.msra.mxu0 0
    %2699 = vmatprep.subr.bf16.mxu0 0
    %2700 = vmatpush2.bf16.msra.mxu0 0
    %2701 = vmatprep.subr.bf16.mxu0 0
    %2702 = vmatpush2.bf16.msra.mxu0 0
    %2703 = vmatprep.mubr.bf16.mxu0 0
    %2704 = vmatmul.mubr.bf16.gmra.mxu0 %v2669
    %v2705 = vpop.f32.mrf.mxu0
    %v2706 = vadd.f32 0.0, %v2705
    %v2707 = vpop.f32.mrf.mxu0
    %v2708 = vpop.f32.mrf.mxu0
    %v2709 = vpop.f32.mrf.mxu0
    %2710 = vdwg.mxu0
    %2711 = vmatprep.subr.bf16.mxu0 0
    %2712 = vmatpush1.bf16.msra.mxu0 0
    %2713 = vmatprep.subr.bf16.mxu0 0
    %2714 = vmatpush1.bf16.msra.mxu0 0
    %2715 = vmatprep.subr.bf16.mxu0 0
    %2716 = vmatpush1.bf16.msra.mxu0 0
    %2717 = vmatprep.subr.bf16.mxu0 0
    %2718 = vmatpush1.bf16.msra.mxu0 0
    %2719 = vmatprep.subr.bf16.mxu0 0
    %2720 = vmatpush1.bf16.msra.mxu0 0
    %2721 = vmatprep.subr.bf16.mxu0 0
    %2722 = vmatpush1.bf16.msra.mxu0 0
    %2723 = vmatprep.subr.bf16.mxu0 0
    %2724 = vmatpush1.bf16.msra.mxu0 %v694
    %2725 = vmatprep.subr.bf16.mxu0 0
    %2726 = vmatpush1.bf16.msra.mxu0 %v693
    %2727 = vmatprep.subr.bf16.mxu0 0
    %2728 = vmatpush2.bf16.msra.mxu0 0
    %2729 = vmatprep.subr.bf16.mxu0 0
    %2730 = vmatpush2.bf16.msra.mxu0 0
    %2731 = vmatprep.subr.bf16.mxu0 0
    %2732 = vmatpush2.bf16.msra.mxu0 0
    %2733 = vmatprep.subr.bf16.mxu0 0
    %2734 = vmatpush2.bf16.msra.mxu0 0
    %2735 = vmatprep.subr.bf16.mxu0 0
    %2736 = vmatpush2.bf16.msra.mxu0 0
    %2737 = vmatprep.subr.bf16.mxu0 0
    %2738 = vmatpush2.bf16.msra.mxu0 0
    %2739 = vmatprep.subr.bf16.mxu0 0
    %2740 = vmatpush2.bf16.msra.mxu0 0
    %2741 = vmatprep.subr.bf16.mxu0 0
    %2742 = vmatpush2.bf16.msra.mxu0 0
    %2743 = vmatprep.mubr.bf16.mxu0 0
    %2744 = vmatmul.mubr.bf16.gmra.mxu0 %v2556
    %v2745 = vpop.f32.mrf.mxu0
    %v2746 = vadd.f32 %v2706, %v2745
    %v2747 = vpop.f32.mrf.mxu0
    %v2748 = vpop.f32.mrf.mxu0
    %v2749 = vpop.f32.mrf.mxu0
    %2750 = vdwg.mxu0
    %v2751 = vadd.f32 %v2746, %v740
    %v2752 = vxor.u32 %v2751, 2147483648
    %v2753 = vmul.f32 %v2752, 1.442695
    %v2754 = vpow.pop %v2753
    %v2755 = vadd.f32 %v2754, 1.0
    %v2756 = vrcp.pop %v2755
    %v2757 = vmul.f32 1.0, %v2756
    %v2758 = vmul.f32 %v2757, 2.0
    %v2759 = vsub.f32 %v2758, 1.0
    %v2760 = vmul.f32 %v2757, %v2351
    %2762 = vrot.lane.b32.xlu0 %v2759, 64
    %v2763 = vpop.permute.xlu0 %2762
    %v2765 = vmul.f32 %v2757, %v2763
    %2767 = vrot.lane.b32.xlu0 %v2765, 32
    %v2768 = vpop.permute.xlu0 %2767
    %v2770 = vadd.f32 %v2760, %v2768
    %v2771 = vtanh.pop %v2770
    %2773 = vrot.lane.b32.xlu0 %v2771, 64
    %v2774 = vpop.permute.xlu0 %2773
    %v2776 = vmul.f32 %v2757, %v2774
    %v2777 = vpack.c.bf16 %v2776, %v2776
    %2779 = vrot.lane.b32.xlu0 %v2471, 32
    %v2780 = vpop.permute.xlu0 %2779
    %v2782 = vsel %vm75, %v2780, 0
    %2784 = vmatprep.subr.bf16.mxu0 0
    %2785 = vmatpush1.bf16.msra.mxu0 0
    %2786 = vmatprep.subr.bf16.mxu0 0
    %2787 = vmatpush1.bf16.msra.mxu0 0
    %2788 = vmatprep.subr.bf16.mxu0 0
    %2789 = vmatpush1.bf16.msra.mxu0 0
    %2790 = vmatprep.subr.bf16.mxu0 0
    %2791 = vmatpush1.bf16.msra.mxu0 0
    %2792 = vmatprep.subr.bf16.mxu0 0
    %2793 = vmatpush1.bf16.msra.mxu0 0
    %2794 = vmatprep.subr.bf16.mxu0 0
    %2795 = vmatpush1.bf16.msra.mxu0 0
    %2796 = vmatprep.subr.bf16.mxu0 0
    %2797 = vmatpush1.bf16.msra.mxu0 %v1093
    %2798 = vmatprep.subr.bf16.mxu0 0
    %2799 = vmatpush1.bf16.msra.mxu0 %v1092
    %2800 = vmatprep.subr.bf16.mxu0 0
    %2801 = vmatpush2.bf16.msra.mxu0 0
    %2802 = vmatprep.subr.bf16.mxu0 0
    %2803 = vmatpush2.bf16.msra.mxu0 0
    %2804 = vmatprep.subr.bf16.mxu0 0
    %2805 = vmatpush2.bf16.msra.mxu0 0
    %2806 = vmatprep.subr.bf16.mxu0 0
    %2807 = vmatpush2.bf16.msra.mxu0 0
    %2808 = vmatprep.subr.bf16.mxu0 0
    %2809 = vmatpush2.bf16.msra.mxu0 0
    %2810 = vmatprep.subr.bf16.mxu0 0
    %2811 = vmatpush2.bf16.msra.mxu0 0
    %2812 = vmatprep.subr.bf16.mxu0 0
    %2813 = vmatpush2.bf16.msra.mxu0 0
    %2814 = vmatprep.subr.bf16.mxu0 0
    %2815 = vmatpush2.bf16.msra.mxu0 0
    %2816 = vmatprep.mubr.bf16.mxu0 0
    %2817 = vmatmul.mubr.bf16.gmra.mxu0 %v2782
    %v2818 = vpop.f32.mrf.mxu0
    %v2819 = vadd.f32 0.0, %v2818
    %v2820 = vpop.f32.mrf.mxu0
    %v2821 = vpop.f32.mrf.mxu0
    %v2822 = vpop.f32.mrf.mxu0
    %2823 = vdwg.mxu0
    %2824 = vmatprep.subr.bf16.mxu0 0
    %2825 = vmatpush1.bf16.msra.mxu0 0
    %2826 = vmatprep.subr.bf16.mxu0 0
    %2827 = vmatpush1.bf16.msra.mxu0 0
    %2828 = vmatprep.subr.bf16.mxu0 0
    %2829 = vmatpush1.bf16.msra.mxu0 0
    %2830 = vmatprep.subr.bf16.mxu0 0
    %2831 = vmatpush1.bf16.msra.mxu0 0
    %2832 = vmatprep.subr.bf16.mxu0 0
    %2833 = vmatpush1.bf16.msra.mxu0 0
    %2834 = vmatprep.subr.bf16.mxu0 0
    %2835 = vmatpush1.bf16.msra.mxu0 0
    %2836 = vmatprep.subr.bf16.mxu0 0
    %2837 = vmatpush1.bf16.msra.mxu0 %v1145
    %2838 = vmatprep.subr.bf16.mxu0 0
    %2839 = vmatpush1.bf16.msra.mxu0 %v1144
    %2840 = vmatprep.subr.bf16.mxu0 0
    %2841 = vmatpush2.bf16.msra.mxu0 0
    %2842 = vmatprep.subr.bf16.mxu0 0
    %2843 = vmatpush2.bf16.msra.mxu0 0
    %2844 = vmatprep.subr.bf16.mxu0 0
    %2845 = vmatpush2.bf16.msra.mxu0 0
    %2846 = vmatprep.subr.bf16.mxu0 0
    %2847 = vmatpush2.bf16.msra.mxu0 0
    %2848 = vmatprep.subr.bf16.mxu0 0
    %2849 = vmatpush2.bf16.msra.mxu0 0
    %2850 = vmatprep.subr.bf16.mxu0 0
    %2851 = vmatpush2.bf16.msra.mxu0 0
    %2852 = vmatprep.subr.bf16.mxu0 0
    %2853 = vmatpush2.bf16.msra.mxu0 0
    %2854 = vmatprep.subr.bf16.mxu0 0
    %2855 = vmatpush2.bf16.msra.mxu0 0
    %2856 = vmatprep.mubr.bf16.mxu0 0
    %2857 = vmatmul.mubr.bf16.gmra.mxu0 %v2669
    %v2858 = vpop.f32.mrf.mxu0
    %v2859 = vadd.f32 %v2819, %v2858
    %v2860 = vpop.f32.mrf.mxu0
    %v2861 = vpop.f32.mrf.mxu0
    %v2862 = vpop.f32.mrf.mxu0
    %2863 = vdwg.mxu0
    %v2864 = vadd.f32 %v2859, %v1191
    %v2865 = vxor.u32 %v2864, 2147483648
    %v2866 = vmul.f32 %v2865, 1.442695
    %v2867 = vpow.pop %v2866
    %v2868 = vadd.f32 %v2867, 1.0
    %v2869 = vrcp.pop %v2868
    %v2870 = vmul.f32 1.0, %v2869
    %v2871 = vmul.f32 %v2870, 2.0
    %v2872 = vsub.f32 %v2871, 1.0
    %v2873 = vmul.f32 %v2870, %v2464
    %2875 = vrot.lane.b32.xlu0 %v2872, 64
    %v2876 = vpop.permute.xlu0 %2875
    %v2878 = vmul.f32 %v2870, %v2876
    %2880 = vrot.lane.b32.xlu0 %v2878, 32
    %v2881 = vpop.permute.xlu0 %2880
    %v2883 = vadd.f32 %v2873, %v2881
    %v2884 = vtanh.pop %v2883
    %2886 = vrot.lane.b32.xlu0 %v2884, 64
    %v2887 = vpop.permute.xlu0 %2886
    %v2889 = vmul.f32 %v2870, %v2887
    %v2890 = vpack.c.bf16 %v2889, %v2889
    %2892 = vrot.lane.b32.xlu0 %v2664, 32
    %v2893 = vpop.permute.xlu0 %2892
    %v2895 = vsel %vm75, %v2893, 0
    %2897 = vmatprep.subr.bf16.mxu0 0
    %2898 = vmatpush1.bf16.msra.mxu0 0
    %2899 = vmatprep.subr.bf16.mxu0 0
    %2900 = vmatpush1.bf16.msra.mxu0 0
    %2901 = vmatprep.subr.bf16.mxu0 0
    %2902 = vmatpush1.bf16.msra.mxu0 0
    %2903 = vmatprep.subr.bf16.mxu0 0
    %2904 = vmatpush1.bf16.msra.mxu0 0
    %2905 = vmatprep.subr.bf16.mxu0 0
    %2906 = vmatpush1.bf16.msra.mxu0 0
    %2907 = vmatprep.subr.bf16.mxu0 0
    %2908 = vmatpush1.bf16.msra.mxu0 0
    %2909 = vmatprep.subr.bf16.mxu0 0
    %2910 = vmatpush1.bf16.msra.mxu0 %v304
    %2911 = vmatprep.subr.bf16.mxu0 0
    %2912 = vmatpush1.bf16.msra.mxu0 %v303
    %2913 = vmatprep.subr.bf16.mxu0 0
    %2914 = vmatpush2.bf16.msra.mxu0 0
    %2915 = vmatprep.subr.bf16.mxu0 0
    %2916 = vmatpush2.bf16.msra.mxu0 0
    %2917 = vmatprep.subr.bf16.mxu0 0
    %2918 = vmatpush2.bf16.msra.mxu0 0
    %2919 = vmatprep.subr.bf16.mxu0 0
    %2920 = vmatpush2.bf16.msra.mxu0 0
    %2921 = vmatprep.subr.bf16.mxu0 0
    %2922 = vmatpush2.bf16.msra.mxu0 0
    %2923 = vmatprep.subr.bf16.mxu0 0
    %2924 = vmatpush2.bf16.msra.mxu0 0
    %2925 = vmatprep.subr.bf16.mxu0 0
    %2926 = vmatpush2.bf16.msra.mxu0 0
    %2927 = vmatprep.subr.bf16.mxu0 0
    %2928 = vmatpush2.bf16.msra.mxu0 0
    %2929 = vmatprep.mubr.bf16.mxu0 0
    %2930 = vmatmul.mubr.bf16.gmra.mxu0 %v2895
    %v2931 = vpop.f32.mrf.mxu0
    %v2932 = vadd.f32 0.0, %v2931
    %v2933 = vpop.f32.mrf.mxu0
    %v2934 = vpop.f32.mrf.mxu0
    %v2935 = vpop.f32.mrf.mxu0
    %2936 = vdwg.mxu0
    %v2938 = vrot.slane %v2551, 3
    %2939 = vrot.lane.b32.xlu0 %v2938, 32
    %v2940 = vpop.permute.xlu0 %2939
    %v2942 = vsel %vm75, %v2940, 0
    %2944 = vmatprep.subr.bf16.mxu0 0
    %2945 = vmatpush1.bf16.msra.mxu0 0
    %2946 = vmatprep.subr.bf16.mxu0 0
    %2947 = vmatpush1.bf16.msra.mxu0 0
    %2948 = vmatprep.subr.bf16.mxu0 0
    %2949 = vmatpush1.bf16.msra.mxu0 0
    %2950 = vmatprep.subr.bf16.mxu0 0
    %2951 = vmatpush1.bf16.msra.mxu0 0
    %2952 = vmatprep.subr.bf16.mxu0 0
    %2953 = vmatpush1.bf16.msra.mxu0 0
    %2954 = vmatprep.subr.bf16.mxu0 0
    %2955 = vmatpush1.bf16.msra.mxu0 0
    %2956 = vmatprep.subr.bf16.mxu0 0
    %2957 = vmatpush1.bf16.msra.mxu0 %v356
    %2958 = vmatprep.subr.bf16.mxu0 0
    %2959 = vmatpush1.bf16.msra.mxu0 %v355
    %2960 = vmatprep.subr.bf16.mxu0 0
    %2961 = vmatpush2.bf16.msra.mxu0 0
    %2962 = vmatprep.subr.bf16.mxu0 0
    %2963 = vmatpush2.bf16.msra.mxu0 0
    %2964 = vmatprep.subr.bf16.mxu0 0
    %2965 = vmatpush2.bf16.msra.mxu0 0
    %2966 = vmatprep.subr.bf16.mxu0 0
    %2967 = vmatpush2.bf16.msra.mxu0 0
    %2968 = vmatprep.subr.bf16.mxu0 0
    %2969 = vmatpush2.bf16.msra.mxu0 0
    %2970 = vmatprep.subr.bf16.mxu0 0
    %2971 = vmatpush2.bf16.msra.mxu0 0
    %2972 = vmatprep.subr.bf16.mxu0 0
    %2973 = vmatpush2.bf16.msra.mxu0 0
    %2974 = vmatprep.subr.bf16.mxu0 0
    %2975 = vmatpush2.bf16.msra.mxu0 0
    %2976 = vmatprep.mubr.bf16.mxu0 0
    %2977 = vmatmul.mubr.bf16.gmra.mxu0 %v2942
    %v2978 = vpop.f32.mrf.mxu0
    %v2979 = vadd.f32 %v2932, %v2978
    %v2980 = vpop.f32.mrf.mxu0
    %v2981 = vpop.f32.mrf.mxu0
    %v2982 = vpop.f32.mrf.mxu0
    %2983 = vdwg.mxu0
    %v2984 = vadd.f32 %v2979, %v402
    %v2985 = vxor.u32 %v2984, 2147483648
    %v2986 = vmul.f32 %v2985, 1.442695
    %v2987 = vpow.pop %v2986
    %v2988 = vadd.f32 %v2987, 1.0
    %v2989 = vrcp.pop %v2988
    %v2990 = vmul.f32 1.0, %v2989
    %v2991 = vmul.f32 %v2990, 2.0
    %v2992 = vsub.f32 %v2991, 1.0
    %v2993 = vmul.f32 %v2990, %v2657
    %2995 = vrot.lane.b32.xlu0 %v2992, 64
    %v2996 = vpop.permute.xlu0 %2995
    %v2998 = vmul.f32 %v2990, %v2996
    %3000 = vrot.lane.b32.xlu0 %v2998, 32
    %v3001 = vpop.permute.xlu0 %3000
    %v3003 = vadd.f32 %v2993, %v3001
    %v3004 = vtanh.pop %v3003
    %3006 = vrot.lane.b32.xlu0 %v3004, 64
    %v3007 = vpop.permute.xlu0 %3006
    %v3009 = vmul.f32 %v2990, %v3007
    %v3010 = vpack.c.bf16 %v3009, %v3009
    %3012 = vrot.lane.b32.xlu0 %v2777, 32
    %v3013 = vpop.permute.xlu0 %3012
    %v3015 = vsel %vm75, %v3013, 0
    %3017 = vmatprep.subr.bf16.mxu0 0
    %3018 = vmatpush1.bf16.msra.mxu0 0
    %3019 = vmatprep.subr.bf16.mxu0 0
    %3020 = vmatpush1.bf16.msra.mxu0 0
    %3021 = vmatprep.subr.bf16.mxu0 0
    %3022 = vmatpush1.bf16.msra.mxu0 0
    %3023 = vmatprep.subr.bf16.mxu0 0
    %3024 = vmatpush1.bf16.msra.mxu0 0
    %3025 = vmatprep.subr.bf16.mxu0 0
    %3026 = vmatpush1.bf16.msra.mxu0 0
    %3027 = vmatprep.subr.bf16.mxu0 0
    %3028 = vmatpush1.bf16.msra.mxu0 0
    %3029 = vmatprep.subr.bf16.mxu0 0
    %3030 = vmatpush1.bf16.msra.mxu0 %v642
    %3031 = vmatprep.subr.bf16.mxu0 0
    %3032 = vmatpush1.bf16.msra.mxu0 %v641
    %3033 = vmatprep.subr.bf16.mxu0 0
    %3034 = vmatpush2.bf16.msra.mxu0 0
    %3035 = vmatprep.subr.bf16.mxu0 0
    %3036 = vmatpush2.bf16.msra.mxu0 0
    %3037 = vmatprep.subr.bf16.mxu0 0
    %3038 = vmatpush2.bf16.msra.mxu0 0
    %3039 = vmatprep.subr.bf16.mxu0 0
    %3040 = vmatpush2.bf16.msra.mxu0 0
    %3041 = vmatprep.subr.bf16.mxu0 0
    %3042 = vmatpush2.bf16.msra.mxu0 0
    %3043 = vmatprep.subr.bf16.mxu0 0
    %3044 = vmatpush2.bf16.msra.mxu0 0
    %3045 = vmatprep.subr.bf16.mxu0 0
    %3046 = vmatpush2.bf16.msra.mxu0 0
    %3047 = vmatprep.subr.bf16.mxu0 0
    %3048 = vmatpush2.bf16.msra.mxu0 0
    %3049 = vmatprep.mubr.bf16.mxu0 0
    %3050 = vmatmul.mubr.bf16.gmra.mxu0 %v3015
    %v3051 = vpop.f32.mrf.mxu0
    %v3052 = vadd.f32 0.0, %v3051
    %v3053 = vpop.f32.mrf.mxu0
    %v3054 = vpop.f32.mrf.mxu0
    %v3055 = vpop.f32.mrf.mxu0
    %3056 = vdwg.mxu0
    %3057 = vmatprep.subr.bf16.mxu0 0
    %3058 = vmatpush1.bf16.msra.mxu0 0
    %3059 = vmatprep.subr.bf16.mxu0 0
    %3060 = vmatpush1.bf16.msra.mxu0 0
    %3061 = vmatprep.subr.bf16.mxu0 0
    %3062 = vmatpush1.bf16.msra.mxu0 0
    %3063 = vmatprep.subr.bf16.mxu0 0
    %3064 = vmatpush1.bf16.msra.mxu0 0
    %3065 = vmatprep.subr.bf16.mxu0 0
    %3066 = vmatpush1.bf16.msra.mxu0 0
    %3067 = vmatprep.subr.bf16.mxu0 0
    %3068 = vmatpush1.bf16.msra.mxu0 0
    %3069 = vmatprep.subr.bf16.mxu0 0
    %3070 = vmatpush1.bf16.msra.mxu0 %v694
    %3071 = vmatprep.subr.bf16.mxu0 0
    %3072 = vmatpush1.bf16.msra.mxu0 %v693
    %3073 = vmatprep.subr.bf16.mxu0 0
    %3074 = vmatpush2.bf16.msra.mxu0 0
    %3075 = vmatprep.subr.bf16.mxu0 0
    %3076 = vmatpush2.bf16.msra.mxu0 0
    %3077 = vmatprep.subr.bf16.mxu0 0
    %3078 = vmatpush2.bf16.msra.mxu0 0
    %3079 = vmatprep.subr.bf16.mxu0 0
    %3080 = vmatpush2.bf16.msra.mxu0 0
    %3081 = vmatprep.subr.bf16.mxu0 0
    %3082 = vmatpush2.bf16.msra.mxu0 0
    %3083 = vmatprep.subr.bf16.mxu0 0
    %3084 = vmatpush2.bf16.msra.mxu0 0
    %3085 = vmatprep.subr.bf16.mxu0 0
    %3086 = vmatpush2.bf16.msra.mxu0 0
    %3087 = vmatprep.subr.bf16.mxu0 0
    %3088 = vmatpush2.bf16.msra.mxu0 0
    %3089 = vmatprep.mubr.bf16.mxu0 0
    %3090 = vmatmul.mubr.bf16.gmra.mxu0 %v2895
    %v3091 = vpop.f32.mrf.mxu0
    %v3092 = vadd.f32 %v3052, %v3091
    %v3093 = vpop.f32.mrf.mxu0
    %v3094 = vpop.f32.mrf.mxu0
    %v3095 = vpop.f32.mrf.mxu0
    %3096 = vdwg.mxu0
    %v3097 = vadd.f32 %v3092, %v740
    %v3098 = vxor.u32 %v3097, 2147483648
    %v3099 = vmul.f32 %v3098, 1.442695
    %v3100 = vpow.pop %v3099
    %v3101 = vadd.f32 %v3100, 1.0
    %v3102 = vrcp.pop %v3101
    %v3103 = vmul.f32 1.0, %v3102
    %v3104 = vmul.f32 %v3103, 2.0
    %v3105 = vsub.f32 %v3104, 1.0
    %v3106 = vmul.f32 %v3103, %v2770
    %3108 = vrot.lane.b32.xlu0 %v3105, 64
    %v3109 = vpop.permute.xlu0 %3108
    %v3111 = vmul.f32 %v3103, %v3109
    %3113 = vrot.lane.b32.xlu0 %v3111, 32
    %v3114 = vpop.permute.xlu0 %3113
    %v3116 = vadd.f32 %v3106, %v3114
    %v3117 = vtanh.pop %v3116
    %3119 = vrot.lane.b32.xlu0 %v3117, 64
    %v3120 = vpop.permute.xlu0 %3119
    %v3122 = vmul.f32 %v3103, %v3120
    %v3123 = vpack.c.bf16 %v3122, %v3122
    %3125 = vrot.lane.b32.xlu0 %v2890, 32
    %v3126 = vpop.permute.xlu0 %3125
    %v3128 = vsel %vm75, %v3126, 0
    %3130 = vmatprep.subr.bf16.mxu0 0
    %3131 = vmatpush1.bf16.msra.mxu0 0
    %3132 = vmatprep.subr.bf16.mxu0 0
    %3133 = vmatpush1.bf16.msra.mxu0 0
    %3134 = vmatprep.subr.bf16.mxu0 0
    %3135 = vmatpush1.bf16.msra.mxu0 0
    %3136 = vmatprep.subr.bf16.mxu0 0
    %3137 = vmatpush1.bf16.msra.mxu0 0
    %3138 = vmatprep.subr.bf16.mxu0 0
    %3139 = vmatpush1.bf16.msra.mxu0 0
    %3140 = vmatprep.subr.bf16.mxu0 0
    %3141 = vmatpush1.bf16.msra.mxu0 0
    %3142 = vmatprep.subr.bf16.mxu0 0
    %3143 = vmatpush1.bf16.msra.mxu0 %v1093
    %3144 = vmatprep.subr.bf16.mxu0 0
    %3145 = vmatpush1.bf16.msra.mxu0 %v1092
    %3146 = vmatprep.subr.bf16.mxu0 0
    %3147 = vmatpush2.bf16.msra.mxu0 0
    %3148 = vmatprep.subr.bf16.mxu0 0
    %3149 = vmatpush2.bf16.msra.mxu0 0
    %3150 = vmatprep.subr.bf16.mxu0 0
    %3151 = vmatpush2.bf16.msra.mxu0 0
    %3152 = vmatprep.subr.bf16.mxu0 0
    %3153 = vmatpush2.bf16.msra.mxu0 0
    %3154 = vmatprep.subr.bf16.mxu0 0
    %3155 = vmatpush2.bf16.msra.mxu0 0
    %3156 = vmatprep.subr.bf16.mxu0 0
    %3157 = vmatpush2.bf16.msra.mxu0 0
    %3158 = vmatprep.subr.bf16.mxu0 0
    %3159 = vmatpush2.bf16.msra.mxu0 0
    %3160 = vmatprep.subr.bf16.mxu0 0
    %3161 = vmatpush2.bf16.msra.mxu0 0
    %3162 = vmatprep.mubr.bf16.mxu0 0
    %3163 = vmatmul.mubr.bf16.gmra.mxu0 %v3128
    %v3164 = vpop.f32.mrf.mxu0
    %v3165 = vadd.f32 0.0, %v3164
    %v3166 = vpop.f32.mrf.mxu0
    %v3167 = vpop.f32.mrf.mxu0
    %v3168 = vpop.f32.mrf.mxu0
    %3169 = vdwg.mxu0
    %3170 = vmatprep.subr.bf16.mxu0 0
    %3171 = vmatpush1.bf16.msra.mxu0 0
    %3172 = vmatprep.subr.bf16.mxu0 0
    %3173 = vmatpush1.bf16.msra.mxu0 0
    %3174 = vmatprep.subr.bf16.mxu0 0
    %3175 = vmatpush1.bf16.msra.mxu0 0
    %3176 = vmatprep.subr.bf16.mxu0 0
    %3177 = vmatpush1.bf16.msra.mxu0 0
    %3178 = vmatprep.subr.bf16.mxu0 0
    %3179 = vmatpush1.bf16.msra.mxu0 0
    %3180 = vmatprep.subr.bf16.mxu0 0
    %3181 = vmatpush1.bf16.msra.mxu0 0
    %3182 = vmatprep.subr.bf16.mxu0 0
    %3183 = vmatpush1.bf16.msra.mxu0 %v1145
    %3184 = vmatprep.subr.bf16.mxu0 0
    %3185 = vmatpush1.bf16.msra.mxu0 %v1144
    %3186 = vmatprep.subr.bf16.mxu0 0
    %3187 = vmatpush2.bf16.msra.mxu0 0
    %3188 = vmatprep.subr.bf16.mxu0 0
    %3189 = vmatpush2.bf16.msra.mxu0 0
    %3190 = vmatprep.subr.bf16.mxu0 0
    %3191 = vmatpush2.bf16.msra.mxu0 0
    %3192 = vmatprep.subr.bf16.mxu0 0
    %3193 = vmatpush2.bf16.msra.mxu0 0
    %3194 = vmatprep.subr.bf16.mxu0 0
    %3195 = vmatpush2.bf16.msra.mxu0 0
    %3196 = vmatprep.subr.bf16.mxu0 0
    %3197 = vmatpush2.bf16.msra.mxu0 0
    %3198 = vmatprep.subr.bf16.mxu0 0
    %3199 = vmatpush2.bf16.msra.mxu0 0
    %3200 = vmatprep.subr.bf16.mxu0 0
    %3201 = vmatpush2.bf16.msra.mxu0 0
    %3202 = vmatprep.mubr.bf16.mxu0 0
    %3203 = vmatmul.mubr.bf16.gmra.mxu0 %v3015
    %v3204 = vpop.f32.mrf.mxu0
    %v3205 = vadd.f32 %v3165, %v3204
    %v3206 = vpop.f32.mrf.mxu0
    %v3207 = vpop.f32.mrf.mxu0
    %v3208 = vpop.f32.mrf.mxu0
    %3209 = vdwg.mxu0
    %v3210 = vadd.f32 %v3205, %v1191
    %v3211 = vxor.u32 %v3210, 2147483648
    %v3212 = vmul.f32 %v3211, 1.442695
    %v3213 = vpow.pop %v3212
    %v3214 = vadd.f32 %v3213, 1.0
    %v3215 = vrcp.pop %v3214
    %v3216 = vmul.f32 1.0, %v3215
    %v3217 = vmul.f32 %v3216, 2.0
    %v3218 = vsub.f32 %v3217, 1.0
    %v3219 = vmul.f32 %v3216, %v2883
    %3221 = vrot.lane.b32.xlu0 %v3218, 64
    %v3222 = vpop.permute.xlu0 %3221
    %v3224 = vmul.f32 %v3216, %v3222
    %3226 = vrot.lane.b32.xlu0 %v3224, 32
    %v3227 = vpop.permute.xlu0 %3226
    %v3229 = vadd.f32 %v3219, %v3227
    %v3230 = vtanh.pop %v3229
    %3232 = vrot.lane.b32.xlu0 %v3230, 64
    %v3233 = vpop.permute.xlu0 %3232
    %v3235 = vmul.f32 %v3216, %v3233
    %v3236 = vpack.c.bf16 %v3235, %v3235
    %3238 = vrot.lane.b32.xlu0 %v3123, 32
    %v3239 = vpop.permute.xlu0 %3238
    %v3241 = vsel %vm75, %v3239, 0
    %3243 = vmatprep.subr.bf16.mxu0 0
    %3244 = vmatpush1.bf16.msra.mxu0 0
    %3245 = vmatprep.subr.bf16.mxu0 0
    %3246 = vmatpush1.bf16.msra.mxu0 0
    %3247 = vmatprep.subr.bf16.mxu0 0
    %3248 = vmatpush1.bf16.msra.mxu0 0
    %3249 = vmatprep.subr.bf16.mxu0 0
    %3250 = vmatpush1.bf16.msra.mxu0 0
    %3251 = vmatprep.subr.bf16.mxu0 0
    %3252 = vmatpush1.bf16.msra.mxu0 0
    %3253 = vmatprep.subr.bf16.mxu0 0
    %3254 = vmatpush1.bf16.msra.mxu0 0
    %3255 = vmatprep.subr.bf16.mxu0 0
    %3256 = vmatpush1.bf16.msra.mxu0 %v642
    %3257 = vmatprep.subr.bf16.mxu0 0
    %3258 = vmatpush1.bf16.msra.mxu0 %v641
    %3259 = vmatprep.subr.bf16.mxu0 0
    %3260 = vmatpush2.bf16.msra.mxu0 0
    %3261 = vmatprep.subr.bf16.mxu0 0
    %3262 = vmatpush2.bf16.msra.mxu0 0
    %3263 = vmatprep.subr.bf16.mxu0 0
    %3264 = vmatpush2.bf16.msra.mxu0 0
    %3265 = vmatprep.subr.bf16.mxu0 0
    %3266 = vmatpush2.bf16.msra.mxu0 0
    %3267 = vmatprep.subr.bf16.mxu0 0
    %3268 = vmatpush2.bf16.msra.mxu0 0
    %3269 = vmatprep.subr.bf16.mxu0 0
    %3270 = vmatpush2.bf16.msra.mxu0 0
    %3271 = vmatprep.subr.bf16.mxu0 0
    %3272 = vmatpush2.bf16.msra.mxu0 0
    %3273 = vmatprep.subr.bf16.mxu0 0
    %3274 = vmatpush2.bf16.msra.mxu0 0
    %3275 = vmatprep.mubr.bf16.mxu0 0
    %3276 = vmatmul.mubr.bf16.gmra.mxu0 %v3241
    %v3277 = vpop.f32.mrf.mxu0
    %v3278 = vadd.f32 0.0, %v3277
    %v3279 = vpop.f32.mrf.mxu0
    %v3280 = vpop.f32.mrf.mxu0
    %v3281 = vpop.f32.mrf.mxu0
    %3282 = vdwg.mxu0
    %3284 = vrot.lane.b32.xlu0 %v3010, 32
    %v3285 = vpop.permute.xlu0 %3284
    %v3287 = vsel %vm75, %v3285, 0
    %3289 = vmatprep.subr.bf16.mxu0 0
    %3290 = vmatpush1.bf16.msra.mxu0 0
    %3291 = vmatprep.subr.bf16.mxu0 0
    %3292 = vmatpush1.bf16.msra.mxu0 0
    %3293 = vmatprep.subr.bf16.mxu0 0
    %3294 = vmatpush1.bf16.msra.mxu0 0
    %3295 = vmatprep.subr.bf16.mxu0 0
    %3296 = vmatpush1.bf16.msra.mxu0 0
    %3297 = vmatprep.subr.bf16.mxu0 0
    %3298 = vmatpush1.bf16.msra.mxu0 0
    %3299 = vmatprep.subr.bf16.mxu0 0
    %3300 = vmatpush1.bf16.msra.mxu0 0
    %3301 = vmatprep.subr.bf16.mxu0 0
    %3302 = vmatpush1.bf16.msra.mxu0 %v694
    %3303 = vmatprep.subr.bf16.mxu0 0
    %3304 = vmatpush1.bf16.msra.mxu0 %v693
    %3305 = vmatprep.subr.bf16.mxu0 0
    %3306 = vmatpush2.bf16.msra.mxu0 0
    %3307 = vmatprep.subr.bf16.mxu0 0
    %3308 = vmatpush2.bf16.msra.mxu0 0
    %3309 = vmatprep.subr.bf16.mxu0 0
    %3310 = vmatpush2.bf16.msra.mxu0 0
    %3311 = vmatprep.subr.bf16.mxu0 0
    %3312 = vmatpush2.bf16.msra.mxu0 0
    %3313 = vmatprep.subr.bf16.mxu0 0
    %3314 = vmatpush2.bf16.msra.mxu0 0
    %3315 = vmatprep.subr.bf16.mxu0 0
    %3316 = vmatpush2.bf16.msra.mxu0 0
    %3317 = vmatprep.subr.bf16.mxu0 0
    %3318 = vmatpush2.bf16.msra.mxu0 0
    %3319 = vmatprep.subr.bf16.mxu0 0
    %3320 = vmatpush2.bf16.msra.mxu0 0
    %3321 = vmatprep.mubr.bf16.mxu0 0
    %3322 = vmatmul.mubr.bf16.gmra.mxu0 %v3287
    %v3323 = vpop.f32.mrf.mxu0
    %v3324 = vadd.f32 %v3278, %v3323
    %v3325 = vpop.f32.mrf.mxu0
    %v3326 = vpop.f32.mrf.mxu0
    %v3327 = vpop.f32.mrf.mxu0
    %3328 = vdwg.mxu0
    %v3329 = vadd.f32 %v3324, %v740
    %v3330 = vxor.u32 %v3329, 2147483648
    %v3331 = vmul.f32 %v3330, 1.442695
    %v3332 = vpow.pop %v3331
    %v3333 = vadd.f32 %v3332, 1.0
    %v3334 = vrcp.pop %v3333
    %v3335 = vmul.f32 1.0, %v3334
    %v3336 = vmul.f32 %v3335, 2.0
    %v3337 = vsub.f32 %v3336, 1.0
    %v3338 = vmul.f32 %v3335, %v3116
    %3340 = vrot.lane.b32.xlu0 %v3337, 64
    %v3341 = vpop.permute.xlu0 %3340
    %v3343 = vmul.f32 %v3335, %v3341
    %3345 = vrot.lane.b32.xlu0 %v3343, 32
    %v3346 = vpop.permute.xlu0 %3345
    %v3348 = vadd.f32 %v3338, %v3346
    %v3349 = vtanh.pop %v3348
    %3351 = vrot.lane.b32.xlu0 %v3349, 64
    %v3352 = vpop.permute.xlu0 %3351
    %v3354 = vmul.f32 %v3335, %v3352
    %v3355 = vpack.c.bf16 %v3354, %v3354
    %3357 = vrot.lane.b32.xlu0 %v3236, 32
    %v3358 = vpop.permute.xlu0 %3357
    %v3360 = vsel %vm75, %v3358, 0
    %3362 = vmatprep.subr.bf16.mxu0 0
    %3363 = vmatpush1.bf16.msra.mxu0 0
    %3364 = vmatprep.subr.bf16.mxu0 0
    %3365 = vmatpush1.bf16.msra.mxu0 0
    %3366 = vmatprep.subr.bf16.mxu0 0
    %3367 = vmatpush1.bf16.msra.mxu0 0
    %3368 = vmatprep.subr.bf16.mxu0 0
    %3369 = vmatpush1.bf16.msra.mxu0 0
    %3370 = vmatprep.subr.bf16.mxu0 0
    %3371 = vmatpush1.bf16.msra.mxu0 0
    %3372 = vmatprep.subr.bf16.mxu0 0
    %3373 = vmatpush1.bf16.msra.mxu0 0
    %3374 = vmatprep.subr.bf16.mxu0 0
    %3375 = vmatpush1.bf16.msra.mxu0 %v1093
    %3376 = vmatprep.subr.bf16.mxu0 0
    %3377 = vmatpush1.bf16.msra.mxu0 %v1092
    %3378 = vmatprep.subr.bf16.mxu0 0
    %3379 = vmatpush2.bf16.msra.mxu0 0
    %3380 = vmatprep.subr.bf16.mxu0 0
    %3381 = vmatpush2.bf16.msra.mxu0 0
    %3382 = vmatprep.subr.bf16.mxu0 0
    %3383 = vmatpush2.bf16.msra.mxu0 0
    %3384 = vmatprep.subr.bf16.mxu0 0
    %3385 = vmatpush2.bf16.msra.mxu0 0
    %3386 = vmatprep.subr.bf16.mxu0 0
    %3387 = vmatpush2.bf16.msra.mxu0 0
    %3388 = vmatprep.subr.bf16.mxu0 0
    %3389 = vmatpush2.bf16.msra.mxu0 0
    %3390 = vmatprep.subr.bf16.mxu0 0
    %3391 = vmatpush2.bf16.msra.mxu0 0
    %3392 = vmatprep.subr.bf16.mxu0 0
    %3393 = vmatpush2.bf16.msra.mxu0 0
    %3394 = vmatprep.mubr.bf16.mxu0 0
    %3395 = vmatmul.mubr.bf16.gmra.mxu0 %v3360
    %v3396 = vpop.f32.mrf.mxu0
    %v3397 = vadd.f32 0.0, %v3396
    %v3398 = vpop.f32.mrf.mxu0
    %v3399 = vpop.f32.mrf.mxu0
    %v3400 = vpop.f32.mrf.mxu0
    %3401 = vdwg.mxu0
    %3402 = vmatprep.subr.bf16.mxu0 0
    %3403 = vmatpush1.bf16.msra.mxu0 0
    %3404 = vmatprep.subr.bf16.mxu0 0
    %3405 = vmatpush1.bf16.msra.mxu0 0
    %3406 = vmatprep.subr.bf16.mxu0 0
    %3407 = vmatpush1.bf16.msra.mxu0 0
    %3408 = vmatprep.subr.bf16.mxu0 0
    %3409 = vmatpush1.bf16.msra.mxu0 0
    %3410 = vmatprep.subr.bf16.mxu0 0
    %3411 = vmatpush1.bf16.msra.mxu0 0
    %3412 = vmatprep.subr.bf16.mxu0 0
    %3413 = vmatpush1.bf16.msra.mxu0 0
    %3414 = vmatprep.subr.bf16.mxu0 0
    %3415 = vmatpush1.bf16.msra.mxu0 %v1145
    %3416 = vmatprep.subr.bf16.mxu0 0
    %3417 = vmatpush1.bf16.msra.mxu0 %v1144
    %3418 = vmatprep.subr.bf16.mxu0 0
    %3419 = vmatpush2.bf16.msra.mxu0 0
    %3420 = vmatprep.subr.bf16.mxu0 0
    %3421 = vmatpush2.bf16.msra.mxu0 0
    %3422 = vmatprep.subr.bf16.mxu0 0
    %3423 = vmatpush2.bf16.msra.mxu0 0
    %3424 = vmatprep.subr.bf16.mxu0 0
    %3425 = vmatpush2.bf16.msra.mxu0 0
    %3426 = vmatprep.subr.bf16.mxu0 0
    %3427 = vmatpush2.bf16.msra.mxu0 0
    %3428 = vmatprep.subr.bf16.mxu0 0
    %3429 = vmatpush2.bf16.msra.mxu0 0
    %3430 = vmatprep.subr.bf16.mxu0 0
    %3431 = vmatpush2.bf16.msra.mxu0 0
    %3432 = vmatprep.subr.bf16.mxu0 0
    %3433 = vmatpush2.bf16.msra.mxu0 0
    %3434 = vmatprep.mubr.bf16.mxu0 0
    %3435 = vmatmul.mubr.bf16.gmra.mxu0 %v3241
    %v3436 = vpop.f32.mrf.mxu0
    %v3437 = vadd.f32 %v3397, %v3436
    %v3438 = vpop.f32.mrf.mxu0
    %v3439 = vpop.f32.mrf.mxu0
    %v3440 = vpop.f32.mrf.mxu0
    %3441 = vdwg.mxu0
    %v3442 = vadd.f32 %v3437, %v1191
    %v3443 = vxor.u32 %v3442, 2147483648
    %v3444 = vmul.f32 %v3443, 1.442695
    %v3445 = vpow.pop %v3444
    %v3446 = vadd.f32 %v3445, 1.0
    %v3447 = vrcp.pop %v3446
    %v3448 = vmul.f32 1.0, %v3447
    %v3449 = vmul.f32 %v3448, 2.0
    %v3450 = vsub.f32 %v3449, 1.0
    %v3451 = vmul.f32 %v3448, %v3229
    %3453 = vrot.lane.b32.xlu0 %v3450, 64
    %v3454 = vpop.permute.xlu0 %3453
    %v3456 = vmul.f32 %v3448, %v3454
    %3458 = vrot.lane.b32.xlu0 %v3456, 32
    %v3459 = vpop.permute.xlu0 %3458
    %v3461 = vadd.f32 %v3451, %v3459
    %v3462 = vtanh.pop %v3461
    %3464 = vrot.lane.b32.xlu0 %v3462, 64
    %v3465 = vpop.permute.xlu0 %3464
    %v3467 = vmul.f32 %v3448, %v3465
    %v3468 = vpack.c.bf16 %v3467, %v3467
    %3470 = vrot.lane.b32.xlu0 %v3468, 32
    %v3471 = vpop.permute.xlu0 %3470
    %v3473 = vsel %vm75, %v3471, 0
    %3475 = vmatprep.subr.bf16.mxu0 0
    %3476 = vmatpush1.bf16.msra.mxu0 0
    %3477 = vmatprep.subr.bf16.mxu0 0
    %3478 = vmatpush1.bf16.msra.mxu0 0
    %3479 = vmatprep.subr.bf16.mxu0 0
    %3480 = vmatpush1.bf16.msra.mxu0 0
    %3481 = vmatprep.subr.bf16.mxu0 0
    %3482 = vmatpush1.bf16.msra.mxu0 0
    %3483 = vmatprep.subr.bf16.mxu0 0
    %3484 = vmatpush1.bf16.msra.mxu0 0
    %3485 = vmatprep.subr.bf16.mxu0 0
    %3486 = vmatpush1.bf16.msra.mxu0 0
    %3487 = vmatprep.subr.bf16.mxu0 0
    %3488 = vmatpush1.bf16.msra.mxu0 %v1093
    %3489 = vmatprep.subr.bf16.mxu0 0
    %3490 = vmatpush1.bf16.msra.mxu0 %v1092
    %3491 = vmatprep.subr.bf16.mxu0 0
    %3492 = vmatpush2.bf16.msra.mxu0 0
    %3493 = vmatprep.subr.bf16.mxu0 0
    %3494 = vmatpush2.bf16.msra.mxu0 0
    %3495 = vmatprep.subr.bf16.mxu0 0
    %3496 = vmatpush2.bf16.msra.mxu0 0
    %3497 = vmatprep.subr.bf16.mxu0 0
    %3498 = vmatpush2.bf16.msra.mxu0 0
    %3499 = vmatprep.subr.bf16.mxu0 0
    %3500 = vmatpush2.bf16.msra.mxu0 0
    %3501 = vmatprep.subr.bf16.mxu0 0
    %3502 = vmatpush2.bf16.msra.mxu0 0
    %3503 = vmatprep.subr.bf16.mxu0 0
    %3504 = vmatpush2.bf16.msra.mxu0 0
    %3505 = vmatprep.subr.bf16.mxu0 0
    %3506 = vmatpush2.bf16.msra.mxu0 0
    %3507 = vmatprep.mubr.bf16.mxu0 0
    %3508 = vmatmul.mubr.bf16.gmra.mxu0 %v3473
    %v3509 = vpop.f32.mrf.mxu0
    %v3510 = vadd.f32 0.0, %v3509
    %v3511 = vpop.f32.mrf.mxu0
    %v3512 = vpop.f32.mrf.mxu0
    %v3513 = vpop.f32.mrf.mxu0
    %3514 = vdwg.mxu0
    %3516 = vrot.lane.b32.xlu0 %v3355, 32
    %v3517 = vpop.permute.xlu0 %3516
    %v3519 = vsel %vm75, %v3517, 0
    %3521 = vmatprep.subr.bf16.mxu0 0
    %3522 = vmatpush1.bf16.msra.mxu0 0
    %3523 = vmatprep.subr.bf16.mxu0 0
    %3524 = vmatpush1.bf16.msra.mxu0 0
    %3525 = vmatprep.subr.bf16.mxu0 0
    %3526 = vmatpush1.bf16.msra.mxu0 0
    %3527 = vmatprep.subr.bf16.mxu0 0
    %3528 = vmatpush1.bf16.msra.mxu0 0
    %3529 = vmatprep.subr.bf16.mxu0 0
    %3530 = vmatpush1.bf16.msra.mxu0 0
    %3531 = vmatprep.subr.bf16.mxu0 0
    %3532 = vmatpush1.bf16.msra.mxu0 0
    %3533 = vmatprep.subr.bf16.mxu0 0
    %3534 = vmatpush1.bf16.msra.mxu0 %v1145
    %3535 = vmatprep.subr.bf16.mxu0 0
    %3536 = vmatpush1.bf16.msra.mxu0 %v1144
    %3537 = vmatprep.subr.bf16.mxu0 0
    %3538 = vmatpush2.bf16.msra.mxu0 0
    %3539 = vmatprep.subr.bf16.mxu0 0
    %3540 = vmatpush2.bf16.msra.mxu0 0
    %3541 = vmatprep.subr.bf16.mxu0 0
    %3542 = vmatpush2.bf16.msra.mxu0 0
    %3543 = vmatprep.subr.bf16.mxu0 0
    %3544 = vmatpush2.bf16.msra.mxu0 0
    %3545 = vmatprep.subr.bf16.mxu0 0
    %3546 = vmatpush2.bf16.msra.mxu0 0
    %3547 = vmatprep.subr.bf16.mxu0 0
    %3548 = vmatpush2.bf16.msra.mxu0 0
    %3549 = vmatprep.subr.bf16.mxu0 0
    %3550 = vmatpush2.bf16.msra.mxu0 0
    %3551 = vmatprep.subr.bf16.mxu0 0
    %3552 = vmatpush2.bf16.msra.mxu0 0
    %3553 = vmatprep.mubr.bf16.mxu0 0
    %3554 = vmatmul.mubr.bf16.gmra.mxu0 %v3519
    %v3555 = vpop.f32.mrf.mxu0
    %v3556 = vadd.f32 %v3510, %v3555
    %v3557 = vpop.f32.mrf.mxu0
    %v3558 = vpop.f32.mrf.mxu0
    %v3559 = vpop.f32.mrf.mxu0
    %3560 = vdwg.mxu0
    %v3561 = vadd.f32 %v3556, %v1191
    %v3562 = vxor.u32 %v3561, 2147483648
    %v3563 = vmul.f32 %v3562, 1.442695
    %v3564 = vpow.pop %v3563
    %v3565 = vadd.f32 %v3564, 1.0
    %v3566 = vrcp.pop %v3565
    %v3567 = vmul.f32 1.0, %v3566
    %v3568 = vmul.f32 %v3567, 2.0
    %v3569 = vsub.f32 %v3568, 1.0
    %v3570 = vmul.f32 %v3567, %v3461
    %3572 = vrot.lane.b32.xlu0 %v3569, 64
    %v3573 = vpop.permute.xlu0 %3572
    %v3575 = vmul.f32 %v3567, %v3573
    %3577 = vrot.lane.b32.xlu0 %v3575, 32
    %v3578 = vpop.permute.xlu0 %3577
    %v3580 = vadd.f32 %v3570, %v3578
    %v3581 = vtanh.pop %v3580
    %3583 = vrot.lane.b32.xlu0 %v3581, 64
    %v3584 = vpop.permute.xlu0 %3583
    %v3586 = vmul.f32 %v3567, %v3584
    %3588 = vrot.lane.b32.xlu0 %v3586, 32
    %v3589 = vpop.permute.xlu0 %3588
    %vm3591 = vcmask 254976
    %3592 = vst.msk [vmem:[#allocation7] sm:$0x3] %vm3591, %v3589
    // Predicated region
    $region26: #{encoder_pallas.1} parent=1 // pred_check
      _
    $region27: #{encoder_pallas.1} parent=1 // pred_check_branch
      %3594 = sbr.rel (0) target = $region29
    $region28: #{encoder_pallas.1} parent=1 // pred_region
      %s3596 = ssub.s32 32, 32
      %3597 = vsyncadd [#allocation4], %s3596
      %s3599 = sshll.u32 [#allocation7], 4
      %s3600 = int_to_ptr.vmem [resolvable:$true] %s3599
      %3602 = dma.vmem_to_hbm [thread:$0]  %s3600, 32, %s4, [#allocation4]
    $region29: #{encoder_pallas.1} parent=1 // pred_fallthru
      _
    // Predicated region
    $region30: #{encoder_pallas.1} parent=1 // pred_check
      _
    $region31: #{encoder_pallas.1} parent=1 // pred_check_branch
      %3604 = sbr.rel (0) target = $region33
    $region32: #{encoder_pallas.1} parent=1 // pred_region
      %3605 = dma.done [#allocation4], 32
    $region33: #{encoder_pallas.1} parent=1 // pred_fallthru
      _
    %3606 = vsyncpa [#allocation3], 1
    %3607 = vsyncpa [#allocation6], 1
    %3608 = vsyncpa [#allocation4], 1

</llo_original>
